<compile_context>
chip_gen: v7x
topology: tpu7x:2x2x1
jax: 0.10.0
libtpu: 0.0.40
codegen_flags: <defaults>
</compile_context>

<pallas_src>
import math
import functools

import numpy as np
import jax
import jax.numpy as jnp
from jax.experimental import pallas as pl
from jax.experimental.pallas import tpu as pltpu


def _rope4d_kernel(pos_ref, sel_ref, out_ref):
    # pos_ref : [4, tile_m]      transposed (x, y, z, t) positions (lane-dense)
    # sel_ref : [4, 2*F]         column-duplicated frequency/selection matrix
    # out_ref : [tile_m, 2*F]    interleaved cos/sin (even lane=cos, odd=sin)
    #
    # arg[m, k] = pos[axis(k//2), m] * div_term[...]  (exact via HIGHEST)
    arg = jax.lax.dot_general(
        pos_ref[...],
        sel_ref[...],
        dimension_numbers=(((0,), (0,)), ((), ())),
        precision=jax.lax.Precision.HIGHEST,
        preferred_element_type=jnp.float32,
    )
    lane = jax.lax.broadcasted_iota(jnp.int32, arg.shape, dimension=1)
    # TODO(synk): on v7x, if profiling shows the EUP saturating, compute
    # cos/sin at width F and interleave via an XLU shuffle instead of
    # evaluating both transcendentals at width 2F.
    out_ref[...] = jnp.where(
        (lane % 2) == 0, jnp.cos(arg), jnp.sin(arg)
    ).astype(out_ref.dtype)


def _build_selection_matrix(feature_dim: int) -> jnp.ndarray:
    """[4, 2*feature_dim]; row a holds the frequency vector (each frequency
    repeated 4x: 2x for torch's stack([f,f],-1).view duplication, 2x for the
    fused cos/sin lane interleave) in the a-th quarter, zeros elsewhere."""
    d = feature_dim // 4                       # per-axis feature dim
    div_term = np.exp(
        np.arange(0, d, 2, dtype=np.float32) * (-math.log(10000.0) / d)
    )                                          # [d // 2]
    div_rep = np.repeat(div_term, 4)           # [2*d]
    sel = np.zeros((4, 2 * feature_dim), dtype=np.float32)
    for a in range(4):
        sel[a, a * 2 * d:(a + 1) * 2 * d] = div_rep
    return jnp.asarray(sel)


def _round_up(x: int, m: int) -> int:
    return (x + m - 1) // m * m


@functools.partial(jax.jit, static_argnames=("feature_dim", "out_dtype"))
def rotary_position_encoding_4d(xyzt: jnp.ndarray, feature_dim: int,
                                out_dtype=jnp.float32) -> jnp.ndarray:
    """xyzt: [B, N, 4] -> position_code: [B, N, feature_dim, 2]."""
    B, N, C = xyzt.shape
    assert C == 4
    assert feature_dim % 8 == 0, "feature_dim // 4 must be even"

    M = B * N
    M128 = _round_up(max(M, 1), 128)           # lane-dim blocks need %128
    TARGET_TILE_M = 1024
    if M128 > TARGET_TILE_M:
        tile_m = TARGET_TILE_M
    elif M128 >= 256:
        tile_m = _round_up(M128 // 2, 128)     # keep >= 2 grid steps (v7x 2-TC)
    else:
        tile_m = M128
    M_pad = _round_up(M, tile_m)

    sel = _build_selection_matrix(feature_dim)          # [4, 2F]
    pos_t = xyzt.reshape(M, 4).astype(jnp.float32).T    # [4, M] lane-dense
    if M_pad != M:
        pos_t = jnp.pad(pos_t, ((0, 0), (0, M_pad - M)))

    two_f = 2 * feature_dim
    grid = (M_pad // tile_m,)

    out = pl.pallas_call(
        _rope4d_kernel,
        out_shape=jax.ShapeDtypeStruct((M_pad, two_f), out_dtype),
        grid_spec=pltpu.PrefetchScalarGridSpec(
            num_scalar_prefetch=0,
            grid=grid,
            in_specs=[
                pl.BlockSpec((4, tile_m), lambda i: (0, i)),
                pl.BlockSpec((4, two_f), lambda i: (0, 0)),   # constant -> one DMA
            ],
            out_specs=pl.BlockSpec((tile_m, two_f), lambda i: (i, 0)),
        ),
        compiler_params=pltpu.CompilerParams(
            dimension_semantics=("parallel",),
        ),
    )(pos_t, sel)

    # [M, 2F] row-major is bit-identical to [M, F, 2] with interleaved
    # cos/sin, so the original torch.stack is just this reshape.
    return out[:M].reshape(B, N, feature_dim, 2)


def _reference(xyzt: jnp.ndarray, feature_dim: int) -> jnp.ndarray:
    """Pure-JAX transcription of the PyTorch forward, for verification."""
    B, N, _ = xyzt.shape
    d = feature_dim // 4
    div_term = jnp.exp(
        jnp.arange(0, d, 2, dtype=jnp.float32) * (-math.log(10000.0) / d)
    ).reshape(1, 1, -1)

    def dup(f):  # torch.stack([f, f], -1).view(B, N, -1)
        return jnp.stack([f, f], axis=-1).reshape(B, N, -1)

    outs_cos, outs_sin = [], []
    for a in range(4):
        p = xyzt[..., a:a + 1].astype(jnp.float32)
        outs_sin.append(dup(jnp.sin(p * div_term)))
        outs_cos.append(dup(jnp.cos(p * div_term)))
    cos_all = jnp.concatenate(outs_cos, axis=-1)
    sin_all = jnp.concatenate(outs_sin, axis=-1)
    return jnp.stack([cos_all, sin_all], axis=-1)


if __name__ == "__main__":
    B, N, FEATURE_DIM = 2, 8, 64
    key = jax.random.PRNGKey(0)
    xyzt = jax.random.uniform(key, (B, N, 4), dtype=jnp.float32) * 10.0

    out = rotary_position_encoding_4d(xyzt, FEATURE_DIM)
    out = jax.block_until_ready(out)
    ref = _reference(xyzt, FEATURE_DIM)
    assert out.shape == (B, N, FEATURE_DIM, 2), out.shape
    assert jnp.allclose(out, ref, atol=1e-5, rtol=1e-5), "mismatch vs reference"

    # Second check: non-multiple point count -> padding + multi-step grid.
    B2, N2 = 3, 167
    xyzt2 = jax.random.uniform(jax.random.PRNGKey(1), (B2, N2, 4),
                               dtype=jnp.float32) * 10.0
    out2 = jax.block_until_ready(rotary_position_encoding_4d(xyzt2, FEATURE_DIM))
    ref2 = _reference(xyzt2, FEATURE_DIM)
    assert out2.shape == (B2, N2, FEATURE_DIM, 2), out2.shape
    assert jnp.allclose(out2, ref2, atol=1e-5, rtol=1e-5), "mismatch (padded/grid)"

    print("KERNEL_OK")
</pallas_src>

<mosaic_0001>
module attributes {stable_mosaic.version = 11 : i64} {
  func.func @_rope4d_kernel(%arg0: i32, %arg1: memref<4x128xf32, #tpu.memory_space<vmem>>, %arg2: memref<4x128xf32, #tpu.memory_space<vmem>>, %arg3: memref<128x128xf32, #tpu.memory_space<vmem>>) attributes {dimension_semantics = [#tpu.dimension_semantics<parallel>], iteration_bounds = array<i64: 1>, scalar_prefetch = 0 : i64, scratch_operands = 0 : i64, tpu.core_type = #tpu.core_type<tc>, window_params = [{transform_indices = @transform_0, window_bounds = array<i64: 4, 128>}, {pipeline_mode = #tpu.pipeline_mode<synchronous>, transform_indices = @transform_1, window_bounds = array<i64: 4, 128>}, {transform_indices = @transform_2, window_bounds = array<i64: 128, 128>}]} {
    %c0 = arith.constant 0 : index
    %c0_0 = arith.constant 0 : index
    %0 = vector.load %arg1[%c0, %c0_0] : memref<4x128xf32, #tpu.memory_space<vmem>>, vector<4x128xf32>
    %c0_1 = arith.constant 0 : index
    %c0_2 = arith.constant 0 : index
    %1 = vector.load %arg2[%c0_1, %c0_2] : memref<4x128xf32, #tpu.memory_space<vmem>>, vector<4x128xf32>
    %cst = arith.constant dense<0.000000e+00> : vector<128x128xf32>
    %2 = tpu.matmul %0, %1, %cst {dimension_numbers = #tpu.dot_dimension_numbers<[0], [0], [1], [1], [0, 1, 1, 1], [], []>, precision = #tpu.contract_precision<fp32>} : vector<4x128xf32>, vector<4x128xf32>, vector<128x128xf32> -> vector<128x128xf32>
    %3 = tpu.iota {dimensions = array<i32: 1>} : vector<128x128xi32>
    %c2_i32 = arith.constant 2 : i32
    %c0_i32 = arith.constant 0 : i32
    %4 = arith.cmpi eq, %c2_i32, %c0_i32 : i32
    %c1_i32 = arith.constant 1 : i32
    %5 = arith.select %4, %c1_i32, %c2_i32 : i32
    %6 = vector.broadcast %5 : i32 to vector<128x128xi32>
    %7 = arith.remsi %3, %6 : vector<128x128xi32>
    %c0_i32_3 = arith.constant 0 : i32
    %8 = vector.broadcast %c0_i32_3 : i32 to vector<128x128xi32>
    %9 = arith.cmpi ne, %7, %8 : vector<128x128xi32>
    %c0_i32_4 = arith.constant 0 : i32
    %10 = vector.broadcast %c0_i32_4 : i32 to vector<128x128xi32>
    %11 = arith.cmpi slt, %7, %10 : vector<128x128xi32>
    %c0_i32_5 = arith.constant 0 : i32
    %12 = arith.cmpi slt, %5, %c0_i32_5 : i32
    %13 = vector.broadcast %12 : i1 to vector<128x128xi1>
    %14 = vector.broadcast %13 : vector<128x128xi1> to vector<128x128xi1>
    %15 = arith.xori %11, %14 : vector<128x128xi1>
    %16 = arith.andi %15, %9 : vector<128x128xi1>
    %17 = vector.broadcast %5 : i32 to vector<128x128xi32>
    %18 = arith.addi %7, %17 : vector<128x128xi32>
    %19 = arith.select %16, %18, %7 : vector<128x128xi1>, vector<128x128xi32>
    %c0_i32_6 = arith.constant 0 : i32
    %20 = vector.broadcast %c0_i32_6 : i32 to vector<128x128xi32>
    %21 = arith.cmpi eq, %19, %20 : vector<128x128xi32>
    %22 = math.cos %2 : vector<128x128xf32>
    %23 = math.sin %2 : vector<128x128xf32>
    %24 = arith.select %21, %22, %23 : vector<128x128xi1>, vector<128x128xf32>
    %c0_7 = arith.constant 0 : index
    %c0_8 = arith.constant 0 : index
    %25 = vector.load %arg3[%c0_7, %c0_8] : memref<128x128xf32, #tpu.memory_space<vmem>>, vector<128x128xf32>
    tpu.vector_store %arg3[%c0_7, %c0_8], %24 {strides = array<i32>} : memref<128x128xf32, #tpu.memory_space<vmem>>, vector<128x128xf32>,
    return
  }
  func.func @transform_0(%arg0: i32) -> (i32, i32) {
    %c0_i32 = arith.constant 0 : i32
    %c0_i32_0 = arith.constant 0 : i32
    return %c0_i32, %arg0 : i32, i32
  }
  func.func @transform_1(%arg0: i32) -> (i32, i32) {
    %c0_i32 = arith.constant 0 : i32
    %c0_i32_0 = arith.constant 0 : i32
    %c0_i32_1 = arith.constant 0 : i32
    return %c0_i32, %c0_i32_0 : i32, i32
  }
  func.func @transform_2(%arg0: i32) -> (i32, i32) {
    %c0_i32 = arith.constant 0 : i32
    %c0_i32_0 = arith.constant 0 : i32
    return %arg0, %c0_i32 : i32, i32
  }
}

</mosaic_0001>

<llo_original>
// kernel: rotary_position_encoding_4d.1
$region0: #{rotary_position_encoding_4d.1}
  #allocation0 [shape = 'u32[]', space=smem, size = 0x4, offset = 0x4, fixed_abs, tag = 'smem constant byte address 0x4 - core index']
  #allocation1 [shape = 'u32[144,128]{1,0:T(1,128)}', space=vmem, size = 0x12000, scoped, tag = 'internal scratch']
  %s0 = inlined_call_operand.vmem [shape: f32[4,128], index: 0, kind: input, shape index: {}]
  %s1 = inlined_call_operand.vmem [shape: f32[4,128], index: 1, kind: input, shape index: {}]
  %s2 = inlined_call_operand.vmem [shape: f32[128,128], index: 2, kind: output, shape index: {}]
  %s3 = sld [smem:[#allocation0]]
  $region18: #{rotary_position_encoding_4d.1} parent=0
    _
  %s5 = ssub.s32 1, %s3
  %s6 = scalar_select 0, %s5, %s3
  // Predicated region
  $region2: #{rotary_position_encoding_4d.1} parent=0 // pred_check
    _
  $region3: #{rotary_position_encoding_4d.1} parent=0 // pred_check_branch
    %8 = sbr.rel (0) target = $region5
  $region4: #{rotary_position_encoding_4d.1} parent=0 // pred_region
    _
  $region5: #{rotary_position_encoding_4d.1} parent=0 // pred_fallthru
    _
  // Predicated region
  $region6: #{rotary_position_encoding_4d.1} parent=0 // pred_check
    _
  $region7: #{rotary_position_encoding_4d.1} parent=0 // pred_check_branch
    %10 = sbr.rel (0) target = $region9
  $region8: #{rotary_position_encoding_4d.1} parent=0 // pred_region
    _
  $region9: #{rotary_position_encoding_4d.1} parent=0 // pred_fallthru
    _
  %v11 = vld [vmem:[%s0] sm:$0xf]
  %v12 = vld [vmem:[%s1] sm:$0xf]
  %13 = vxpose.xlu0.b32.start [1/16] %v11, 128
  %14 = vxpose.xlu0.b32.cont [2/16] 0.0, 128
  %15 = vxpose.xlu0.b32.cont [3/16] 0.0, 128
  %16 = vxpose.xlu0.b32.cont [4/16] 0.0, 128
  %17 = vxpose.xlu0.b32.cont [5/16] 0.0, 128
  %18 = vxpose.xlu0.b32.cont [6/16] 0.0, 128
  %19 = vxpose.xlu0.b32.cont [7/16] 0.0, 128
  %20 = vxpose.xlu0.b32.cont [8/16] 0.0, 128
  %21 = vxpose.xlu0.b32.cont [9/16] 0.0, 128
  %22 = vxpose.xlu0.b32.cont [10/16] 0.0, 128
  %23 = vxpose.xlu0.b32.cont [11/16] 0.0, 128
  %24 = vxpose.xlu0.b32.cont [12/16] 0.0, 128
  %25 = vxpose.xlu0.b32.cont [13/16] 0.0, 128
  %26 = vxpose.xlu0.b32.cont [14/16] 0.0, 128
  %27 = vxpose.xlu0.b32.cont [15/16] 0.0, 128
  %28 = vxpose.xlu0.b32.end [16/16] 0.0, 128
  %v29 = vpop.trf.xlu0
  %v30 = vpop.trf.xlu0
  %v31 = vpop.trf.xlu0
  %v32 = vpop.trf.xlu0
  %v33 = vpop.trf.xlu0
  %v34 = vpop.trf.xlu0
  %v35 = vpop.trf.xlu0
  %v36 = vpop.trf.xlu0
  %v37 = vpop.trf.xlu0
  %v38 = vpop.trf.xlu0
  %v39 = vpop.trf.xlu0
  %v40 = vpop.trf.xlu0
  %v41 = vpop.trf.xlu0
  %v42 = vpop.trf.xlu0
  %v43 = vpop.trf.xlu0
  %v44 = vpop.trf.xlu0
  %vm45 = vcmask 31744
  %v47 = vsel %vm45, %v29, 0
  %v50 = vsel %vm45, %v30, 0
  %v53 = vsel %vm45, %v31, 0
  %v56 = vsel %vm45, %v32, 0
  %v59 = vsel %vm45, %v33, 0
  %v62 = vsel %vm45, %v34, 0
  %v65 = vsel %vm45, %v35, 0
  %v68 = vsel %vm45, %v36, 0
  %v71 = vsel %vm45, %v37, 0
  %v74 = vsel %vm45, %v38, 0
  %v77 = vsel %vm45, %v39, 0
  %v80 = vsel %vm45, %v40, 0
  %v83 = vsel %vm45, %v41, 0
  %v86 = vsel %vm45, %v42, 0
  %v89 = vsel %vm45, %v43, 0
  %v92 = vsel %vm45, %v44, 0
  %vm94 = vcmask 1043456
  %v96 = vsel %vm94, %v12, 0
  %98 = vmatprep.subr.mxu0 0.0
  %v99 = vand.u32 %v96, 4294901760
  %100 = vmatpush1.msra.mxu0 %v99
  %101 = vmatprep.subr.mxu0 0.0
  %102 = vmatpush1.msra.mxu0 0.0
  %103 = vmatprep.subr.mxu0 0.0
  %104 = vmatpush1.msra.mxu0 0.0
  %105 = vmatprep.subr.mxu0 0.0
  %106 = vmatpush1.msra.mxu0 0.0
  %107 = vmatprep.subr.mxu0 0.0
  %108 = vmatpush1.msra.mxu0 0.0
  %109 = vmatprep.subr.mxu0 0.0
  %110 = vmatpush1.msra.mxu0 0.0
  %111 = vmatprep.subr.mxu0 0.0
  %112 = vmatpush1.msra.mxu0 0.0
  %113 = vmatprep.subr.mxu0 0.0
  %114 = vmatpush1.msra.mxu0 0.0
  %115 = vmatprep.subr.mxu0 0.0
  %116 = vmatpush1.msra.mxu0 0.0
  %117 = vmatprep.subr.mxu0 0.0
  %118 = vmatpush1.msra.mxu0 0.0
  %119 = vmatprep.subr.mxu0 0.0
  %120 = vmatpush1.msra.mxu0 0.0
  %121 = vmatprep.subr.mxu0 0.0
  %122 = vmatpush1.msra.mxu0 0.0
  %123 = vmatprep.subr.mxu0 0.0
  %124 = vmatpush1.msra.mxu0 0.0
  %125 = vmatprep.subr.mxu0 0.0
  %126 = vmatpush1.msra.mxu0 0.0
  %127 = vmatprep.subr.mxu0 0.0
  %128 = vmatpush1.msra.mxu0 0.0
  %129 = vmatprep.subr.mxu0 0.0
  %130 = vmatpush1.msra.mxu0 0.0
  %131 = vmatprep.subr.mxu0 0.0
  %132 = vmatpush1.msra.mxu0 0.0
  %133 = vmatprep.subr.mxu0 0.0
  %134 = vmatpush1.msra.mxu0 0.0
  %135 = vmatprep.subr.mxu0 0.0
  %136 = vmatpush1.msra.mxu0 0.0
  %137 = vmatprep.subr.mxu0 0.0
  %138 = vmatpush1.msra.mxu0 0.0
  %139 = vmatprep.subr.mxu0 0.0
  %140 = vmatpush1.msra.mxu0 0.0
  %141 = vmatprep.subr.mxu0 0.0
  %142 = vmatpush1.msra.mxu0 0.0
  %143 = vmatprep.subr.mxu0 0.0
  %144 = vmatpush1.msra.mxu0 0.0
  %145 = vmatprep.subr.mxu0 0.0
  %146 = vmatpush1.msra.mxu0 0.0
  %147 = vmatprep.subr.mxu0 0.0
  %148 = vmatpush1.msra.mxu0 0.0
  %149 = vmatprep.subr.mxu0 0.0
  %150 = vmatpush1.msra.mxu0 0.0
  %151 = vmatprep.subr.mxu0 0.0
  %152 = vmatpush1.msra.mxu0 0.0
  %153 = vmatprep.subr.mxu0 0.0
  %154 = vmatpush1.msra.mxu0 0.0
  %155 = vmatprep.subr.mxu0 0.0
  %156 = vmatpush1.msra.mxu0 0.0
  %157 = vmatprep.subr.mxu0 0.0
  %158 = vmatpush1.msra.mxu0 0.0
  %159 = vmatprep.subr.mxu0 0.0
  %160 = vmatpush1.msra.mxu0 0.0
  %161 = vmatprep.subr.mxu0 0.0
  %162 = vmatpush1.msra.mxu0 0.0
  %163 = vmatprep.mubr.f32.mxu0 0.0
  %v164 = vand.u32 %v47, 4294901760
  %v165 = vsub.f32 %v47, %v164
  %v166 = vand.u32 %v165, 4294901760
  %v167 = vsub.f32 %v165, %v166
  %v168 = vand.u32 %v167, 4294901760
  %169 = vmatmul.mubr.f32.gmra.mrb[0].mxu0 %v168
  %v170 = vpop.f32.mrb[0].mxu0
  %v171 = vadd.f32 0.0, %v170
  %v172 = vpop.f32.mrb[0].mxu0
  %173 = vmatprep.mubr.f32.mxu0 0.0
  %v174 = vand.u32 %v50, 4294901760
  %v175 = vsub.f32 %v50, %v174
  %v176 = vand.u32 %v175, 4294901760
  %v177 = vsub.f32 %v175, %v176
  %v178 = vand.u32 %v177, 4294901760
  %179 = vmatmul.mubr.f32.gmra.mrb[0].mxu0 %v178
  %v180 = vpop.f32.mrb[0].mxu0
  %v181 = vadd.f32 0.0, %v180
  %v182 = vpop.f32.mrb[0].mxu0
  %183 = vmatprep.mubr.f32.mxu0 0.0
  %v184 = vand.u32 %v53, 4294901760
  %v185 = vsub.f32 %v53, %v184
  %v186 = vand.u32 %v185, 4294901760
  %v187 = vsub.f32 %v185, %v186
  %v188 = vand.u32 %v187, 4294901760
  %189 = vmatmul.mubr.f32.gmra.mrb[0].mxu0 %v188
  %v190 = vpop.f32.mrb[0].mxu0
  %v191 = vadd.f32 0.0, %v190
  %v192 = vpop.f32.mrb[0].mxu0
  %193 = vmatprep.mubr.f32.mxu0 0.0
  %v194 = vand.u32 %v56, 4294901760
  %v195 = vsub.f32 %v56, %v194
  %v196 = vand.u32 %v195, 4294901760
  %v197 = vsub.f32 %v195, %v196
  %v198 = vand.u32 %v197, 4294901760
  %199 = vmatmul.mubr.f32.gmra.mrb[0].mxu0 %v198
  %v200 = vpop.f32.mrb[0].mxu0
  %v201 = vadd.f32 0.0, %v200
  %v202 = vpop.f32.mrb[0].mxu0
  %203 = vmatprep.mubr.f32.mxu0 0.0
  %v204 = vand.u32 %v59, 4294901760
  %v205 = vsub.f32 %v59, %v204
  %v206 = vand.u32 %v205, 4294901760
  %v207 = vsub.f32 %v205, %v206
  %v208 = vand.u32 %v207, 4294901760
  %209 = vmatmul.mubr.f32.gmra.mrb[0].mxu0 %v208
  %v210 = vpop.f32.mrb[0].mxu0
  %v211 = vadd.f32 0.0, %v210
  %v212 = vpop.f32.mrb[0].mxu0
  %213 = vmatprep.mubr.f32.mxu0 0.0
  %v214 = vand.u32 %v62, 4294901760
  %v215 = vsub.f32 %v62, %v214
  %v216 = vand.u32 %v215, 4294901760
  %v217 = vsub.f32 %v215, %v216
  %v218 = vand.u32 %v217, 4294901760
  %219 = vmatmul.mubr.f32.gmra.mrb[0].mxu0 %v218
  %v220 = vpop.f32.mrb[0].mxu0
  %v221 = vadd.f32 0.0, %v220
  %v222 = vpop.f32.mrb[0].mxu0
  %223 = vmatprep.mubr.f32.mxu0 0.0
  %v224 = vand.u32 %v65, 4294901760
  %v225 = vsub.f32 %v65, %v224
  %v226 = vand.u32 %v225, 4294901760
  %v227 = vsub.f32 %v225, %v226
  %v228 = vand.u32 %v227, 4294901760
  %229 = vmatmul.mubr.f32.gmra.mrb[0].mxu0 %v228
  %v230 = vpop.f32.mrb[0].mxu0
  %v231 = vadd.f32 0.0, %v230
  %v232 = vpop.f32.mrb[0].mxu0
  %233 = vmatprep.mubr.f32.mxu0 0.0
  %v234 = vand.u32 %v68, 4294901760
  %v235 = vsub.f32 %v68, %v234
  %v236 = vand.u32 %v235, 4294901760
  %v237 = vsub.f32 %v235, %v236
  %v238 = vand.u32 %v237, 4294901760
  %239 = vmatmul.mubr.f32.gmra.mrb[0].mxu0 %v238
  %v240 = vpop.f32.mrb[0].mxu0
  %v241 = vadd.f32 0.0, %v240
  %v242 = vpop.f32.mrb[0].mxu0
  %243 = vmatprep.mubr.f32.mxu0 0.0
  %v244 = vand.u32 %v71, 4294901760
  %v245 = vsub.f32 %v71, %v244
  %v246 = vand.u32 %v245, 4294901760
  %v247 = vsub.f32 %v245, %v246
  %v248 = vand.u32 %v247, 4294901760
  %249 = vmatmul.mubr.f32.gmra.mrb[0].mxu0 %v248
  %v250 = vpop.f32.mrb[0].mxu0
  %v251 = vadd.f32 0.0, %v250
  %v252 = vpop.f32.mrb[0].mxu0
  %253 = vmatprep.mubr.f32.mxu0 0.0
  %v254 = vand.u32 %v74, 4294901760
  %v255 = vsub.f32 %v74, %v254
  %v256 = vand.u32 %v255, 4294901760
  %v257 = vsub.f32 %v255, %v256
  %v258 = vand.u32 %v257, 4294901760
  %259 = vmatmul.mubr.f32.gmra.mrb[0].mxu0 %v258
  %v260 = vpop.f32.mrb[0].mxu0
  %v261 = vadd.f32 0.0, %v260
  %v262 = vpop.f32.mrb[0].mxu0
  %263 = vmatprep.mubr.f32.mxu0 0.0
  %v264 = vand.u32 %v77, 4294901760
  %v265 = vsub.f32 %v77, %v264
  %v266 = vand.u32 %v265, 4294901760
  %v267 = vsub.f32 %v265, %v266
  %v268 = vand.u32 %v267, 4294901760
  %269 = vmatmul.mubr.f32.gmra.mrb[0].mxu0 %v268
  %v270 = vpop.f32.mrb[0].mxu0
  %v271 = vadd.f32 0.0, %v270
  %v272 = vpop.f32.mrb[0].mxu0
  %273 = vmatprep.mubr.f32.mxu0 0.0
  %v274 = vand.u32 %v80, 4294901760
  %v275 = vsub.f32 %v80, %v274
  %v276 = vand.u32 %v275, 4294901760
  %v277 = vsub.f32 %v275, %v276
  %v278 = vand.u32 %v277, 4294901760
  %279 = vmatmul.mubr.f32.gmra.mrb[0].mxu0 %v278
  %v280 = vpop.f32.mrb[0].mxu0
  %v281 = vadd.f32 0.0, %v280
  %v282 = vpop.f32.mrb[0].mxu0
  %283 = vmatprep.mubr.f32.mxu0 0.0
  %v284 = vand.u32 %v83, 4294901760
  %v285 = vsub.f32 %v83, %v284
  %v286 = vand.u32 %v285, 4294901760
  %v287 = vsub.f32 %v285, %v286
  %v288 = vand.u32 %v287, 4294901760
  %289 = vmatmul.mubr.f32.gmra.mrb[0].mxu0 %v288
  %v290 = vpop.f32.mrb[0].mxu0
  %v291 = vadd.f32 0.0, %v290
  %v292 = vpop.f32.mrb[0].mxu0
  %293 = vmatprep.mubr.f32.mxu0 0.0
  %v294 = vand.u32 %v86, 4294901760
  %v295 = vsub.f32 %v86, %v294
  %v296 = vand.u32 %v295, 4294901760
  %v297 = vsub.f32 %v295, %v296
  %v298 = vand.u32 %v297, 4294901760
  %299 = vmatmul.mubr.f32.gmra.mrb[0].mxu0 %v298
  %v300 = vpop.f32.mrb[0].mxu0
  %v301 = vadd.f32 0.0, %v300
  %v302 = vpop.f32.mrb[0].mxu0
  %303 = vmatprep.mubr.f32.mxu0 0.0
  %v304 = vand.u32 %v89, 4294901760
  %v305 = vsub.f32 %v89, %v304
  %v306 = vand.u32 %v305, 4294901760
  %v307 = vsub.f32 %v305, %v306
  %v308 = vand.u32 %v307, 4294901760
  %309 = vmatmul.mubr.f32.gmra.mrb[0].mxu0 %v308
  %v310 = vpop.f32.mrb[0].mxu0
  %v311 = vadd.f32 0.0, %v310
  %v312 = vpop.f32.mrb[0].mxu0
  %313 = vmatprep.mubr.f32.mxu0 0.0
  %v314 = vand.u32 %v92, 4294901760
  %v315 = vsub.f32 %v92, %v314
  %v316 = vand.u32 %v315, 4294901760
  %v317 = vsub.f32 %v315, %v316
  %v318 = vand.u32 %v317, 4294901760
  %319 = vmatmul.mubr.f32.gmra.mrb[0].mxu0 %v318
  %v320 = vpop.f32.mrb[0].mxu0
  %v321 = vadd.f32 0.0, %v320
  %v322 = vpop.f32.mrb[0].mxu0
  %323 = vdwg.mxu0
  %324 = vmatprep.subr.mxu0 0.0
  %v325 = vand.u32 %v96, 4294901760
  %v326 = vsub.f32 %v96, %v325
  %v327 = vand.u32 %v326, 4294901760
  %v328 = vsub.f32 %v326, %v327
  %v329 = vand.u32 %v328, 4294901760
  %330 = vmatpush1.msra.mxu0 %v329
  %331 = vmatprep.subr.mxu0 0.0
  %332 = vmatpush1.msra.mxu0 0.0
  %333 = vmatprep.subr.mxu0 0.0
  %334 = vmatpush1.msra.mxu0 0.0
  %335 = vmatprep.subr.mxu0 0.0
  %336 = vmatpush1.msra.mxu0 0.0
  %337 = vmatprep.subr.mxu0 0.0
  %338 = vmatpush1.msra.mxu0 0.0
  %339 = vmatprep.subr.mxu0 0.0
  %340 = vmatpush1.msra.mxu0 0.0
  %341 = vmatprep.subr.mxu0 0.0
  %342 = vmatpush1.msra.mxu0 0.0
  %343 = vmatprep.subr.mxu0 0.0
  %344 = vmatpush1.msra.mxu0 0.0
  %345 = vmatprep.subr.mxu0 0.0
  %346 = vmatpush1.msra.mxu0 0.0
  %347 = vmatprep.subr.mxu0 0.0
  %348 = vmatpush1.msra.mxu0 0.0
  %349 = vmatprep.subr.mxu0 0.0
  %350 = vmatpush1.msra.mxu0 0.0
  %351 = vmatprep.subr.mxu0 0.0
  %352 = vmatpush1.msra.mxu0 0.0
  %353 = vmatprep.subr.mxu0 0.0
  %354 = vmatpush1.msra.mxu0 0.0
  %355 = vmatprep.subr.mxu0 0.0
  %356 = vmatpush1.msra.mxu0 0.0
  %357 = vmatprep.subr.mxu0 0.0
  %358 = vmatpush1.msra.mxu0 0.0
  %359 = vmatprep.subr.mxu0 0.0
  %360 = vmatpush1.msra.mxu0 0.0
  %361 = vmatprep.subr.mxu0 0.0
  %362 = vmatpush1.msra.mxu0 0.0
  %363 = vmatprep.subr.mxu0 0.0
  %364 = vmatpush1.msra.mxu0 0.0
  %365 = vmatprep.subr.mxu0 0.0
  %366 = vmatpush1.msra.mxu0 0.0
  %367 = vmatprep.subr.mxu0 0.0
  %368 = vmatpush1.msra.mxu0 0.0
  %369 = vmatprep.subr.mxu0 0.0
  %370 = vmatpush1.msra.mxu0 0.0
  %371 = vmatprep.subr.mxu0 0.0
  %372 = vmatpush1.msra.mxu0 0.0
  %373 = vmatprep.subr.mxu0 0.0
  %374 = vmatpush1.msra.mxu0 0.0
  %375 = vmatprep.subr.mxu0 0.0
  %376 = vmatpush1.msra.mxu0 0.0
  %377 = vmatprep.subr.mxu0 0.0
  %378 = vmatpush1.msra.mxu0 0.0
  %379 = vmatprep.subr.mxu0 0.0
  %380 = vmatpush1.msra.mxu0 0.0
  %381 = vmatprep.subr.mxu0 0.0
  %382 = vmatpush1.msra.mxu0 0.0
  %383 = vmatprep.subr.mxu0 0.0
  %384 = vmatpush1.msra.mxu0 0.0
  %385 = vmatprep.subr.mxu0 0.0
  %386 = vmatpush1.msra.mxu0 0.0
  %387 = vmatprep.subr.mxu0 0.0
  %388 = vmatpush1.msra.mxu0 0.0
  %389 = vmatprep.subr.mxu0 0.0
  %390 = vmatpush1.msra.mxu0 0.0
  %391 = vmatprep.subr.mxu0 0.0
  %392 = vmatpush1.msra.mxu0 0.0
  %393 = vmatprep.mubr.f32.mxu0 0.0
  %v394 = vand.u32 %v47, 4294901760
  %395 = vmatmul.mubr.f32.gmra.mrb[0].mxu0 %v394
  %v396 = vpop.f32.mrb[0].mxu0
  %v397 = vadd.f32 %v171, %v396
  %v398 = vpop.f32.mrb[0].mxu0
  %399 = vmatprep.mubr.f32.mxu0 0.0
  %v400 = vand.u32 %v50, 4294901760
  %401 = vmatmul.mubr.f32.gmra.mrb[0].mxu0 %v400
  %v402 = vpop.f32.mrb[0].mxu0
  %v403 = vadd.f32 %v181, %v402
  %v404 = vpop.f32.mrb[0].mxu0
  %405 = vmatprep.mubr.f32.mxu0 0.0
  %v406 = vand.u32 %v53, 4294901760
  %407 = vmatmul.mubr.f32.gmra.mrb[0].mxu0 %v406
  %v408 = vpop.f32.mrb[0].mxu0
  %v409 = vadd.f32 %v191, %v408
  %v410 = vpop.f32.mrb[0].mxu0
  %411 = vmatprep.mubr.f32.mxu0 0.0
  %v412 = vand.u32 %v56, 4294901760
  %413 = vmatmul.mubr.f32.gmra.mrb[0].mxu0 %v412
  %v414 = vpop.f32.mrb[0].mxu0
  %v415 = vadd.f32 %v201, %v414
  %v416 = vpop.f32.mrb[0].mxu0
  %417 = vmatprep.mubr.f32.mxu0 0.0
  %v418 = vand.u32 %v59, 4294901760
  %419 = vmatmul.mubr.f32.gmra.mrb[0].mxu0 %v418
  %v420 = vpop.f32.mrb[0].mxu0
  %v421 = vadd.f32 %v211, %v420
  %v422 = vpop.f32.mrb[0].mxu0
  %423 = vmatprep.mubr.f32.mxu0 0.0
  %v424 = vand.u32 %v62, 4294901760
  %425 = vmatmul.mubr.f32.gmra.mrb[0].mxu0 %v424
  %v426 = vpop.f32.mrb[0].mxu0
  %v427 = vadd.f32 %v221, %v426
  %v428 = vpop.f32.mrb[0].mxu0
  %429 = vmatprep.mubr.f32.mxu0 0.0
  %v430 = vand.u32 %v65, 4294901760
  %431 = vmatmul.mubr.f32.gmra.mrb[0].mxu0 %v430
  %v432 = vpop.f32.mrb[0].mxu0
  %v433 = vadd.f32 %v231, %v432
  %v434 = vpop.f32.mrb[0].mxu0
  %435 = vmatprep.mubr.f32.mxu0 0.0
  %v436 = vand.u32 %v68, 4294901760
  %437 = vmatmul.mubr.f32.gmra.mrb[0].mxu0 %v436
  %v438 = vpop.f32.mrb[0].mxu0
  %v439 = vadd.f32 %v241, %v438
  %v440 = vpop.f32.mrb[0].mxu0
  %441 = vmatprep.mubr.f32.mxu0 0.0
  %v442 = vand.u32 %v71, 4294901760
  %443 = vmatmul.mubr.f32.gmra.mrb[0].mxu0 %v442
  %v444 = vpop.f32.mrb[0].mxu0
  %v445 = vadd.f32 %v251, %v444
  %v446 = vpop.f32.mrb[0].mxu0
  %447 = vmatprep.mubr.f32.mxu0 0.0
  %v448 = vand.u32 %v74, 4294901760
  %449 = vmatmul.mubr.f32.gmra.mrb[0].mxu0 %v448
  %v450 = vpop.f32.mrb[0].mxu0
  %v451 = vadd.f32 %v261, %v450
  %v452 = vpop.f32.mrb[0].mxu0
  %453 = vmatprep.mubr.f32.mxu0 0.0
  %v454 = vand.u32 %v77, 4294901760
  %455 = vmatmul.mubr.f32.gmra.mrb[0].mxu0 %v454
  %v456 = vpop.f32.mrb[0].mxu0
  %v457 = vadd.f32 %v271, %v456
  %v458 = vpop.f32.mrb[0].mxu0
  %459 = vmatprep.mubr.f32.mxu0 0.0
  %v460 = vand.u32 %v80, 4294901760
  %461 = vmatmul.mubr.f32.gmra.mrb[0].mxu0 %v460
  %v462 = vpop.f32.mrb[0].mxu0
  %v463 = vadd.f32 %v281, %v462
  %v464 = vpop.f32.mrb[0].mxu0
  %465 = vmatprep.mubr.f32.mxu0 0.0
  %v466 = vand.u32 %v83, 4294901760
  %467 = vmatmul.mubr.f32.gmra.mrb[0].mxu0 %v466
  %v468 = vpop.f32.mrb[0].mxu0
  %v469 = vadd.f32 %v291, %v468
  %v470 = vpop.f32.mrb[0].mxu0
  %471 = vmatprep.mubr.f32.mxu0 0.0
  %v472 = vand.u32 %v86, 4294901760
  %473 = vmatmul.mubr.f32.gmra.mrb[0].mxu0 %v472
  %v474 = vpop.f32.mrb[0].mxu0
  %v475 = vadd.f32 %v301, %v474
  %v476 = vpop.f32.mrb[0].mxu0
  %477 = vmatprep.mubr.f32.mxu0 0.0
  %v478 = vand.u32 %v89, 4294901760
  %479 = vmatmul.mubr.f32.gmra.mrb[0].mxu0 %v478
  %v480 = vpop.f32.mrb[0].mxu0
  %v481 = vadd.f32 %v311, %v480
  %v482 = vpop.f32.mrb[0].mxu0
  %483 = vmatprep.mubr.f32.mxu0 0.0
  %v484 = vand.u32 %v92, 4294901760
  %485 = vmatmul.mubr.f32.gmra.mrb[0].mxu0 %v484
  %v486 = vpop.f32.mrb[0].mxu0
  %v487 = vadd.f32 %v321, %v486
  %v488 = vpop.f32.mrb[0].mxu0
  %489 = vdwg.mxu0
  %490 = vmatprep.subr.mxu0 0.0
  %v491 = vand.u32 %v96, 4294901760
  %v492 = vsub.f32 %v96, %v491
  %493 = vmatpush1.msra.mxu0 %v492
  %494 = vmatprep.subr.mxu0 0.0
  %495 = vmatpush1.msra.mxu0 0.0
  %496 = vmatprep.subr.mxu0 0.0
  %497 = vmatpush1.msra.mxu0 0.0
  %498 = vmatprep.subr.mxu0 0.0
  %499 = vmatpush1.msra.mxu0 0.0
  %500 = vmatprep.subr.mxu0 0.0
  %501 = vmatpush1.msra.mxu0 0.0
  %502 = vmatprep.subr.mxu0 0.0
  %503 = vmatpush1.msra.mxu0 0.0
  %504 = vmatprep.subr.mxu0 0.0
  %505 = vmatpush1.msra.mxu0 0.0
  %506 = vmatprep.subr.mxu0 0.0
  %507 = vmatpush1.msra.mxu0 0.0
  %508 = vmatprep.subr.mxu0 0.0
  %509 = vmatpush1.msra.mxu0 0.0
  %510 = vmatprep.subr.mxu0 0.0
  %511 = vmatpush1.msra.mxu0 0.0
  %512 = vmatprep.subr.mxu0 0.0
  %513 = vmatpush1.msra.mxu0 0.0
  %514 = vmatprep.subr.mxu0 0.0
  %515 = vmatpush1.msra.mxu0 0.0
  %516 = vmatprep.subr.mxu0 0.0
  %517 = vmatpush1.msra.mxu0 0.0
  %518 = vmatprep.subr.mxu0 0.0
  %519 = vmatpush1.msra.mxu0 0.0
  %520 = vmatprep.subr.mxu0 0.0
  %521 = vmatpush1.msra.mxu0 0.0
  %522 = vmatprep.subr.mxu0 0.0
  %523 = vmatpush1.msra.mxu0 0.0
  %524 = vmatprep.subr.mxu0 0.0
  %525 = vmatpush1.msra.mxu0 0.0
  %526 = vmatprep.subr.mxu0 0.0
  %527 = vmatpush1.msra.mxu0 0.0
  %528 = vmatprep.subr.mxu0 0.0
  %529 = vmatpush1.msra.mxu0 0.0
  %530 = vmatprep.subr.mxu0 0.0
  %531 = vmatpush1.msra.mxu0 0.0
  %532 = vmatprep.subr.mxu0 0.0
  %533 = vmatpush1.msra.mxu0 0.0
  %534 = vmatprep.subr.mxu0 0.0
  %535 = vmatpush1.msra.mxu0 0.0
  %536 = vmatprep.subr.mxu0 0.0
  %537 = vmatpush1.msra.mxu0 0.0
  %538 = vmatprep.subr.mxu0 0.0
  %539 = vmatpush1.msra.mxu0 0.0
  %540 = vmatprep.subr.mxu0 0.0
  %541 = vmatpush1.msra.mxu0 0.0
  %542 = vmatprep.subr.mxu0 0.0
  %543 = vmatpush1.msra.mxu0 0.0
  %544 = vmatprep.subr.mxu0 0.0
  %545 = vmatpush1.msra.mxu0 0.0
  %546 = vmatprep.subr.mxu0 0.0
  %547 = vmatpush1.msra.mxu0 0.0
  %548 = vmatprep.subr.mxu0 0.0
  %549 = vmatpush1.msra.mxu0 0.0
  %550 = vmatprep.subr.mxu0 0.0
  %551 = vmatpush1.msra.mxu0 0.0
  %552 = vmatprep.subr.mxu0 0.0
  %553 = vmatpush1.msra.mxu0 0.0
  %554 = vmatprep.subr.mxu0 0.0
  %555 = vmatpush1.msra.mxu0 0.0
  %556 = vmatprep.mubr.f32.mxu0 0.0
  %v557 = vand.u32 %v47, 4294901760
  %v558 = vsub.f32 %v47, %v557
  %559 = vmatmul.mubr.f32.gmra.mrb[0].mxu0 %v558
  %v560 = vpop.f32.mrb[0].mxu0
  %v561 = vadd.f32 %v397, %v560
  %v562 = vpop.f32.mrb[0].mxu0
  %563 = vmatprep.mubr.f32.mxu0 0.0
  %v564 = vand.u32 %v50, 4294901760
  %v565 = vsub.f32 %v50, %v564
  %566 = vmatmul.mubr.f32.gmra.mrb[0].mxu0 %v565
  %v567 = vpop.f32.mrb[0].mxu0
  %v568 = vadd.f32 %v403, %v567
  %v569 = vpop.f32.mrb[0].mxu0
  %570 = vmatprep.mubr.f32.mxu0 0.0
  %v571 = vand.u32 %v53, 4294901760
  %v572 = vsub.f32 %v53, %v571
  %573 = vmatmul.mubr.f32.gmra.mrb[0].mxu0 %v572
  %v574 = vpop.f32.mrb[0].mxu0
  %v575 = vadd.f32 %v409, %v574
  %v576 = vpop.f32.mrb[0].mxu0
  %577 = vmatprep.mubr.f32.mxu0 0.0
  %v578 = vand.u32 %v56, 4294901760
  %v579 = vsub.f32 %v56, %v578
  %580 = vmatmul.mubr.f32.gmra.mrb[0].mxu0 %v579
  %v581 = vpop.f32.mrb[0].mxu0
  %v582 = vadd.f32 %v415, %v581
  %v583 = vpop.f32.mrb[0].mxu0
  %584 = vmatprep.mubr.f32.mxu0 0.0
  %v585 = vand.u32 %v59, 4294901760
  %v586 = vsub.f32 %v59, %v585
  %587 = vmatmul.mubr.f32.gmra.mrb[0].mxu0 %v586
  %v588 = vpop.f32.mrb[0].mxu0
  %v589 = vadd.f32 %v421, %v588
  %v590 = vpop.f32.mrb[0].mxu0
  %591 = vmatprep.mubr.f32.mxu0 0.0
  %v592 = vand.u32 %v62, 4294901760
  %v593 = vsub.f32 %v62, %v592
  %594 = vmatmul.mubr.f32.gmra.mrb[0].mxu0 %v593
  %v595 = vpop.f32.mrb[0].mxu0
  %v596 = vadd.f32 %v427, %v595
  %v597 = vpop.f32.mrb[0].mxu0
  %598 = vmatprep.mubr.f32.mxu0 0.0
  %v599 = vand.u32 %v65, 4294901760
  %v600 = vsub.f32 %v65, %v599
  %601 = vmatmul.mubr.f32.gmra.mrb[0].mxu0 %v600
  %v602 = vpop.f32.mrb[0].mxu0
  %v603 = vadd.f32 %v433, %v602
  %v604 = vpop.f32.mrb[0].mxu0
  %605 = vmatprep.mubr.f32.mxu0 0.0
  %v606 = vand.u32 %v68, 4294901760
  %v607 = vsub.f32 %v68, %v606
  %608 = vmatmul.mubr.f32.gmra.mrb[0].mxu0 %v607
  %v609 = vpop.f32.mrb[0].mxu0
  %v610 = vadd.f32 %v439, %v609
  %v611 = vpop.f32.mrb[0].mxu0
  %612 = vmatprep.mubr.f32.mxu0 0.0
  %v613 = vand.u32 %v71, 4294901760
  %v614 = vsub.f32 %v71, %v613
  %615 = vmatmul.mubr.f32.gmra.mrb[0].mxu0 %v614
  %v616 = vpop.f32.mrb[0].mxu0
  %v617 = vadd.f32 %v445, %v616
  %v618 = vpop.f32.mrb[0].mxu0
  %619 = vmatprep.mubr.f32.mxu0 0.0
  %v620 = vand.u32 %v74, 4294901760
  %v621 = vsub.f32 %v74, %v620
  %622 = vmatmul.mubr.f32.gmra.mrb[0].mxu0 %v621
  %v623 = vpop.f32.mrb[0].mxu0
  %v624 = vadd.f32 %v451, %v623
  %v625 = vpop.f32.mrb[0].mxu0
  %626 = vmatprep.mubr.f32.mxu0 0.0
  %v627 = vand.u32 %v77, 4294901760
  %v628 = vsub.f32 %v77, %v627
  %629 = vmatmul.mubr.f32.gmra.mrb[0].mxu0 %v628
  %v630 = vpop.f32.mrb[0].mxu0
  %v631 = vadd.f32 %v457, %v630
  %v632 = vpop.f32.mrb[0].mxu0
  %633 = vmatprep.mubr.f32.mxu0 0.0
  %v634 = vand.u32 %v80, 4294901760
  %v635 = vsub.f32 %v80, %v634
  %636 = vmatmul.mubr.f32.gmra.mrb[0].mxu0 %v635
  %v637 = vpop.f32.mrb[0].mxu0
  %v638 = vadd.f32 %v463, %v637
  %v639 = vpop.f32.mrb[0].mxu0
  %640 = vmatprep.mubr.f32.mxu0 0.0
  %v641 = vand.u32 %v83, 4294901760
  %v642 = vsub.f32 %v83, %v641
  %643 = vmatmul.mubr.f32.gmra.mrb[0].mxu0 %v642
  %v644 = vpop.f32.mrb[0].mxu0
  %v645 = vadd.f32 %v469, %v644
  %v646 = vpop.f32.mrb[0].mxu0
  %647 = vmatprep.mubr.f32.mxu0 0.0
  %v648 = vand.u32 %v86, 4294901760
  %v649 = vsub.f32 %v86, %v648
  %650 = vmatmul.mubr.f32.gmra.mrb[0].mxu0 %v649
  %v651 = vpop.f32.mrb[0].mxu0
  %v652 = vadd.f32 %v475, %v651
  %v653 = vpop.f32.mrb[0].mxu0
  %654 = vmatprep.mubr.f32.mxu0 0.0
  %v655 = vand.u32 %v89, 4294901760
  %v656 = vsub.f32 %v89, %v655
  %657 = vmatmul.mubr.f32.gmra.mrb[0].mxu0 %v656
  %v658 = vpop.f32.mrb[0].mxu0
  %v659 = vadd.f32 %v481, %v658
  %v660 = vpop.f32.mrb[0].mxu0
  %661 = vmatprep.mubr.f32.mxu0 0.0
  %v662 = vand.u32 %v92, 4294901760
  %v663 = vsub.f32 %v92, %v662
  %664 = vmatmul.mubr.f32.gmra.mrb[0].mxu0 %v663
  %v665 = vpop.f32.mrb[0].mxu0
  %v666 = vadd.f32 %v487, %v665
  %v667 = vpop.f32.mrb[0].mxu0
  %668 = vdwg.mxu0
  %669 = vmatprep.subr.mxu0 0.0
  %v670 = vand.u32 %v96, 4294901760
  %671 = vmatpush1.msra.mxu0 %v670
  %672 = vmatprep.subr.mxu0 0.0
  %673 = vmatpush1.msra.mxu0 0.0
  %674 = vmatprep.subr.mxu0 0.0
  %675 = vmatpush1.msra.mxu0 0.0
  %676 = vmatprep.subr.mxu0 0.0
  %677 = vmatpush1.msra.mxu0 0.0
  %678 = vmatprep.subr.mxu0 0.0
  %679 = vmatpush1.msra.mxu0 0.0
  %680 = vmatprep.subr.mxu0 0.0
  %681 = vmatpush1.msra.mxu0 0.0
  %682 = vmatprep.subr.mxu0 0.0
  %683 = vmatpush1.msra.mxu0 0.0
  %684 = vmatprep.subr.mxu0 0.0
  %685 = vmatpush1.msra.mxu0 0.0
  %686 = vmatprep.subr.mxu0 0.0
  %687 = vmatpush1.msra.mxu0 0.0
  %688 = vmatprep.subr.mxu0 0.0
  %689 = vmatpush1.msra.mxu0 0.0
  %690 = vmatprep.subr.mxu0 0.0
  %691 = vmatpush1.msra.mxu0 0.0
  %692 = vmatprep.subr.mxu0 0.0
  %693 = vmatpush1.msra.mxu0 0.0
  %694 = vmatprep.subr.mxu0 0.0
  %695 = vmatpush1.msra.mxu0 0.0
  %696 = vmatprep.subr.mxu0 0.0
  %697 = vmatpush1.msra.mxu0 0.0
  %698 = vmatprep.subr.mxu0 0.0
  %699 = vmatpush1.msra.mxu0 0.0
  %700 = vmatprep.subr.mxu0 0.0
  %701 = vmatpush1.msra.mxu0 0.0
  %702 = vmatprep.subr.mxu0 0.0
  %703 = vmatpush1.msra.mxu0 0.0
  %704 = vmatprep.subr.mxu0 0.0
  %705 = vmatpush1.msra.mxu0 0.0
  %706 = vmatprep.subr.mxu0 0.0
  %707 = vmatpush1.msra.mxu0 0.0
  %708 = vmatprep.subr.mxu0 0.0
  %709 = vmatpush1.msra.mxu0 0.0
  %710 = vmatprep.subr.mxu0 0.0
  %711 = vmatpush1.msra.mxu0 0.0
  %712 = vmatprep.subr.mxu0 0.0
  %713 = vmatpush1.msra.mxu0 0.0
  %714 = vmatprep.subr.mxu0 0.0
  %715 = vmatpush1.msra.mxu0 0.0
  %716 = vmatprep.subr.mxu0 0.0
  %717 = vmatpush1.msra.mxu0 0.0
  %718 = vmatprep.subr.mxu0 0.0
  %719 = vmatpush1.msra.mxu0 0.0
  %720 = vmatprep.subr.mxu0 0.0
  %721 = vmatpush1.msra.mxu0 0.0
  %722 = vmatprep.subr.mxu0 0.0
  %723 = vmatpush1.msra.mxu0 0.0
  %724 = vmatprep.subr.mxu0 0.0
  %725 = vmatpush1.msra.mxu0 0.0
  %726 = vmatprep.subr.mxu0 0.0
  %727 = vmatpush1.msra.mxu0 0.0
  %728 = vmatprep.subr.mxu0 0.0
  %729 = vmatpush1.msra.mxu0 0.0
  %730 = vmatprep.subr.mxu0 0.0
  %731 = vmatpush1.msra.mxu0 0.0
  %732 = vmatprep.subr.mxu0 0.0
  %733 = vmatpush1.msra.mxu0 0.0
  %734 = vmatprep.mubr.f32.mxu0 0.0
  %v735 = vand.u32 %v47, 4294901760
  %v736 = vsub.f32 %v47, %v735
  %v737 = vand.u32 %v736, 4294901760
  %738 = vmatmul.mubr.f32.gmra.mrb[0].mxu0 %v737
  %v739 = vpop.f32.mrb[0].mxu0
  %v740 = vadd.f32 %v561, %v739
  %v741 = vpop.f32.mrb[0].mxu0
  %742 = vmatprep.mubr.f32.mxu0 0.0
  %v743 = vand.u32 %v50, 4294901760
  %v744 = vsub.f32 %v50, %v743
  %v745 = vand.u32 %v744, 4294901760
  %746 = vmatmul.mubr.f32.gmra.mrb[0].mxu0 %v745
  %v747 = vpop.f32.mrb[0].mxu0
  %v748 = vadd.f32 %v568, %v747
  %v749 = vpop.f32.mrb[0].mxu0
  %750 = vmatprep.mubr.f32.mxu0 0.0
  %v751 = vand.u32 %v53, 4294901760
  %v752 = vsub.f32 %v53, %v751
  %v753 = vand.u32 %v752, 4294901760
  %754 = vmatmul.mubr.f32.gmra.mrb[0].mxu0 %v753
  %v755 = vpop.f32.mrb[0].mxu0
  %v756 = vadd.f32 %v575, %v755
  %v757 = vpop.f32.mrb[0].mxu0
  %758 = vmatprep.mubr.f32.mxu0 0.0
  %v759 = vand.u32 %v56, 4294901760
  %v760 = vsub.f32 %v56, %v759
  %v761 = vand.u32 %v760, 4294901760
  %762 = vmatmul.mubr.f32.gmra.mrb[0].mxu0 %v761
  %v763 = vpop.f32.mrb[0].mxu0
  %v764 = vadd.f32 %v582, %v763
  %v765 = vpop.f32.mrb[0].mxu0
  %766 = vmatprep.mubr.f32.mxu0 0.0
  %v767 = vand.u32 %v59, 4294901760
  %v768 = vsub.f32 %v59, %v767
  %v769 = vand.u32 %v768, 4294901760
  %770 = vmatmul.mubr.f32.gmra.mrb[0].mxu0 %v769
  %v771 = vpop.f32.mrb[0].mxu0
  %v772 = vadd.f32 %v589, %v771
  %v773 = vpop.f32.mrb[0].mxu0
  %774 = vmatprep.mubr.f32.mxu0 0.0
  %v775 = vand.u32 %v62, 4294901760
  %v776 = vsub.f32 %v62, %v775
  %v777 = vand.u32 %v776, 4294901760
  %778 = vmatmul.mubr.f32.gmra.mrb[0].mxu0 %v777
  %v779 = vpop.f32.mrb[0].mxu0
  %v780 = vadd.f32 %v596, %v779
  %v781 = vpop.f32.mrb[0].mxu0
  %782 = vmatprep.mubr.f32.mxu0 0.0
  %v783 = vand.u32 %v65, 4294901760
  %v784 = vsub.f32 %v65, %v783
  %v785 = vand.u32 %v784, 4294901760
  %786 = vmatmul.mubr.f32.gmra.mrb[0].mxu0 %v785
  %v787 = vpop.f32.mrb[0].mxu0
  %v788 = vadd.f32 %v603, %v787
  %v789 = vpop.f32.mrb[0].mxu0
  %790 = vmatprep.mubr.f32.mxu0 0.0
  %v791 = vand.u32 %v68, 4294901760
  %v792 = vsub.f32 %v68, %v791
  %v793 = vand.u32 %v792, 4294901760
  %794 = vmatmul.mubr.f32.gmra.mrb[0].mxu0 %v793
  %v795 = vpop.f32.mrb[0].mxu0
  %v796 = vadd.f32 %v610, %v795
  %v797 = vpop.f32.mrb[0].mxu0
  %798 = vmatprep.mubr.f32.mxu0 0.0
  %v799 = vand.u32 %v71, 4294901760
  %v800 = vsub.f32 %v71, %v799
  %v801 = vand.u32 %v800, 4294901760
  %802 = vmatmul.mubr.f32.gmra.mrb[0].mxu0 %v801
  %v803 = vpop.f32.mrb[0].mxu0
  %v804 = vadd.f32 %v617, %v803
  %v805 = vpop.f32.mrb[0].mxu0
  %806 = vmatprep.mubr.f32.mxu0 0.0
  %v807 = vand.u32 %v74, 4294901760
  %v808 = vsub.f32 %v74, %v807
  %v809 = vand.u32 %v808, 4294901760
  %810 = vmatmul.mubr.f32.gmra.mrb[0].mxu0 %v809
  %v811 = vpop.f32.mrb[0].mxu0
  %v812 = vadd.f32 %v624, %v811
  %v813 = vpop.f32.mrb[0].mxu0
  %814 = vmatprep.mubr.f32.mxu0 0.0
  %v815 = vand.u32 %v77, 4294901760
  %v816 = vsub.f32 %v77, %v815
  %v817 = vand.u32 %v816, 4294901760
  %818 = vmatmul.mubr.f32.gmra.mrb[0].mxu0 %v817
  %v819 = vpop.f32.mrb[0].mxu0
  %v820 = vadd.f32 %v631, %v819
  %v821 = vpop.f32.mrb[0].mxu0
  %822 = vmatprep.mubr.f32.mxu0 0.0
  %v823 = vand.u32 %v80, 4294901760
  %v824 = vsub.f32 %v80, %v823
  %v825 = vand.u32 %v824, 4294901760
  %826 = vmatmul.mubr.f32.gmra.mrb[0].mxu0 %v825
  %v827 = vpop.f32.mrb[0].mxu0
  %v828 = vadd.f32 %v638, %v827
  %v829 = vpop.f32.mrb[0].mxu0
  %830 = vmatprep.mubr.f32.mxu0 0.0
  %v831 = vand.u32 %v83, 4294901760
  %v832 = vsub.f32 %v83, %v831
  %v833 = vand.u32 %v832, 4294901760
  %834 = vmatmul.mubr.f32.gmra.mrb[0].mxu0 %v833
  %v835 = vpop.f32.mrb[0].mxu0
  %v836 = vadd.f32 %v645, %v835
  %v837 = vpop.f32.mrb[0].mxu0
  %838 = vmatprep.mubr.f32.mxu0 0.0
  %v839 = vand.u32 %v86, 4294901760
  %v840 = vsub.f32 %v86, %v839
  %v841 = vand.u32 %v840, 4294901760
  %842 = vmatmul.mubr.f32.gmra.mrb[0].mxu0 %v841
  %v843 = vpop.f32.mrb[0].mxu0
  %v844 = vadd.f32 %v652, %v843
  %v845 = vpop.f32.mrb[0].mxu0
  %846 = vmatprep.mubr.f32.mxu0 0.0
  %v847 = vand.u32 %v89, 4294901760
  %v848 = vsub.f32 %v89, %v847
  %v849 = vand.u32 %v848, 4294901760
  %850 = vmatmul.mubr.f32.gmra.mrb[0].mxu0 %v849
  %v851 = vpop.f32.mrb[0].mxu0
  %v852 = vadd.f32 %v659, %v851
  %v853 = vpop.f32.mrb[0].mxu0
  %854 = vmatprep.mubr.f32.mxu0 0.0
  %v855 = vand.u32 %v92, 4294901760
  %v856 = vsub.f32 %v92, %v855
  %v857 = vand.u32 %v856, 4294901760
  %858 = vmatmul.mubr.f32.gmra.mrb[0].mxu0 %v857
  %v859 = vpop.f32.mrb[0].mxu0
  %v860 = vadd.f32 %v666, %v859
  %v861 = vpop.f32.mrb[0].mxu0
  %862 = vdwg.mxu0
  %863 = vmatprep.subr.mxu0 0.0
  %v864 = vand.u32 %v96, 4294901760
  %v865 = vsub.f32 %v96, %v864
  %v866 = vand.u32 %v865, 4294901760
  %867 = vmatpush1.msra.mxu0 %v866
  %868 = vmatprep.subr.mxu0 0.0
  %869 = vmatpush1.msra.mxu0 0.0
  %870 = vmatprep.subr.mxu0 0.0
  %871 = vmatpush1.msra.mxu0 0.0
  %872 = vmatprep.subr.mxu0 0.0
  %873 = vmatpush1.msra.mxu0 0.0
  %874 = vmatprep.subr.mxu0 0.0
  %875 = vmatpush1.msra.mxu0 0.0
  %876 = vmatprep.subr.mxu0 0.0
  %877 = vmatpush1.msra.mxu0 0.0
  %878 = vmatprep.subr.mxu0 0.0
  %879 = vmatpush1.msra.mxu0 0.0
  %880 = vmatprep.subr.mxu0 0.0
  %881 = vmatpush1.msra.mxu0 0.0
  %882 = vmatprep.subr.mxu0 0.0
  %883 = vmatpush1.msra.mxu0 0.0
  %884 = vmatprep.subr.mxu0 0.0
  %885 = vmatpush1.msra.mxu0 0.0
  %886 = vmatprep.subr.mxu0 0.0
  %887 = vmatpush1.msra.mxu0 0.0
  %888 = vmatprep.subr.mxu0 0.0
  %889 = vmatpush1.msra.mxu0 0.0
  %890 = vmatprep.subr.mxu0 0.0
  %891 = vmatpush1.msra.mxu0 0.0
  %892 = vmatprep.subr.mxu0 0.0
  %893 = vmatpush1.msra.mxu0 0.0
  %894 = vmatprep.subr.mxu0 0.0
  %895 = vmatpush1.msra.mxu0 0.0
  %896 = vmatprep.subr.mxu0 0.0
  %897 = vmatpush1.msra.mxu0 0.0
  %898 = vmatprep.subr.mxu0 0.0
  %899 = vmatpush1.msra.mxu0 0.0
  %900 = vmatprep.subr.mxu0 0.0
  %901 = vmatpush1.msra.mxu0 0.0
  %902 = vmatprep.subr.mxu0 0.0
  %903 = vmatpush1.msra.mxu0 0.0
  %904 = vmatprep.subr.mxu0 0.0
  %905 = vmatpush1.msra.mxu0 0.0
  %906 = vmatprep.subr.mxu0 0.0
  %907 = vmatpush1.msra.mxu0 0.0
  %908 = vmatprep.subr.mxu0 0.0
  %909 = vmatpush1.msra.mxu0 0.0
  %910 = vmatprep.subr.mxu0 0.0
  %911 = vmatpush1.msra.mxu0 0.0
  %912 = vmatprep.subr.mxu0 0.0
  %913 = vmatpush1.msra.mxu0 0.0
  %914 = vmatprep.subr.mxu0 0.0
  %915 = vmatpush1.msra.mxu0 0.0
  %916 = vmatprep.subr.mxu0 0.0
  %917 = vmatpush1.msra.mxu0 0.0
  %918 = vmatprep.subr.mxu0 0.0
  %919 = vmatpush1.msra.mxu0 0.0
  %920 = vmatprep.subr.mxu0 0.0
  %921 = vmatpush1.msra.mxu0 0.0
  %922 = vmatprep.subr.mxu0 0.0
  %923 = vmatpush1.msra.mxu0 0.0
  %924 = vmatprep.subr.mxu0 0.0
  %925 = vmatpush1.msra.mxu0 0.0
  %926 = vmatprep.subr.mxu0 0.0
  %927 = vmatpush1.msra.mxu0 0.0
  %928 = vmatprep.subr.mxu0 0.0
  %929 = vmatpush1.msra.mxu0 0.0
  %930 = vmatprep.mubr.f32.mxu0 0.0
  %v931 = vand.u32 %v47, 4294901760
  %932 = vmatmul.mubr.f32.gmra.mrb[0].mxu0 %v931
  %v933 = vpop.f32.mrb[0].mxu0
  %v934 = vadd.f32 %v740, %v933
  %v935 = vpop.f32.mrb[0].mxu0
  %936 = vmatprep.mubr.f32.mxu0 0.0
  %v937 = vand.u32 %v50, 4294901760
  %938 = vmatmul.mubr.f32.gmra.mrb[0].mxu0 %v937
  %v939 = vpop.f32.mrb[0].mxu0
  %v940 = vadd.f32 %v748, %v939
  %v941 = vpop.f32.mrb[0].mxu0
  %942 = vmatprep.mubr.f32.mxu0 0.0
  %v943 = vand.u32 %v53, 4294901760
  %944 = vmatmul.mubr.f32.gmra.mrb[0].mxu0 %v943
  %v945 = vpop.f32.mrb[0].mxu0
  %v946 = vadd.f32 %v756, %v945
  %v947 = vpop.f32.mrb[0].mxu0
  %948 = vmatprep.mubr.f32.mxu0 0.0
  %v949 = vand.u32 %v56, 4294901760
  %950 = vmatmul.mubr.f32.gmra.mrb[0].mxu0 %v949
  %v951 = vpop.f32.mrb[0].mxu0
  %v952 = vadd.f32 %v764, %v951
  %v953 = vpop.f32.mrb[0].mxu0
  %954 = vmatprep.mubr.f32.mxu0 0.0
  %v955 = vand.u32 %v59, 4294901760
  %956 = vmatmul.mubr.f32.gmra.mrb[0].mxu0 %v955
  %v957 = vpop.f32.mrb[0].mxu0
  %v958 = vadd.f32 %v772, %v957
  %v959 = vpop.f32.mrb[0].mxu0
  %960 = vmatprep.mubr.f32.mxu0 0.0
  %v961 = vand.u32 %v62, 4294901760
  %962 = vmatmul.mubr.f32.gmra.mrb[0].mxu0 %v961
  %v963 = vpop.f32.mrb[0].mxu0
  %v964 = vadd.f32 %v780, %v963
  %v965 = vpop.f32.mrb[0].mxu0
  %966 = vmatprep.mubr.f32.mxu0 0.0
  %v967 = vand.u32 %v65, 4294901760
  %968 = vmatmul.mubr.f32.gmra.mrb[0].mxu0 %v967
  %v969 = vpop.f32.mrb[0].mxu0
  %v970 = vadd.f32 %v788, %v969
  %v971 = vpop.f32.mrb[0].mxu0
  %972 = vmatprep.mubr.f32.mxu0 0.0
  %v973 = vand.u32 %v68, 4294901760
  %974 = vmatmul.mubr.f32.gmra.mrb[0].mxu0 %v973
  %v975 = vpop.f32.mrb[0].mxu0
  %v976 = vadd.f32 %v796, %v975
  %v977 = vpop.f32.mrb[0].mxu0
  %978 = vmatprep.mubr.f32.mxu0 0.0
  %v979 = vand.u32 %v71, 4294901760
  %980 = vmatmul.mubr.f32.gmra.mrb[0].mxu0 %v979
  %v981 = vpop.f32.mrb[0].mxu0
  %v982 = vadd.f32 %v804, %v981
  %v983 = vpop.f32.mrb[0].mxu0
  %984 = vmatprep.mubr.f32.mxu0 0.0
  %v985 = vand.u32 %v74, 4294901760
  %986 = vmatmul.mubr.f32.gmra.mrb[0].mxu0 %v985
  %v987 = vpop.f32.mrb[0].mxu0
  %v988 = vadd.f32 %v812, %v987
  %v989 = vpop.f32.mrb[0].mxu0
  %990 = vmatprep.mubr.f32.mxu0 0.0
  %v991 = vand.u32 %v77, 4294901760
  %992 = vmatmul.mubr.f32.gmra.mrb[0].mxu0 %v991
  %v993 = vpop.f32.mrb[0].mxu0
  %v994 = vadd.f32 %v820, %v993
  %v995 = vpop.f32.mrb[0].mxu0
  %996 = vmatprep.mubr.f32.mxu0 0.0
  %v997 = vand.u32 %v80, 4294901760
  %998 = vmatmul.mubr.f32.gmra.mrb[0].mxu0 %v997
  %v999 = vpop.f32.mrb[0].mxu0
  %v1000 = vadd.f32 %v828, %v999
  %v1001 = vpop.f32.mrb[0].mxu0
  %1002 = vmatprep.mubr.f32.mxu0 0.0
  %v1003 = vand.u32 %v83, 4294901760
  %1004 = vmatmul.mubr.f32.gmra.mrb[0].mxu0 %v1003
  %v1005 = vpop.f32.mrb[0].mxu0
  %v1006 = vadd.f32 %v836, %v1005
  %v1007 = vpop.f32.mrb[0].mxu0
  %1008 = vmatprep.mubr.f32.mxu0 0.0
  %v1009 = vand.u32 %v86, 4294901760
  %1010 = vmatmul.mubr.f32.gmra.mrb[0].mxu0 %v1009
  %v1011 = vpop.f32.mrb[0].mxu0
  %v1012 = vadd.f32 %v844, %v1011
  %v1013 = vpop.f32.mrb[0].mxu0
  %1014 = vmatprep.mubr.f32.mxu0 0.0
  %v1015 = vand.u32 %v89, 4294901760
  %1016 = vmatmul.mubr.f32.gmra.mrb[0].mxu0 %v1015
  %v1017 = vpop.f32.mrb[0].mxu0
  %v1018 = vadd.f32 %v852, %v1017
  %v1019 = vpop.f32.mrb[0].mxu0
  %1020 = vmatprep.mubr.f32.mxu0 0.0
  %v1021 = vand.u32 %v92, 4294901760
  %1022 = vmatmul.mubr.f32.gmra.mrb[0].mxu0 %v1021
  %v1023 = vpop.f32.mrb[0].mxu0
  %v1024 = vadd.f32 %v860, %v1023
  %v1025 = vpop.f32.mrb[0].mxu0
  %1026 = vdwg.mxu0
  %1027 = vmatprep.subr.mxu0 0.0
  %v1028 = vand.u32 %v96, 4294901760
  %1029 = vmatpush1.msra.mxu0 %v1028
  %1030 = vmatprep.subr.mxu0 0.0
  %1031 = vmatpush1.msra.mxu0 0.0
  %1032 = vmatprep.subr.mxu0 0.0
  %1033 = vmatpush1.msra.mxu0 0.0
  %1034 = vmatprep.subr.mxu0 0.0
  %1035 = vmatpush1.msra.mxu0 0.0
  %1036 = vmatprep.subr.mxu0 0.0
  %1037 = vmatpush1.msra.mxu0 0.0
  %1038 = vmatprep.subr.mxu0 0.0
  %1039 = vmatpush1.msra.mxu0 0.0
  %1040 = vmatprep.subr.mxu0 0.0
  %1041 = vmatpush1.msra.mxu0 0.0
  %1042 = vmatprep.subr.mxu0 0.0
  %1043 = vmatpush1.msra.mxu0 0.0
  %1044 = vmatprep.subr.mxu0 0.0
  %1045 = vmatpush1.msra.mxu0 0.0
  %1046 = vmatprep.subr.mxu0 0.0
  %1047 = vmatpush1.msra.mxu0 0.0
  %1048 = vmatprep.subr.mxu0 0.0
  %1049 = vmatpush1.msra.mxu0 0.0
  %1050 = vmatprep.subr.mxu0 0.0
  %1051 = vmatpush1.msra.mxu0 0.0
  %1052 = vmatprep.subr.mxu0 0.0
  %1053 = vmatpush1.msra.mxu0 0.0
  %1054 = vmatprep.subr.mxu0 0.0
  %1055 = vmatpush1.msra.mxu0 0.0
  %1056 = vmatprep.subr.mxu0 0.0
  %1057 = vmatpush1.msra.mxu0 0.0
  %1058 = vmatprep.subr.mxu0 0.0
  %1059 = vmatpush1.msra.mxu0 0.0
  %1060 = vmatprep.subr.mxu0 0.0
  %1061 = vmatpush1.msra.mxu0 0.0
  %1062 = vmatprep.subr.mxu0 0.0
  %1063 = vmatpush1.msra.mxu0 0.0
  %1064 = vmatprep.subr.mxu0 0.0
  %1065 = vmatpush1.msra.mxu0 0.0
  %1066 = vmatprep.subr.mxu0 0.0
  %1067 = vmatpush1.msra.mxu0 0.0
  %1068 = vmatprep.subr.mxu0 0.0
  %1069 = vmatpush1.msra.mxu0 0.0
  %1070 = vmatprep.subr.mxu0 0.0
  %1071 = vmatpush1.msra.mxu0 0.0
  %1072 = vmatprep.subr.mxu0 0.0
  %1073 = vmatpush1.msra.mxu0 0.0
  %1074 = vmatprep.subr.mxu0 0.0
  %1075 = vmatpush1.msra.mxu0 0.0
  %1076 = vmatprep.subr.mxu0 0.0
  %1077 = vmatpush1.msra.mxu0 0.0
  %1078 = vmatprep.subr.mxu0 0.0
  %1079 = vmatpush1.msra.mxu0 0.0
  %1080 = vmatprep.subr.mxu0 0.0
  %1081 = vmatpush1.msra.mxu0 0.0
  %1082 = vmatprep.subr.mxu0 0.0
  %1083 = vmatpush1.msra.mxu0 0.0
  %1084 = vmatprep.subr.mxu0 0.0
  %1085 = vmatpush1.msra.mxu0 0.0
  %1086 = vmatprep.subr.mxu0 0.0
  %1087 = vmatpush1.msra.mxu0 0.0
  %1088 = vmatprep.subr.mxu0 0.0
  %1089 = vmatpush1.msra.mxu0 0.0
  %1090 = vmatprep.subr.mxu0 0.0
  %1091 = vmatpush1.msra.mxu0 0.0
  %1092 = vmatprep.mubr.f32.mxu0 0.0
  %v1093 = vand.u32 %v47, 4294901760
  %1094 = vmatmul.mubr.f32.gmra.mrb[0].mxu0 %v1093
  %v1095 = vpop.f32.mrb[0].mxu0
  %v1096 = vadd.f32 %v934, %v1095
  %v1097 = vpop.f32.mrb[0].mxu0
  %1098 = vmatprep.mubr.f32.mxu0 0.0
  %v1099 = vand.u32 %v50, 4294901760
  %1100 = vmatmul.mubr.f32.gmra.mrb[0].mxu0 %v1099
  %v1101 = vpop.f32.mrb[0].mxu0
  %v1102 = vadd.f32 %v940, %v1101
  %v1103 = vpop.f32.mrb[0].mxu0
  %1104 = vmatprep.mubr.f32.mxu0 0.0
  %v1105 = vand.u32 %v53, 4294901760
  %1106 = vmatmul.mubr.f32.gmra.mrb[0].mxu0 %v1105
  %v1107 = vpop.f32.mrb[0].mxu0
  %v1108 = vadd.f32 %v946, %v1107
  %v1109 = vpop.f32.mrb[0].mxu0
  %1110 = vmatprep.mubr.f32.mxu0 0.0
  %v1111 = vand.u32 %v56, 4294901760
  %1112 = vmatmul.mubr.f32.gmra.mrb[0].mxu0 %v1111
  %v1113 = vpop.f32.mrb[0].mxu0
  %v1114 = vadd.f32 %v952, %v1113
  %v1115 = vpop.f32.mrb[0].mxu0
  %1116 = vmatprep.mubr.f32.mxu0 0.0
  %v1117 = vand.u32 %v59, 4294901760
  %1118 = vmatmul.mubr.f32.gmra.mrb[0].mxu0 %v1117
  %v1119 = vpop.f32.mrb[0].mxu0
  %v1120 = vadd.f32 %v958, %v1119
  %v1121 = vpop.f32.mrb[0].mxu0
  %1122 = vmatprep.mubr.f32.mxu0 0.0
  %v1123 = vand.u32 %v62, 4294901760
  %1124 = vmatmul.mubr.f32.gmra.mrb[0].mxu0 %v1123
  %v1125 = vpop.f32.mrb[0].mxu0
  %v1126 = vadd.f32 %v964, %v1125
  %v1127 = vpop.f32.mrb[0].mxu0
  %1128 = vmatprep.mubr.f32.mxu0 0.0
  %v1129 = vand.u32 %v65, 4294901760
  %1130 = vmatmul.mubr.f32.gmra.mrb[0].mxu0 %v1129
  %v1131 = vpop.f32.mrb[0].mxu0
  %v1132 = vadd.f32 %v970, %v1131
  %v1133 = vpop.f32.mrb[0].mxu0
  %1134 = vmatprep.mubr.f32.mxu0 0.0
  %v1135 = vand.u32 %v68, 4294901760
  %1136 = vmatmul.mubr.f32.gmra.mrb[0].mxu0 %v1135
  %v1137 = vpop.f32.mrb[0].mxu0
  %v1138 = vadd.f32 %v976, %v1137
  %v1139 = vpop.f32.mrb[0].mxu0
  %1140 = vmatprep.mubr.f32.mxu0 0.0
  %v1141 = vand.u32 %v71, 4294901760
  %1142 = vmatmul.mubr.f32.gmra.mrb[0].mxu0 %v1141
  %v1143 = vpop.f32.mrb[0].mxu0
  %v1144 = vadd.f32 %v982, %v1143
  %v1145 = vpop.f32.mrb[0].mxu0
  %1146 = vmatprep.mubr.f32.mxu0 0.0
  %v1147 = vand.u32 %v74, 4294901760
  %1148 = vmatmul.mubr.f32.gmra.mrb[0].mxu0 %v1147
  %v1149 = vpop.f32.mrb[0].mxu0
  %v1150 = vadd.f32 %v988, %v1149
  %v1151 = vpop.f32.mrb[0].mxu0
  %1152 = vmatprep.mubr.f32.mxu0 0.0
  %v1153 = vand.u32 %v77, 4294901760
  %1154 = vmatmul.mubr.f32.gmra.mrb[0].mxu0 %v1153
  %v1155 = vpop.f32.mrb[0].mxu0
  %v1156 = vadd.f32 %v994, %v1155
  %v1157 = vpop.f32.mrb[0].mxu0
  %1158 = vmatprep.mubr.f32.mxu0 0.0
  %v1159 = vand.u32 %v80, 4294901760
  %1160 = vmatmul.mubr.f32.gmra.mrb[0].mxu0 %v1159
  %v1161 = vpop.f32.mrb[0].mxu0
  %v1162 = vadd.f32 %v1000, %v1161
  %v1163 = vpop.f32.mrb[0].mxu0
  %1164 = vmatprep.mubr.f32.mxu0 0.0
  %v1165 = vand.u32 %v83, 4294901760
  %1166 = vmatmul.mubr.f32.gmra.mrb[0].mxu0 %v1165
  %v1167 = vpop.f32.mrb[0].mxu0
  %v1168 = vadd.f32 %v1006, %v1167
  %v1169 = vpop.f32.mrb[0].mxu0
  %1170 = vmatprep.mubr.f32.mxu0 0.0
  %v1171 = vand.u32 %v86, 4294901760
  %1172 = vmatmul.mubr.f32.gmra.mrb[0].mxu0 %v1171
  %v1173 = vpop.f32.mrb[0].mxu0
  %v1174 = vadd.f32 %v1012, %v1173
  %v1175 = vpop.f32.mrb[0].mxu0
  %1176 = vmatprep.mubr.f32.mxu0 0.0
  %v1177 = vand.u32 %v89, 4294901760
  %1178 = vmatmul.mubr.f32.gmra.mrb[0].mxu0 %v1177
  %v1179 = vpop.f32.mrb[0].mxu0
  %v1180 = vadd.f32 %v1018, %v1179
  %v1181 = vpop.f32.mrb[0].mxu0
  %1182 = vmatprep.mubr.f32.mxu0 0.0
  %v1183 = vand.u32 %v92, 4294901760
  %1184 = vmatmul.mubr.f32.gmra.mrb[0].mxu0 %v1183
  %v1185 = vpop.f32.mrb[0].mxu0
  %v1186 = vadd.f32 %v1024, %v1185
  %v1187 = vpop.f32.mrb[0].mxu0
  %1188 = vdwg.mxu0
  %v1189 = vlaneseq
  %v1190 = vand.u32 %v1189, 127
  %vm1191 = vcmp.lt.s32.totalorder %v1190, 0
  %v1192 = vsub.s32 0, %v1190
  %v1193 = vsel %vm1191, %v1192, %v1190
  %v1194 = vshrl.u32 %v1193, 1
  %v1195 = vand.u32 %v1193, 1
  %v1196 = vsub.s32 0, %v1195
  %v1197 = vsel %vm1191, %v1196, %v1195
  %vm1198 = vcmp.ne.s32.totalorder %v1197, 0
  %vm1199 = vcmp.lt.s32.totalorder %v1197, 0
  %vm1200 = vmand %vm1199, %vm1198
  %v1201 = vadd.s32 %v1197, 2
  %v1202 = vsel %vm1200, %v1201, %v1197
  %vm1203 = vcmp.eq.s32.totalorder %v1202, 0
  %v1204 = vand.u32 2147483647, %v1096
  %vm1205 = vcmp.le.f32.partialorder %v1204, 0.7853982
  %vm1206 = vcmp.lt.s32.totalorder %v1096, 0
  %v1207 = vand.u32 %v1096, 2139095040
  %v1208 = vshrl.u32 %v1207, 23
  %v1209 = vsub.s32 %v1208, 127
  %v1210 = vand.u32 2147483647, %v1096
  %v1211 = vand.u32 %v1210, 8388607
  %v1212 = vor.u32 %v1211, 8388608
  %v1213 = vsub.s32 0, %v1212
  %v1214 = vadd.s32 %v1209, 1
  %vm1215 = vcmp.gt.s32.totalorder %v1214, 0
  %v1216 = vsel %vm1215, %v1214, 0
  %v1217 = vshrl.u32 %v1216, 5
  %v1218 = vand.u32 %v1216, 31
  %v1219 = vsub.s32 32, %v1218
  %v1220 = vshrl.u32 683565275, %v1219
  %v1221 = vshll.u32 683565275, %v1218
  %v1222 = vshrl.u32 2475754826, %v1219
  %v1223 = vor.u32 %v1221, %v1222
  %v1224 = vshll.u32 2475754826, %v1218
  %v1225 = vshrl.u32 2131351028, %v1219
  %v1226 = vor.u32 %v1224, %v1225
  %v1227 = vshll.u32 2131351028, %v1218
  %v1228 = vshrl.u32 2102212464, %v1219
  %v1229 = vor.u32 %v1227, %v1228
  %v1230 = vshll.u32 2102212464, %v1218
  %v1231 = vshrl.u32 920167782, %v1219
  %v1232 = vor.u32 %v1230, %v1231
  %v1233 = vshll.u32 920167782, %v1218
  %v1234 = vshrl.u32 1326507024, %v1219
  %v1235 = vor.u32 %v1233, %v1234
  %vm1236 = vcmp.lt.s32.totalorder %v1217, 1
  %vm1237 = vcmp.lt.s32.totalorder %v1217, 2
  %vm1238 = vcmp.lt.s32.totalorder %v1217, 3
  %vm1239 = vcmp.lt.s32.totalorder %v1217, 4
  %v1240 = vsel %vm1236, %v1220, %v1223
  %v1241 = vsel %vm1239, %v1229, 2102212464
  %v1242 = vsel %vm1238, %v1226, %v1241
  %v1243 = vsel %vm1237, %v1240, %v1242
  %v1244 = vsel %vm1236, %v1223, %v1226
  %v1245 = vsel %vm1239, %v1232, 920167782
  %v1246 = vsel %vm1238, %v1229, %v1245
  %v1247 = vsel %vm1237, %v1244, %v1246
  %v1248 = vsel %vm1236, %v1226, %v1229
  %v1249 = vsel %vm1239, %v1235, 1326507024
  %v1250 = vsel %vm1238, %v1232, %v1249
  %v1251 = vsel %vm1237, %v1248, %v1250
  %v1252 = vshll.u32 %v1212, 8
  %v1253 = vmul.u32.u64.compose %v1252, %v1251
  %v1254 = vextract.low.u32 %v1253
  %v1255 = vextract.high.u32 %v1253
  %v1256 = vmul.u32.u64.compose %v1252, %v1247
  %v1257 = vextract.low.u32 %v1256
  %v1258 = vextract.high.u32 %v1256
  %v1259 = vmul.u32 %v1252, %v1243
  %v1260 = vadd.s32 %v1255, %v1257
  %vm1261 = vc.u32 %v1255, %v1257
  %v1262 = vadd.s32 %v1258, 1
  %v1263 = vsel %vm1261, %v1262, %v1258
  %v1264 = vadd.s32 %v1259, %v1263
  %v1265 = vadd.s32 %v1264, 536870912
  %v1266 = vshrl.u32 %v1265, 30
  %v1267 = vshll.u32 %v1266, 30
  %v1268 = vsub.s32 %v1264, %v1267
  %vm1269 = vcmp.lt.s32.totalorder %v1268, 0
  %v1270 = vsub.s32 0, %v1268
  %v1271 = vsel %vm1269, %v1270, %v1268
  %v1272 = vclz %v1271
  %v1273 = vsub.s32 %v1272, 2
  %vm1274 = vcmp.gt.s32.totalorder 0, %v1273
  %v1275 = vsel %vm1274, 0, %v1273
  %v1276 = vsub.s32 32, %v1275
  %v1277 = vshll.u32 %v1268, %v1275
  %v1278 = vshrl.u32 %v1260, %v1276
  %v1279 = vor.u32 %v1277, %v1278
  %v1280 = vsub.s32 4294967266, %v1275
  %v1281 = vadd.s32 %v1280, 127
  %v1282 = vshll.u32 %v1281, 23
  %v1283 = vor.u32 4788187, %v1282
  %v1284 = vand.u32 2147483647, %v1283
  %v1286 = vcvt.s32.f32 %v1279
  %v1287 = vmul.f32 %v1286, %v1284
  %v1288 = vxor.u32 %v1287, 2147483648
  %v1289 = vsel %vm1206, %v1288, %v1287
  %v1290 = vsub.s32 4, %v1266
  %v1291 = vsel %vm1206, %v1290, %v1266
  %v1292 = vsel %vm1205, %v1096, %v1289
  %v1293 = vsel %vm1205, 0, %v1291
  %v1294 = vcosq.f32.pop %v1292
  %v1295 = vsinq.f32.pop %v1292
  %vm1296 = vweird.f32 %v1096
  %v1297 = vand.u32 %v1293, 3
  %vm1298 = vcmp.lt.s32.totalorder %v1297, 2
  %vm1299 = vcmp.eq.s32.totalorder %v1297, 0
  %v1300 = vxor.u32 %v1295, 2147483648
  %v1301 = vsel %vm1299, %v1294, %v1300
  %vm1302 = vcmp.eq.s32.totalorder %v1297, 2
  %v1303 = vxor.u32 %v1294, 2147483648
  %v1304 = vsel %vm1302, %v1303, %v1295
  %v1305 = vsel %vm1298, %v1301, %v1304
  %v1306 = vsel %vm1296, nan, %v1305
  %v1307 = vand.u32 2147483647, %v1102
  %vm1308 = vcmp.le.f32.partialorder %v1307, 0.7853982
  %vm1309 = vcmp.lt.s32.totalorder %v1102, 0
  %v1310 = vand.u32 %v1102, 2139095040
  %v1311 = vshrl.u32 %v1310, 23
  %v1312 = vsub.s32 %v1311, 127
  %v1313 = vand.u32 2147483647, %v1102
  %v1314 = vand.u32 %v1313, 8388607
  %v1315 = vor.u32 %v1314, 8388608
  %v1316 = vsub.s32 0, %v1315
  %v1317 = vadd.s32 %v1312, 1
  %vm1318 = vcmp.gt.s32.totalorder %v1317, 0
  %v1319 = vsel %vm1318, %v1317, 0
  %v1320 = vshrl.u32 %v1319, 5
  %v1321 = vand.u32 %v1319, 31
  %v1322 = vsub.s32 32, %v1321
  %v1323 = vshrl.u32 683565275, %v1322
  %v1324 = vshll.u32 683565275, %v1321
  %v1325 = vshrl.u32 2475754826, %v1322
  %v1326 = vor.u32 %v1324, %v1325
  %v1327 = vshll.u32 2475754826, %v1321
  %v1328 = vshrl.u32 2131351028, %v1322
  %v1329 = vor.u32 %v1327, %v1328
  %v1330 = vshll.u32 2131351028, %v1321
  %v1331 = vshrl.u32 2102212464, %v1322
  %v1332 = vor.u32 %v1330, %v1331
  %v1333 = vshll.u32 2102212464, %v1321
  %v1334 = vshrl.u32 920167782, %v1322
  %v1335 = vor.u32 %v1333, %v1334
  %v1336 = vshll.u32 920167782, %v1321
  %v1337 = vshrl.u32 1326507024, %v1322
  %v1338 = vor.u32 %v1336, %v1337
  %vm1339 = vcmp.lt.s32.totalorder %v1320, 1
  %vm1340 = vcmp.lt.s32.totalorder %v1320, 2
  %vm1341 = vcmp.lt.s32.totalorder %v1320, 3
  %vm1342 = vcmp.lt.s32.totalorder %v1320, 4
  %v1343 = vsel %vm1339, %v1323, %v1326
  %v1344 = vsel %vm1342, %v1332, 2102212464
  %v1345 = vsel %vm1341, %v1329, %v1344
  %v1346 = vsel %vm1340, %v1343, %v1345
  %v1347 = vsel %vm1339, %v1326, %v1329
  %v1348 = vsel %vm1342, %v1335, 920167782
  %v1349 = vsel %vm1341, %v1332, %v1348
  %v1350 = vsel %vm1340, %v1347, %v1349
  %v1351 = vsel %vm1339, %v1329, %v1332
  %v1352 = vsel %vm1342, %v1338, 1326507024
  %v1353 = vsel %vm1341, %v1335, %v1352
  %v1354 = vsel %vm1340, %v1351, %v1353
  %v1355 = vshll.u32 %v1315, 8
  %v1356 = vmul.u32.u64.compose %v1355, %v1354
  %v1357 = vextract.low.u32 %v1356
  %v1358 = vextract.high.u32 %v1356
  %v1359 = vmul.u32.u64.compose %v1355, %v1350
  %v1360 = vextract.low.u32 %v1359
  %v1361 = vextract.high.u32 %v1359
  %v1362 = vmul.u32 %v1355, %v1346
  %v1363 = vadd.s32 %v1358, %v1360
  %vm1364 = vc.u32 %v1358, %v1360
  %v1365 = vadd.s32 %v1361, 1
  %v1366 = vsel %vm1364, %v1365, %v1361
  %v1367 = vadd.s32 %v1362, %v1366
  %v1368 = vadd.s32 %v1367, 536870912
  %v1369 = vshrl.u32 %v1368, 30
  %v1370 = vshll.u32 %v1369, 30
  %v1371 = vsub.s32 %v1367, %v1370
  %vm1372 = vcmp.lt.s32.totalorder %v1371, 0
  %v1373 = vsub.s32 0, %v1371
  %v1374 = vsel %vm1372, %v1373, %v1371
  %v1375 = vclz %v1374
  %v1376 = vsub.s32 %v1375, 2
  %vm1377 = vcmp.gt.s32.totalorder 0, %v1376
  %v1378 = vsel %vm1377, 0, %v1376
  %v1379 = vsub.s32 32, %v1378
  %v1380 = vshll.u32 %v1371, %v1378
  %v1381 = vshrl.u32 %v1363, %v1379
  %v1382 = vor.u32 %v1380, %v1381
  %v1383 = vsub.s32 4294967266, %v1378
  %v1384 = vadd.s32 %v1383, 127
  %v1385 = vshll.u32 %v1384, 23
  %v1386 = vor.u32 4788187, %v1385
  %v1387 = vand.u32 2147483647, %v1386
  %v1389 = vcvt.s32.f32 %v1382
  %v1390 = vmul.f32 %v1389, %v1387
  %v1391 = vxor.u32 %v1390, 2147483648
  %v1392 = vsel %vm1309, %v1391, %v1390
  %v1393 = vsub.s32 4, %v1369
  %v1394 = vsel %vm1309, %v1393, %v1369
  %v1395 = vsel %vm1308, %v1102, %v1392
  %v1396 = vsel %vm1308, 0, %v1394
  %v1397 = vcosq.f32.pop %v1395
  %v1398 = vsinq.f32.pop %v1395
  %vm1399 = vweird.f32 %v1102
  %v1400 = vand.u32 %v1396, 3
  %vm1401 = vcmp.lt.s32.totalorder %v1400, 2
  %vm1402 = vcmp.eq.s32.totalorder %v1400, 0
  %v1403 = vxor.u32 %v1398, 2147483648
  %v1404 = vsel %vm1402, %v1397, %v1403
  %vm1405 = vcmp.eq.s32.totalorder %v1400, 2
  %v1406 = vxor.u32 %v1397, 2147483648
  %v1407 = vsel %vm1405, %v1406, %v1398
  %v1408 = vsel %vm1401, %v1404, %v1407
  %v1409 = vsel %vm1399, nan, %v1408
  %v1410 = vand.u32 2147483647, %v1108
  %vm1411 = vcmp.le.f32.partialorder %v1410, 0.7853982
  %vm1412 = vcmp.lt.s32.totalorder %v1108, 0
  %v1413 = vand.u32 %v1108, 2139095040
  %v1414 = vshrl.u32 %v1413, 23
  %v1415 = vsub.s32 %v1414, 127
  %v1416 = vand.u32 2147483647, %v1108
  %v1417 = vand.u32 %v1416, 8388607
  %v1418 = vor.u32 %v1417, 8388608
  %v1419 = vsub.s32 0, %v1418
  %v1420 = vadd.s32 %v1415, 1
  %vm1421 = vcmp.gt.s32.totalorder %v1420, 0
  %v1422 = vsel %vm1421, %v1420, 0
  %v1423 = vshrl.u32 %v1422, 5
  %v1424 = vand.u32 %v1422, 31
  %v1425 = vsub.s32 32, %v1424
  %v1426 = vshrl.u32 683565275, %v1425
  %v1427 = vshll.u32 683565275, %v1424
  %v1428 = vshrl.u32 2475754826, %v1425
  %v1429 = vor.u32 %v1427, %v1428
  %v1430 = vshll.u32 2475754826, %v1424
  %v1431 = vshrl.u32 2131351028, %v1425
  %v1432 = vor.u32 %v1430, %v1431
  %v1433 = vshll.u32 2131351028, %v1424
  %v1434 = vshrl.u32 2102212464, %v1425
  %v1435 = vor.u32 %v1433, %v1434
  %v1436 = vshll.u32 2102212464, %v1424
  %v1437 = vshrl.u32 920167782, %v1425
  %v1438 = vor.u32 %v1436, %v1437
  %v1439 = vshll.u32 920167782, %v1424
  %v1440 = vshrl.u32 1326507024, %v1425
  %v1441 = vor.u32 %v1439, %v1440
  %vm1442 = vcmp.lt.s32.totalorder %v1423, 1
  %vm1443 = vcmp.lt.s32.totalorder %v1423, 2
  %vm1444 = vcmp.lt.s32.totalorder %v1423, 3
  %vm1445 = vcmp.lt.s32.totalorder %v1423, 4
  %v1446 = vsel %vm1442, %v1426, %v1429
  %v1447 = vsel %vm1445, %v1435, 2102212464
  %v1448 = vsel %vm1444, %v1432, %v1447
  %v1449 = vsel %vm1443, %v1446, %v1448
  %v1450 = vsel %vm1442, %v1429, %v1432
  %v1451 = vsel %vm1445, %v1438, 920167782
  %v1452 = vsel %vm1444, %v1435, %v1451
  %v1453 = vsel %vm1443, %v1450, %v1452
  %v1454 = vsel %vm1442, %v1432, %v1435
  %v1455 = vsel %vm1445, %v1441, 1326507024
  %v1456 = vsel %vm1444, %v1438, %v1455
  %v1457 = vsel %vm1443, %v1454, %v1456
  %v1458 = vshll.u32 %v1418, 8
  %v1459 = vmul.u32.u64.compose %v1458, %v1457
  %v1460 = vextract.low.u32 %v1459
  %v1461 = vextract.high.u32 %v1459
  %v1462 = vmul.u32.u64.compose %v1458, %v1453
  %v1463 = vextract.low.u32 %v1462
  %v1464 = vextract.high.u32 %v1462
  %v1465 = vmul.u32 %v1458, %v1449
  %v1466 = vadd.s32 %v1461, %v1463
  %vm1467 = vc.u32 %v1461, %v1463
  %v1468 = vadd.s32 %v1464, 1
  %v1469 = vsel %vm1467, %v1468, %v1464
  %v1470 = vadd.s32 %v1465, %v1469
  %v1471 = vadd.s32 %v1470, 536870912
  %v1472 = vshrl.u32 %v1471, 30
  %v1473 = vshll.u32 %v1472, 30
  %v1474 = vsub.s32 %v1470, %v1473
  %vm1475 = vcmp.lt.s32.totalorder %v1474, 0
  %v1476 = vsub.s32 0, %v1474
  %v1477 = vsel %vm1475, %v1476, %v1474
  %v1478 = vclz %v1477
  %v1479 = vsub.s32 %v1478, 2
  %vm1480 = vcmp.gt.s32.totalorder 0, %v1479
  %v1481 = vsel %vm1480, 0, %v1479
  %v1482 = vsub.s32 32, %v1481
  %v1483 = vshll.u32 %v1474, %v1481
  %v1484 = vshrl.u32 %v1466, %v1482
  %v1485 = vor.u32 %v1483, %v1484
  %v1486 = vsub.s32 4294967266, %v1481
  %v1487 = vadd.s32 %v1486, 127
  %v1488 = vshll.u32 %v1487, 23
  %v1489 = vor.u32 4788187, %v1488
  %v1490 = vand.u32 2147483647, %v1489
  %v1492 = vcvt.s32.f32 %v1485
  %v1493 = vmul.f32 %v1492, %v1490
  %v1494 = vxor.u32 %v1493, 2147483648
  %v1495 = vsel %vm1412, %v1494, %v1493
  %v1496 = vsub.s32 4, %v1472
  %v1497 = vsel %vm1412, %v1496, %v1472
  %v1498 = vsel %vm1411, %v1108, %v1495
  %v1499 = vsel %vm1411, 0, %v1497
  %v1500 = vcosq.f32.pop %v1498
  %v1501 = vsinq.f32.pop %v1498
  %vm1502 = vweird.f32 %v1108
  %v1503 = vand.u32 %v1499, 3
  %vm1504 = vcmp.lt.s32.totalorder %v1503, 2
  %vm1505 = vcmp.eq.s32.totalorder %v1503, 0
  %v1506 = vxor.u32 %v1501, 2147483648
  %v1507 = vsel %vm1505, %v1500, %v1506
  %vm1508 = vcmp.eq.s32.totalorder %v1503, 2
  %v1509 = vxor.u32 %v1500, 2147483648
  %v1510 = vsel %vm1508, %v1509, %v1501
  %v1511 = vsel %vm1504, %v1507, %v1510
  %v1512 = vsel %vm1502, nan, %v1511
  %v1513 = vand.u32 2147483647, %v1114
  %vm1514 = vcmp.le.f32.partialorder %v1513, 0.7853982
  %vm1515 = vcmp.lt.s32.totalorder %v1114, 0
  %v1516 = vand.u32 %v1114, 2139095040
  %v1517 = vshrl.u32 %v1516, 23
  %v1518 = vsub.s32 %v1517, 127
  %v1519 = vand.u32 2147483647, %v1114
  %v1520 = vand.u32 %v1519, 8388607
  %v1521 = vor.u32 %v1520, 8388608
  %v1522 = vsub.s32 0, %v1521
  %v1523 = vadd.s32 %v1518, 1
  %vm1524 = vcmp.gt.s32.totalorder %v1523, 0
  %v1525 = vsel %vm1524, %v1523, 0
  %v1526 = vshrl.u32 %v1525, 5
  %v1527 = vand.u32 %v1525, 31
  %v1528 = vsub.s32 32, %v1527
  %v1529 = vshrl.u32 683565275, %v1528
  %v1530 = vshll.u32 683565275, %v1527
  %v1531 = vshrl.u32 2475754826, %v1528
  %v1532 = vor.u32 %v1530, %v1531
  %v1533 = vshll.u32 2475754826, %v1527
  %v1534 = vshrl.u32 2131351028, %v1528
  %v1535 = vor.u32 %v1533, %v1534
  %v1536 = vshll.u32 2131351028, %v1527
  %v1537 = vshrl.u32 2102212464, %v1528
  %v1538 = vor.u32 %v1536, %v1537
  %v1539 = vshll.u32 2102212464, %v1527
  %v1540 = vshrl.u32 920167782, %v1528
  %v1541 = vor.u32 %v1539, %v1540
  %v1542 = vshll.u32 920167782, %v1527
  %v1543 = vshrl.u32 1326507024, %v1528
  %v1544 = vor.u32 %v1542, %v1543
  %vm1545 = vcmp.lt.s32.totalorder %v1526, 1
  %vm1546 = vcmp.lt.s32.totalorder %v1526, 2
  %vm1547 = vcmp.lt.s32.totalorder %v1526, 3
  %vm1548 = vcmp.lt.s32.totalorder %v1526, 4
  %v1549 = vsel %vm1545, %v1529, %v1532
  %v1550 = vsel %vm1548, %v1538, 2102212464
  %v1551 = vsel %vm1547, %v1535, %v1550
  %v1552 = vsel %vm1546, %v1549, %v1551
  %v1553 = vsel %vm1545, %v1532, %v1535
  %v1554 = vsel %vm1548, %v1541, 920167782
  %v1555 = vsel %vm1547, %v1538, %v1554
  %v1556 = vsel %vm1546, %v1553, %v1555
  %v1557 = vsel %vm1545, %v1535, %v1538
  %v1558 = vsel %vm1548, %v1544, 1326507024
  %v1559 = vsel %vm1547, %v1541, %v1558
  %v1560 = vsel %vm1546, %v1557, %v1559
  %v1561 = vshll.u32 %v1521, 8
  %v1562 = vmul.u32.u64.compose %v1561, %v1560
  %v1563 = vextract.low.u32 %v1562
  %v1564 = vextract.high.u32 %v1562
  %v1565 = vmul.u32.u64.compose %v1561, %v1556
  %v1566 = vextract.low.u32 %v1565
  %v1567 = vextract.high.u32 %v1565
  %v1568 = vmul.u32 %v1561, %v1552
  %v1569 = vadd.s32 %v1564, %v1566
  %vm1570 = vc.u32 %v1564, %v1566
  %v1571 = vadd.s32 %v1567, 1
  %v1572 = vsel %vm1570, %v1571, %v1567
  %v1573 = vadd.s32 %v1568, %v1572
  %v1574 = vadd.s32 %v1573, 536870912
  %v1575 = vshrl.u32 %v1574, 30
  %v1576 = vshll.u32 %v1575, 30
  %v1577 = vsub.s32 %v1573, %v1576
  %vm1578 = vcmp.lt.s32.totalorder %v1577, 0
  %v1579 = vsub.s32 0, %v1577
  %v1580 = vsel %vm1578, %v1579, %v1577
  %v1581 = vclz %v1580
  %v1582 = vsub.s32 %v1581, 2
  %vm1583 = vcmp.gt.s32.totalorder 0, %v1582
  %v1584 = vsel %vm1583, 0, %v1582
  %v1585 = vsub.s32 32, %v1584
  %v1586 = vshll.u32 %v1577, %v1584
  %v1587 = vshrl.u32 %v1569, %v1585
  %v1588 = vor.u32 %v1586, %v1587
  %v1589 = vsub.s32 4294967266, %v1584
  %v1590 = vadd.s32 %v1589, 127
  %v1591 = vshll.u32 %v1590, 23
  %v1592 = vor.u32 4788187, %v1591
  %v1593 = vand.u32 2147483647, %v1592
  %v1595 = vcvt.s32.f32 %v1588
  %v1596 = vmul.f32 %v1595, %v1593
  %v1597 = vxor.u32 %v1596, 2147483648
  %v1598 = vsel %vm1515, %v1597, %v1596
  %v1599 = vsub.s32 4, %v1575
  %v1600 = vsel %vm1515, %v1599, %v1575
  %v1601 = vsel %vm1514, %v1114, %v1598
  %v1602 = vsel %vm1514, 0, %v1600
  %v1603 = vcosq.f32.pop %v1601
  %v1604 = vsinq.f32.pop %v1601
  %vm1605 = vweird.f32 %v1114
  %v1606 = vand.u32 %v1602, 3
  %vm1607 = vcmp.lt.s32.totalorder %v1606, 2
  %vm1608 = vcmp.eq.s32.totalorder %v1606, 0
  %v1609 = vxor.u32 %v1604, 2147483648
  %v1610 = vsel %vm1608, %v1603, %v1609
  %vm1611 = vcmp.eq.s32.totalorder %v1606, 2
  %v1612 = vxor.u32 %v1603, 2147483648
  %v1613 = vsel %vm1611, %v1612, %v1604
  %v1614 = vsel %vm1607, %v1610, %v1613
  %v1615 = vsel %vm1605, nan, %v1614
  %v1616 = vand.u32 2147483647, %v1120
  %vm1617 = vcmp.le.f32.partialorder %v1616, 0.7853982
  %vm1618 = vcmp.lt.s32.totalorder %v1120, 0
  %v1619 = vand.u32 %v1120, 2139095040
  %v1620 = vshrl.u32 %v1619, 23
  %v1621 = vsub.s32 %v1620, 127
  %v1622 = vand.u32 2147483647, %v1120
  %v1623 = vand.u32 %v1622, 8388607
  %v1624 = vor.u32 %v1623, 8388608
  %v1625 = vsub.s32 0, %v1624
  %v1626 = vadd.s32 %v1621, 1
  %vm1627 = vcmp.gt.s32.totalorder %v1626, 0
  %v1628 = vsel %vm1627, %v1626, 0
  %v1629 = vshrl.u32 %v1628, 5
  %v1630 = vand.u32 %v1628, 31
  %v1631 = vsub.s32 32, %v1630
  %v1632 = vshrl.u32 683565275, %v1631
  %v1633 = vshll.u32 683565275, %v1630
  %v1634 = vshrl.u32 2475754826, %v1631
  %v1635 = vor.u32 %v1633, %v1634
  %v1636 = vshll.u32 2475754826, %v1630
  %v1637 = vshrl.u32 2131351028, %v1631
  %v1638 = vor.u32 %v1636, %v1637
  %v1639 = vshll.u32 2131351028, %v1630
  %v1640 = vshrl.u32 2102212464, %v1631
  %v1641 = vor.u32 %v1639, %v1640
  %v1642 = vshll.u32 2102212464, %v1630
  %v1643 = vshrl.u32 920167782, %v1631
  %v1644 = vor.u32 %v1642, %v1643
  %v1645 = vshll.u32 920167782, %v1630
  %v1646 = vshrl.u32 1326507024, %v1631
  %v1647 = vor.u32 %v1645, %v1646
  %vm1648 = vcmp.lt.s32.totalorder %v1629, 1
  %vm1649 = vcmp.lt.s32.totalorder %v1629, 2
  %vm1650 = vcmp.lt.s32.totalorder %v1629, 3
  %vm1651 = vcmp.lt.s32.totalorder %v1629, 4
  %v1652 = vsel %vm1648, %v1632, %v1635
  %v1653 = vsel %vm1651, %v1641, 2102212464
  %v1654 = vsel %vm1650, %v1638, %v1653
  %v1655 = vsel %vm1649, %v1652, %v1654
  %v1656 = vsel %vm1648, %v1635, %v1638
  %v1657 = vsel %vm1651, %v1644, 920167782
  %v1658 = vsel %vm1650, %v1641, %v1657
  %v1659 = vsel %vm1649, %v1656, %v1658
  %v1660 = vsel %vm1648, %v1638, %v1641
  %v1661 = vsel %vm1651, %v1647, 1326507024
  %v1662 = vsel %vm1650, %v1644, %v1661
  %v1663 = vsel %vm1649, %v1660, %v1662
  %v1664 = vshll.u32 %v1624, 8
  %v1665 = vmul.u32.u64.compose %v1664, %v1663
  %v1666 = vextract.low.u32 %v1665
  %v1667 = vextract.high.u32 %v1665
  %v1668 = vmul.u32.u64.compose %v1664, %v1659
  %v1669 = vextract.low.u32 %v1668
  %v1670 = vextract.high.u32 %v1668
  %v1671 = vmul.u32 %v1664, %v1655
  %v1672 = vadd.s32 %v1667, %v1669
  %vm1673 = vc.u32 %v1667, %v1669
  %v1674 = vadd.s32 %v1670, 1
  %v1675 = vsel %vm1673, %v1674, %v1670
  %v1676 = vadd.s32 %v1671, %v1675
  %v1677 = vadd.s32 %v1676, 536870912
  %v1678 = vshrl.u32 %v1677, 30
  %v1679 = vshll.u32 %v1678, 30
  %v1680 = vsub.s32 %v1676, %v1679
  %vm1681 = vcmp.lt.s32.totalorder %v1680, 0
  %v1682 = vsub.s32 0, %v1680
  %v1683 = vsel %vm1681, %v1682, %v1680
  %v1684 = vclz %v1683
  %v1685 = vsub.s32 %v1684, 2
  %vm1686 = vcmp.gt.s32.totalorder 0, %v1685
  %v1687 = vsel %vm1686, 0, %v1685
  %v1688 = vsub.s32 32, %v1687
  %v1689 = vshll.u32 %v1680, %v1687
  %v1690 = vshrl.u32 %v1672, %v1688
  %v1691 = vor.u32 %v1689, %v1690
  %v1692 = vsub.s32 4294967266, %v1687
  %v1693 = vadd.s32 %v1692, 127
  %v1694 = vshll.u32 %v1693, 23
  %v1695 = vor.u32 4788187, %v1694
  %v1696 = vand.u32 2147483647, %v1695
  %v1698 = vcvt.s32.f32 %v1691
  %v1699 = vmul.f32 %v1698, %v1696
  %v1700 = vxor.u32 %v1699, 2147483648
  %v1701 = vsel %vm1618, %v1700, %v1699
  %v1702 = vsub.s32 4, %v1678
  %v1703 = vsel %vm1618, %v1702, %v1678
  %v1704 = vsel %vm1617, %v1120, %v1701
  %v1705 = vsel %vm1617, 0, %v1703
  %v1706 = vcosq.f32.pop %v1704
  %v1707 = vsinq.f32.pop %v1704
  %vm1708 = vweird.f32 %v1120
  %v1709 = vand.u32 %v1705, 3
  %vm1710 = vcmp.lt.s32.totalorder %v1709, 2
  %vm1711 = vcmp.eq.s32.totalorder %v1709, 0
  %v1712 = vxor.u32 %v1707, 2147483648
  %v1713 = vsel %vm1711, %v1706, %v1712
  %vm1714 = vcmp.eq.s32.totalorder %v1709, 2
  %v1715 = vxor.u32 %v1706, 2147483648
  %v1716 = vsel %vm1714, %v1715, %v1707
  %v1717 = vsel %vm1710, %v1713, %v1716
  %v1718 = vsel %vm1708, nan, %v1717
  %v1719 = vand.u32 2147483647, %v1126
  %vm1720 = vcmp.le.f32.partialorder %v1719, 0.7853982
  %vm1721 = vcmp.lt.s32.totalorder %v1126, 0
  %v1722 = vand.u32 %v1126, 2139095040
  %v1723 = vshrl.u32 %v1722, 23
  %v1724 = vsub.s32 %v1723, 127
  %v1725 = vand.u32 2147483647, %v1126
  %v1726 = vand.u32 %v1725, 8388607
  %v1727 = vor.u32 %v1726, 8388608
  %v1728 = vsub.s32 0, %v1727
  %v1729 = vadd.s32 %v1724, 1
  %vm1730 = vcmp.gt.s32.totalorder %v1729, 0
  %v1731 = vsel %vm1730, %v1729, 0
  %v1732 = vshrl.u32 %v1731, 5
  %v1733 = vand.u32 %v1731, 31
  %v1734 = vsub.s32 32, %v1733
  %v1735 = vshrl.u32 683565275, %v1734
  %v1736 = vshll.u32 683565275, %v1733
  %v1737 = vshrl.u32 2475754826, %v1734
  %v1738 = vor.u32 %v1736, %v1737
  %v1739 = vshll.u32 2475754826, %v1733
  %v1740 = vshrl.u32 2131351028, %v1734
  %v1741 = vor.u32 %v1739, %v1740
  %v1742 = vshll.u32 2131351028, %v1733
  %v1743 = vshrl.u32 2102212464, %v1734
  %v1744 = vor.u32 %v1742, %v1743
  %v1745 = vshll.u32 2102212464, %v1733
  %v1746 = vshrl.u32 920167782, %v1734
  %v1747 = vor.u32 %v1745, %v1746
  %v1748 = vshll.u32 920167782, %v1733
  %v1749 = vshrl.u32 1326507024, %v1734
  %v1750 = vor.u32 %v1748, %v1749
  %vm1751 = vcmp.lt.s32.totalorder %v1732, 1
  %vm1752 = vcmp.lt.s32.totalorder %v1732, 2
  %vm1753 = vcmp.lt.s32.totalorder %v1732, 3
  %vm1754 = vcmp.lt.s32.totalorder %v1732, 4
  %v1755 = vsel %vm1751, %v1735, %v1738
  %v1756 = vsel %vm1754, %v1744, 2102212464
  %v1757 = vsel %vm1753, %v1741, %v1756
  %v1758 = vsel %vm1752, %v1755, %v1757
  %v1759 = vsel %vm1751, %v1738, %v1741
  %v1760 = vsel %vm1754, %v1747, 920167782
  %v1761 = vsel %vm1753, %v1744, %v1760
  %v1762 = vsel %vm1752, %v1759, %v1761
  %v1763 = vsel %vm1751, %v1741, %v1744
  %v1764 = vsel %vm1754, %v1750, 1326507024
  %v1765 = vsel %vm1753, %v1747, %v1764
  %v1766 = vsel %vm1752, %v1763, %v1765
  %v1767 = vshll.u32 %v1727, 8
  %v1768 = vmul.u32.u64.compose %v1767, %v1766
  %v1769 = vextract.low.u32 %v1768
  %v1770 = vextract.high.u32 %v1768
  %v1771 = vmul.u32.u64.compose %v1767, %v1762
  %v1772 = vextract.low.u32 %v1771
  %v1773 = vextract.high.u32 %v1771
  %v1774 = vmul.u32 %v1767, %v1758
  %v1775 = vadd.s32 %v1770, %v1772
  %vm1776 = vc.u32 %v1770, %v1772
  %v1777 = vadd.s32 %v1773, 1
  %v1778 = vsel %vm1776, %v1777, %v1773
  %v1779 = vadd.s32 %v1774, %v1778
  %v1780 = vadd.s32 %v1779, 536870912
  %v1781 = vshrl.u32 %v1780, 30
  %v1782 = vshll.u32 %v1781, 30
  %v1783 = vsub.s32 %v1779, %v1782
  %vm1784 = vcmp.lt.s32.totalorder %v1783, 0
  %v1785 = vsub.s32 0, %v1783
  %v1786 = vsel %vm1784, %v1785, %v1783
  %v1787 = vclz %v1786
  %v1788 = vsub.s32 %v1787, 2
  %vm1789 = vcmp.gt.s32.totalorder 0, %v1788
  %v1790 = vsel %vm1789, 0, %v1788
  %v1791 = vsub.s32 32, %v1790
  %v1792 = vshll.u32 %v1783, %v1790
  %v1793 = vshrl.u32 %v1775, %v1791
  %v1794 = vor.u32 %v1792, %v1793
  %v1795 = vsub.s32 4294967266, %v1790
  %v1796 = vadd.s32 %v1795, 127
  %v1797 = vshll.u32 %v1796, 23
  %v1798 = vor.u32 4788187, %v1797
  %v1799 = vand.u32 2147483647, %v1798
  %v1801 = vcvt.s32.f32 %v1794
  %v1802 = vmul.f32 %v1801, %v1799
  %v1803 = vxor.u32 %v1802, 2147483648
  %v1804 = vsel %vm1721, %v1803, %v1802
  %v1805 = vsub.s32 4, %v1781
  %v1806 = vsel %vm1721, %v1805, %v1781
  %v1807 = vsel %vm1720, %v1126, %v1804
  %v1808 = vsel %vm1720, 0, %v1806
  %v1809 = vcosq.f32.pop %v1807
  %v1810 = vsinq.f32.pop %v1807
  %vm1811 = vweird.f32 %v1126
  %v1812 = vand.u32 %v1808, 3
  %vm1813 = vcmp.lt.s32.totalorder %v1812, 2
  %vm1814 = vcmp.eq.s32.totalorder %v1812, 0
  %v1815 = vxor.u32 %v1810, 2147483648
  %v1816 = vsel %vm1814, %v1809, %v1815
  %vm1817 = vcmp.eq.s32.totalorder %v1812, 2
  %v1818 = vxor.u32 %v1809, 2147483648
  %v1819 = vsel %vm1817, %v1818, %v1810
  %v1820 = vsel %vm1813, %v1816, %v1819
  %v1821 = vsel %vm1811, nan, %v1820
  %v1822 = vand.u32 2147483647, %v1132
  %vm1823 = vcmp.le.f32.partialorder %v1822, 0.7853982
  %vm1824 = vcmp.lt.s32.totalorder %v1132, 0
  %v1825 = vand.u32 %v1132, 2139095040
  %v1826 = vshrl.u32 %v1825, 23
  %v1827 = vsub.s32 %v1826, 127
  %v1828 = vand.u32 2147483647, %v1132
  %v1829 = vand.u32 %v1828, 8388607
  %v1830 = vor.u32 %v1829, 8388608
  %v1831 = vsub.s32 0, %v1830
  %v1832 = vadd.s32 %v1827, 1
  %vm1833 = vcmp.gt.s32.totalorder %v1832, 0
  %v1834 = vsel %vm1833, %v1832, 0
  %v1835 = vshrl.u32 %v1834, 5
  %v1836 = vand.u32 %v1834, 31
  %v1837 = vsub.s32 32, %v1836
  %v1838 = vshrl.u32 683565275, %v1837
  %v1839 = vshll.u32 683565275, %v1836
  %v1840 = vshrl.u32 2475754826, %v1837
  %v1841 = vor.u32 %v1839, %v1840
  %v1842 = vshll.u32 2475754826, %v1836
  %v1843 = vshrl.u32 2131351028, %v1837
  %v1844 = vor.u32 %v1842, %v1843
  %v1845 = vshll.u32 2131351028, %v1836
  %v1846 = vshrl.u32 2102212464, %v1837
  %v1847 = vor.u32 %v1845, %v1846
  %v1848 = vshll.u32 2102212464, %v1836
  %v1849 = vshrl.u32 920167782, %v1837
  %v1850 = vor.u32 %v1848, %v1849
  %v1851 = vshll.u32 920167782, %v1836
  %v1852 = vshrl.u32 1326507024, %v1837
  %v1853 = vor.u32 %v1851, %v1852
  %vm1854 = vcmp.lt.s32.totalorder %v1835, 1
  %vm1855 = vcmp.lt.s32.totalorder %v1835, 2
  %vm1856 = vcmp.lt.s32.totalorder %v1835, 3
  %vm1857 = vcmp.lt.s32.totalorder %v1835, 4
  %v1858 = vsel %vm1854, %v1838, %v1841
  %v1859 = vsel %vm1857, %v1847, 2102212464
  %v1860 = vsel %vm1856, %v1844, %v1859
  %v1861 = vsel %vm1855, %v1858, %v1860
  %v1862 = vsel %vm1854, %v1841, %v1844
  %v1863 = vsel %vm1857, %v1850, 920167782
  %v1864 = vsel %vm1856, %v1847, %v1863
  %v1865 = vsel %vm1855, %v1862, %v1864
  %v1866 = vsel %vm1854, %v1844, %v1847
  %v1867 = vsel %vm1857, %v1853, 1326507024
  %v1868 = vsel %vm1856, %v1850, %v1867
  %v1869 = vsel %vm1855, %v1866, %v1868
  %v1870 = vshll.u32 %v1830, 8
  %v1871 = vmul.u32.u64.compose %v1870, %v1869
  %v1872 = vextract.low.u32 %v1871
  %v1873 = vextract.high.u32 %v1871
  %v1874 = vmul.u32.u64.compose %v1870, %v1865
  %v1875 = vextract.low.u32 %v1874
  %v1876 = vextract.high.u32 %v1874
  %v1877 = vmul.u32 %v1870, %v1861
  %v1878 = vadd.s32 %v1873, %v1875
  %vm1879 = vc.u32 %v1873, %v1875
  %v1880 = vadd.s32 %v1876, 1
  %v1881 = vsel %vm1879, %v1880, %v1876
  %v1882 = vadd.s32 %v1877, %v1881
  %v1883 = vadd.s32 %v1882, 536870912
  %v1884 = vshrl.u32 %v1883, 30
  %v1885 = vshll.u32 %v1884, 30
  %v1886 = vsub.s32 %v1882, %v1885
  %vm1887 = vcmp.lt.s32.totalorder %v1886, 0
  %v1888 = vsub.s32 0, %v1886
  %v1889 = vsel %vm1887, %v1888, %v1886
  %v1890 = vclz %v1889
  %v1891 = vsub.s32 %v1890, 2
  %vm1892 = vcmp.gt.s32.totalorder 0, %v1891
  %v1893 = vsel %vm1892, 0, %v1891
  %v1894 = vsub.s32 32, %v1893
  %v1895 = vshll.u32 %v1886, %v1893
  %v1896 = vshrl.u32 %v1878, %v1894
  %v1897 = vor.u32 %v1895, %v1896
  %v1898 = vsub.s32 4294967266, %v1893
  %v1899 = vadd.s32 %v1898, 127
  %v1900 = vshll.u32 %v1899, 23
  %v1901 = vor.u32 4788187, %v1900
  %v1902 = vand.u32 2147483647, %v1901
  %v1904 = vcvt.s32.f32 %v1897
  %v1905 = vmul.f32 %v1904, %v1902
  %v1906 = vxor.u32 %v1905, 2147483648
  %v1907 = vsel %vm1824, %v1906, %v1905
  %v1908 = vsub.s32 4, %v1884
  %v1909 = vsel %vm1824, %v1908, %v1884
  %v1910 = vsel %vm1823, %v1132, %v1907
  %v1911 = vsel %vm1823, 0, %v1909
  %v1912 = vcosq.f32.pop %v1910
  %v1913 = vsinq.f32.pop %v1910
  %vm1914 = vweird.f32 %v1132
  %v1915 = vand.u32 %v1911, 3
  %vm1916 = vcmp.lt.s32.totalorder %v1915, 2
  %vm1917 = vcmp.eq.s32.totalorder %v1915, 0
  %v1918 = vxor.u32 %v1913, 2147483648
  %v1919 = vsel %vm1917, %v1912, %v1918
  %vm1920 = vcmp.eq.s32.totalorder %v1915, 2
  %v1921 = vxor.u32 %v1912, 2147483648
  %v1922 = vsel %vm1920, %v1921, %v1913
  %v1923 = vsel %vm1916, %v1919, %v1922
  %v1924 = vsel %vm1914, nan, %v1923
  %v1925 = vand.u32 2147483647, %v1138
  %vm1926 = vcmp.le.f32.partialorder %v1925, 0.7853982
  %vm1927 = vcmp.lt.s32.totalorder %v1138, 0
  %v1928 = vand.u32 %v1138, 2139095040
  %v1929 = vshrl.u32 %v1928, 23
  %v1930 = vsub.s32 %v1929, 127
  %v1931 = vand.u32 2147483647, %v1138
  %v1932 = vand.u32 %v1931, 8388607
  %v1933 = vor.u32 %v1932, 8388608
  %v1934 = vsub.s32 0, %v1933
  %v1935 = vadd.s32 %v1930, 1
  %vm1936 = vcmp.gt.s32.totalorder %v1935, 0
  %v1937 = vsel %vm1936, %v1935, 0
  %v1938 = vshrl.u32 %v1937, 5
  %v1939 = vand.u32 %v1937, 31
  %v1940 = vsub.s32 32, %v1939
  %v1941 = vshrl.u32 683565275, %v1940
  %v1942 = vshll.u32 683565275, %v1939
  %v1943 = vshrl.u32 2475754826, %v1940
  %v1944 = vor.u32 %v1942, %v1943
  %v1945 = vshll.u32 2475754826, %v1939
  %v1946 = vshrl.u32 2131351028, %v1940
  %v1947 = vor.u32 %v1945, %v1946
  %v1948 = vshll.u32 2131351028, %v1939
  %v1949 = vshrl.u32 2102212464, %v1940
  %v1950 = vor.u32 %v1948, %v1949
  %v1951 = vshll.u32 2102212464, %v1939
  %v1952 = vshrl.u32 920167782, %v1940
  %v1953 = vor.u32 %v1951, %v1952
  %v1954 = vshll.u32 920167782, %v1939
  %v1955 = vshrl.u32 1326507024, %v1940
  %v1956 = vor.u32 %v1954, %v1955
  %vm1957 = vcmp.lt.s32.totalorder %v1938, 1
  %vm1958 = vcmp.lt.s32.totalorder %v1938, 2
  %vm1959 = vcmp.lt.s32.totalorder %v1938, 3
  %vm1960 = vcmp.lt.s32.totalorder %v1938, 4
  %v1961 = vsel %vm1957, %v1941, %v1944
  %v1962 = vsel %vm1960, %v1950, 2102212464
  %v1963 = vsel %vm1959, %v1947, %v1962
  %v1964 = vsel %vm1958, %v1961, %v1963
  %v1965 = vsel %vm1957, %v1944, %v1947
  %v1966 = vsel %vm1960, %v1953, 920167782
  %v1967 = vsel %vm1959, %v1950, %v1966
  %v1968 = vsel %vm1958, %v1965, %v1967
  %v1969 = vsel %vm1957, %v1947, %v1950
  %v1970 = vsel %vm1960, %v1956, 1326507024
  %v1971 = vsel %vm1959, %v1953, %v1970
  %v1972 = vsel %vm1958, %v1969, %v1971
  %v1973 = vshll.u32 %v1933, 8
  %v1974 = vmul.u32.u64.compose %v1973, %v1972
  %v1975 = vextract.low.u32 %v1974
  %v1976 = vextract.high.u32 %v1974
  %v1977 = vmul.u32.u64.compose %v1973, %v1968
  %v1978 = vextract.low.u32 %v1977
  %v1979 = vextract.high.u32 %v1977
  %v1980 = vmul.u32 %v1973, %v1964
  %v1981 = vadd.s32 %v1976, %v1978
  %vm1982 = vc.u32 %v1976, %v1978
  %v1983 = vadd.s32 %v1979, 1
  %v1984 = vsel %vm1982, %v1983, %v1979
  %v1985 = vadd.s32 %v1980, %v1984
  %v1986 = vadd.s32 %v1985, 536870912
  %v1987 = vshrl.u32 %v1986, 30
  %v1988 = vshll.u32 %v1987, 30
  %v1989 = vsub.s32 %v1985, %v1988
  %vm1990 = vcmp.lt.s32.totalorder %v1989, 0
  %v1991 = vsub.s32 0, %v1989
  %v1992 = vsel %vm1990, %v1991, %v1989
  %v1993 = vclz %v1992
  %v1994 = vsub.s32 %v1993, 2
  %vm1995 = vcmp.gt.s32.totalorder 0, %v1994
  %v1996 = vsel %vm1995, 0, %v1994
  %v1997 = vsub.s32 32, %v1996
  %v1998 = vshll.u32 %v1989, %v1996
  %v1999 = vshrl.u32 %v1981, %v1997
  %v2000 = vor.u32 %v1998, %v1999
  %v2001 = vsub.s32 4294967266, %v1996
  %v2002 = vadd.s32 %v2001, 127
  %v2003 = vshll.u32 %v2002, 23
  %v2004 = vor.u32 4788187, %v2003
  %v2005 = vand.u32 2147483647, %v2004
  %v2007 = vcvt.s32.f32 %v2000
  %v2008 = vmul.f32 %v2007, %v2005
  %v2009 = vxor.u32 %v2008, 2147483648
  %v2010 = vsel %vm1927, %v2009, %v2008
  %v2011 = vsub.s32 4, %v1987
  %v2012 = vsel %vm1927, %v2011, %v1987
  %v2013 = vsel %vm1926, %v1138, %v2010
  %v2014 = vsel %vm1926, 0, %v2012
  %v2015 = vcosq.f32.pop %v2013
  %v2016 = vsinq.f32.pop %v2013
  %vm2017 = vweird.f32 %v1138
  %v2018 = vand.u32 %v2014, 3
  %vm2019 = vcmp.lt.s32.totalorder %v2018, 2
  %vm2020 = vcmp.eq.s32.totalorder %v2018, 0
  %v2021 = vxor.u32 %v2016, 2147483648
  %v2022 = vsel %vm2020, %v2015, %v2021
  %vm2023 = vcmp.eq.s32.totalorder %v2018, 2
  %v2024 = vxor.u32 %v2015, 2147483648
  %v2025 = vsel %vm2023, %v2024, %v2016
  %v2026 = vsel %vm2019, %v2022, %v2025
  %v2027 = vsel %vm2017, nan, %v2026
  %v2028 = vand.u32 2147483647, %v1144
  %vm2029 = vcmp.le.f32.partialorder %v2028, 0.7853982
  %vm2030 = vcmp.lt.s32.totalorder %v1144, 0
  %v2031 = vand.u32 %v1144, 2139095040
  %v2032 = vshrl.u32 %v2031, 23
  %v2033 = vsub.s32 %v2032, 127
  %v2034 = vand.u32 2147483647, %v1144
  %v2035 = vand.u32 %v2034, 8388607
  %v2036 = vor.u32 %v2035, 8388608
  %v2037 = vsub.s32 0, %v2036
  %v2038 = vadd.s32 %v2033, 1
  %vm2039 = vcmp.gt.s32.totalorder %v2038, 0
  %v2040 = vsel %vm2039, %v2038, 0
  %v2041 = vshrl.u32 %v2040, 5
  %v2042 = vand.u32 %v2040, 31
  %v2043 = vsub.s32 32, %v2042
  %v2044 = vshrl.u32 683565275, %v2043
  %v2045 = vshll.u32 683565275, %v2042
  %v2046 = vshrl.u32 2475754826, %v2043
  %v2047 = vor.u32 %v2045, %v2046
  %v2048 = vshll.u32 2475754826, %v2042
  %v2049 = vshrl.u32 2131351028, %v2043
  %v2050 = vor.u32 %v2048, %v2049
  %v2051 = vshll.u32 2131351028, %v2042
  %v2052 = vshrl.u32 2102212464, %v2043
  %v2053 = vor.u32 %v2051, %v2052
  %v2054 = vshll.u32 2102212464, %v2042
  %v2055 = vshrl.u32 920167782, %v2043
  %v2056 = vor.u32 %v2054, %v2055
  %v2057 = vshll.u32 920167782, %v2042
  %v2058 = vshrl.u32 1326507024, %v2043
  %v2059 = vor.u32 %v2057, %v2058
  %vm2060 = vcmp.lt.s32.totalorder %v2041, 1
  %vm2061 = vcmp.lt.s32.totalorder %v2041, 2
  %vm2062 = vcmp.lt.s32.totalorder %v2041, 3
  %vm2063 = vcmp.lt.s32.totalorder %v2041, 4
  %v2064 = vsel %vm2060, %v2044, %v2047
  %v2065 = vsel %vm2063, %v2053, 2102212464
  %v2066 = vsel %vm2062, %v2050, %v2065
  %v2067 = vsel %vm2061, %v2064, %v2066
  %v2068 = vsel %vm2060, %v2047, %v2050
  %v2069 = vsel %vm2063, %v2056, 920167782
  %v2070 = vsel %vm2062, %v2053, %v2069
  %v2071 = vsel %vm2061, %v2068, %v2070
  %v2072 = vsel %vm2060, %v2050, %v2053
  %v2073 = vsel %vm2063, %v2059, 1326507024
  %v2074 = vsel %vm2062, %v2056, %v2073
  %v2075 = vsel %vm2061, %v2072, %v2074
  %v2076 = vshll.u32 %v2036, 8
  %v2077 = vmul.u32.u64.compose %v2076, %v2075
  %v2078 = vextract.low.u32 %v2077
  %v2079 = vextract.high.u32 %v2077
  %v2080 = vmul.u32.u64.compose %v2076, %v2071
  %v2081 = vextract.low.u32 %v2080
  %v2082 = vextract.high.u32 %v2080
  %v2083 = vmul.u32 %v2076, %v2067
  %v2084 = vadd.s32 %v2079, %v2081
  %vm2085 = vc.u32 %v2079, %v2081
  %v2086 = vadd.s32 %v2082, 1
  %v2087 = vsel %vm2085, %v2086, %v2082
  %v2088 = vadd.s32 %v2083, %v2087
  %v2089 = vadd.s32 %v2088, 536870912
  %v2090 = vshrl.u32 %v2089, 30
  %v2091 = vshll.u32 %v2090, 30
  %v2092 = vsub.s32 %v2088, %v2091
  %vm2093 = vcmp.lt.s32.totalorder %v2092, 0
  %v2094 = vsub.s32 0, %v2092
  %v2095 = vsel %vm2093, %v2094, %v2092
  %v2096 = vclz %v2095
  %v2097 = vsub.s32 %v2096, 2
  %vm2098 = vcmp.gt.s32.totalorder 0, %v2097
  %v2099 = vsel %vm2098, 0, %v2097
  %v2100 = vsub.s32 32, %v2099
  %v2101 = vshll.u32 %v2092, %v2099
  %v2102 = vshrl.u32 %v2084, %v2100
  %v2103 = vor.u32 %v2101, %v2102
  %v2104 = vsub.s32 4294967266, %v2099
  %v2105 = vadd.s32 %v2104, 127
  %v2106 = vshll.u32 %v2105, 23
  %v2107 = vor.u32 4788187, %v2106
  %v2108 = vand.u32 2147483647, %v2107
  %v2110 = vcvt.s32.f32 %v2103
  %v2111 = vmul.f32 %v2110, %v2108
  %v2112 = vxor.u32 %v2111, 2147483648
  %v2113 = vsel %vm2030, %v2112, %v2111
  %v2114 = vsub.s32 4, %v2090
  %v2115 = vsel %vm2030, %v2114, %v2090
  %v2116 = vsel %vm2029, %v1144, %v2113
  %v2117 = vsel %vm2029, 0, %v2115
  %v2118 = vcosq.f32.pop %v2116
  %v2119 = vsinq.f32.pop %v2116
  %vm2120 = vweird.f32 %v1144
  %v2121 = vand.u32 %v2117, 3
  %vm2122 = vcmp.lt.s32.totalorder %v2121, 2
  %vm2123 = vcmp.eq.s32.totalorder %v2121, 0
  %v2124 = vxor.u32 %v2119, 2147483648
  %v2125 = vsel %vm2123, %v2118, %v2124
  %vm2126 = vcmp.eq.s32.totalorder %v2121, 2
  %v2127 = vxor.u32 %v2118, 2147483648
  %v2128 = vsel %vm2126, %v2127, %v2119
  %v2129 = vsel %vm2122, %v2125, %v2128
  %v2130 = vsel %vm2120, nan, %v2129
  %v2131 = vand.u32 2147483647, %v1150
  %vm2132 = vcmp.le.f32.partialorder %v2131, 0.7853982
  %vm2133 = vcmp.lt.s32.totalorder %v1150, 0
  %v2134 = vand.u32 %v1150, 2139095040
  %v2135 = vshrl.u32 %v2134, 23
  %v2136 = vsub.s32 %v2135, 127
  %v2137 = vand.u32 2147483647, %v1150
  %v2138 = vand.u32 %v2137, 8388607
  %v2139 = vor.u32 %v2138, 8388608
  %v2140 = vsub.s32 0, %v2139
  %v2141 = vadd.s32 %v2136, 1
  %vm2142 = vcmp.gt.s32.totalorder %v2141, 0
  %v2143 = vsel %vm2142, %v2141, 0
  %v2144 = vshrl.u32 %v2143, 5
  %v2145 = vand.u32 %v2143, 31
  %v2146 = vsub.s32 32, %v2145
  %v2147 = vshrl.u32 683565275, %v2146
  %v2148 = vshll.u32 683565275, %v2145
  %v2149 = vshrl.u32 2475754826, %v2146
  %v2150 = vor.u32 %v2148, %v2149
  %v2151 = vshll.u32 2475754826, %v2145
  %v2152 = vshrl.u32 2131351028, %v2146
  %v2153 = vor.u32 %v2151, %v2152
  %v2154 = vshll.u32 2131351028, %v2145
  %v2155 = vshrl.u32 2102212464, %v2146
  %v2156 = vor.u32 %v2154, %v2155
  %v2157 = vshll.u32 2102212464, %v2145
  %v2158 = vshrl.u32 920167782, %v2146
  %v2159 = vor.u32 %v2157, %v2158
  %v2160 = vshll.u32 920167782, %v2145
  %v2161 = vshrl.u32 1326507024, %v2146
  %v2162 = vor.u32 %v2160, %v2161
  %vm2163 = vcmp.lt.s32.totalorder %v2144, 1
  %vm2164 = vcmp.lt.s32.totalorder %v2144, 2
  %vm2165 = vcmp.lt.s32.totalorder %v2144, 3
  %vm2166 = vcmp.lt.s32.totalorder %v2144, 4
  %v2167 = vsel %vm2163, %v2147, %v2150
  %v2168 = vsel %vm2166, %v2156, 2102212464
  %v2169 = vsel %vm2165, %v2153, %v2168
  %v2170 = vsel %vm2164, %v2167, %v2169
  %v2171 = vsel %vm2163, %v2150, %v2153
  %v2172 = vsel %vm2166, %v2159, 920167782
  %v2173 = vsel %vm2165, %v2156, %v2172
  %v2174 = vsel %vm2164, %v2171, %v2173
  %v2175 = vsel %vm2163, %v2153, %v2156
  %v2176 = vsel %vm2166, %v2162, 1326507024
  %v2177 = vsel %vm2165, %v2159, %v2176
  %v2178 = vsel %vm2164, %v2175, %v2177
  %v2179 = vshll.u32 %v2139, 8
  %v2180 = vmul.u32.u64.compose %v2179, %v2178
  %v2181 = vextract.low.u32 %v2180
  %v2182 = vextract.high.u32 %v2180
  %v2183 = vmul.u32.u64.compose %v2179, %v2174
  %v2184 = vextract.low.u32 %v2183
  %v2185 = vextract.high.u32 %v2183
  %v2186 = vmul.u32 %v2179, %v2170
  %v2187 = vadd.s32 %v2182, %v2184
  %vm2188 = vc.u32 %v2182, %v2184
  %v2189 = vadd.s32 %v2185, 1
  %v2190 = vsel %vm2188, %v2189, %v2185
  %v2191 = vadd.s32 %v2186, %v2190
  %v2192 = vadd.s32 %v2191, 536870912
  %v2193 = vshrl.u32 %v2192, 30
  %v2194 = vshll.u32 %v2193, 30
  %v2195 = vsub.s32 %v2191, %v2194
  %vm2196 = vcmp.lt.s32.totalorder %v2195, 0
  %v2197 = vsub.s32 0, %v2195
  %v2198 = vsel %vm2196, %v2197, %v2195
  %v2199 = vclz %v2198
  %v2200 = vsub.s32 %v2199, 2
  %vm2201 = vcmp.gt.s32.totalorder 0, %v2200
  %v2202 = vsel %vm2201, 0, %v2200
  %v2203 = vsub.s32 32, %v2202
  %v2204 = vshll.u32 %v2195, %v2202
  %v2205 = vshrl.u32 %v2187, %v2203
  %v2206 = vor.u32 %v2204, %v2205
  %v2207 = vsub.s32 4294967266, %v2202
  %v2208 = vadd.s32 %v2207, 127
  %v2209 = vshll.u32 %v2208, 23
  %v2210 = vor.u32 4788187, %v2209
  %v2211 = vand.u32 2147483647, %v2210
  %v2213 = vcvt.s32.f32 %v2206
  %v2214 = vmul.f32 %v2213, %v2211
  %v2215 = vxor.u32 %v2214, 2147483648
  %v2216 = vsel %vm2133, %v2215, %v2214
  %v2217 = vsub.s32 4, %v2193
  %v2218 = vsel %vm2133, %v2217, %v2193
  %v2219 = vsel %vm2132, %v1150, %v2216
  %v2220 = vsel %vm2132, 0, %v2218
  %v2221 = vcosq.f32.pop %v2219
  %v2222 = vsinq.f32.pop %v2219
  %vm2223 = vweird.f32 %v1150
  %v2224 = vand.u32 %v2220, 3
  %vm2225 = vcmp.lt.s32.totalorder %v2224, 2
  %vm2226 = vcmp.eq.s32.totalorder %v2224, 0
  %v2227 = vxor.u32 %v2222, 2147483648
  %v2228 = vsel %vm2226, %v2221, %v2227
  %vm2229 = vcmp.eq.s32.totalorder %v2224, 2
  %v2230 = vxor.u32 %v2221, 2147483648
  %v2231 = vsel %vm2229, %v2230, %v2222
  %v2232 = vsel %vm2225, %v2228, %v2231
  %v2233 = vsel %vm2223, nan, %v2232
  %v2234 = vand.u32 2147483647, %v1156
  %vm2235 = vcmp.le.f32.partialorder %v2234, 0.7853982
  %vm2236 = vcmp.lt.s32.totalorder %v1156, 0
  %v2237 = vand.u32 %v1156, 2139095040
  %v2238 = vshrl.u32 %v2237, 23
  %v2239 = vsub.s32 %v2238, 127
  %v2240 = vand.u32 2147483647, %v1156
  %v2241 = vand.u32 %v2240, 8388607
  %v2242 = vor.u32 %v2241, 8388608
  %v2243 = vsub.s32 0, %v2242
  %v2244 = vadd.s32 %v2239, 1
  %vm2245 = vcmp.gt.s32.totalorder %v2244, 0
  %v2246 = vsel %vm2245, %v2244, 0
  %v2247 = vshrl.u32 %v2246, 5
  %v2248 = vand.u32 %v2246, 31
  %v2249 = vsub.s32 32, %v2248
  %v2250 = vshrl.u32 683565275, %v2249
  %v2251 = vshll.u32 683565275, %v2248
  %v2252 = vshrl.u32 2475754826, %v2249
  %v2253 = vor.u32 %v2251, %v2252
  %v2254 = vshll.u32 2475754826, %v2248
  %v2255 = vshrl.u32 2131351028, %v2249
  %v2256 = vor.u32 %v2254, %v2255
  %v2257 = vshll.u32 2131351028, %v2248
  %v2258 = vshrl.u32 2102212464, %v2249
  %v2259 = vor.u32 %v2257, %v2258
  %v2260 = vshll.u32 2102212464, %v2248
  %v2261 = vshrl.u32 920167782, %v2249
  %v2262 = vor.u32 %v2260, %v2261
  %v2263 = vshll.u32 920167782, %v2248
  %v2264 = vshrl.u32 1326507024, %v2249
  %v2265 = vor.u32 %v2263, %v2264
  %vm2266 = vcmp.lt.s32.totalorder %v2247, 1
  %vm2267 = vcmp.lt.s32.totalorder %v2247, 2
  %vm2268 = vcmp.lt.s32.totalorder %v2247, 3
  %vm2269 = vcmp.lt.s32.totalorder %v2247, 4
  %v2270 = vsel %vm2266, %v2250, %v2253
  %v2271 = vsel %vm2269, %v2259, 2102212464
  %v2272 = vsel %vm2268, %v2256, %v2271
  %v2273 = vsel %vm2267, %v2270, %v2272
  %v2274 = vsel %vm2266, %v2253, %v2256
  %v2275 = vsel %vm2269, %v2262, 920167782
  %v2276 = vsel %vm2268, %v2259, %v2275
  %v2277 = vsel %vm2267, %v2274, %v2276
  %v2278 = vsel %vm2266, %v2256, %v2259
  %v2279 = vsel %vm2269, %v2265, 1326507024
  %v2280 = vsel %vm2268, %v2262, %v2279
  %v2281 = vsel %vm2267, %v2278, %v2280
  %v2282 = vshll.u32 %v2242, 8
  %v2283 = vmul.u32.u64.compose %v2282, %v2281
  %v2284 = vextract.low.u32 %v2283
  %v2285 = vextract.high.u32 %v2283
  %v2286 = vmul.u32.u64.compose %v2282, %v2277
  %v2287 = vextract.low.u32 %v2286
  %v2288 = vextract.high.u32 %v2286
  %v2289 = vmul.u32 %v2282, %v2273
  %v2290 = vadd.s32 %v2285, %v2287
  %vm2291 = vc.u32 %v2285, %v2287
  %v2292 = vadd.s32 %v2288, 1
  %v2293 = vsel %vm2291, %v2292, %v2288
  %v2294 = vadd.s32 %v2289, %v2293
  %v2295 = vadd.s32 %v2294, 536870912
  %v2296 = vshrl.u32 %v2295, 30
  %v2297 = vshll.u32 %v2296, 30
  %v2298 = vsub.s32 %v2294, %v2297
  %vm2299 = vcmp.lt.s32.totalorder %v2298, 0
  %v2300 = vsub.s32 0, %v2298
  %v2301 = vsel %vm2299, %v2300, %v2298
  %v2302 = vclz %v2301
  %v2303 = vsub.s32 %v2302, 2
  %vm2304 = vcmp.gt.s32.totalorder 0, %v2303
  %v2305 = vsel %vm2304, 0, %v2303
  %v2306 = vsub.s32 32, %v2305
  %v2307 = vshll.u32 %v2298, %v2305
  %v2308 = vshrl.u32 %v2290, %v2306
  %v2309 = vor.u32 %v2307, %v2308
  %v2310 = vsub.s32 4294967266, %v2305
  %v2311 = vadd.s32 %v2310, 127
  %v2312 = vshll.u32 %v2311, 23
  %v2313 = vor.u32 4788187, %v2312
  %v2314 = vand.u32 2147483647, %v2313
  %v2316 = vcvt.s32.f32 %v2309
  %v2317 = vmul.f32 %v2316, %v2314
  %v2318 = vxor.u32 %v2317, 2147483648
  %v2319 = vsel %vm2236, %v2318, %v2317
  %v2320 = vsub.s32 4, %v2296
  %v2321 = vsel %vm2236, %v2320, %v2296
  %v2322 = vsel %vm2235, %v1156, %v2319
  %v2323 = vsel %vm2235, 0, %v2321
  %v2324 = vcosq.f32.pop %v2322
  %v2325 = vsinq.f32.pop %v2322
  %vm2326 = vweird.f32 %v1156
  %v2327 = vand.u32 %v2323, 3
  %vm2328 = vcmp.lt.s32.totalorder %v2327, 2
  %vm2329 = vcmp.eq.s32.totalorder %v2327, 0
  %v2330 = vxor.u32 %v2325, 2147483648
  %v2331 = vsel %vm2329, %v2324, %v2330
  %vm2332 = vcmp.eq.s32.totalorder %v2327, 2
  %v2333 = vxor.u32 %v2324, 2147483648
  %v2334 = vsel %vm2332, %v2333, %v2325
  %v2335 = vsel %vm2328, %v2331, %v2334
  %v2336 = vsel %vm2326, nan, %v2335
  %v2337 = vand.u32 2147483647, %v1162
  %vm2338 = vcmp.le.f32.partialorder %v2337, 0.7853982
  %vm2339 = vcmp.lt.s32.totalorder %v1162, 0
  %v2340 = vand.u32 %v1162, 2139095040
  %v2341 = vshrl.u32 %v2340, 23
  %v2342 = vsub.s32 %v2341, 127
  %v2343 = vand.u32 2147483647, %v1162
  %v2344 = vand.u32 %v2343, 8388607
  %v2345 = vor.u32 %v2344, 8388608
  %v2346 = vsub.s32 0, %v2345
  %v2347 = vadd.s32 %v2342, 1
  %vm2348 = vcmp.gt.s32.totalorder %v2347, 0
  %v2349 = vsel %vm2348, %v2347, 0
  %v2350 = vshrl.u32 %v2349, 5
  %v2351 = vand.u32 %v2349, 31
  %v2352 = vsub.s32 32, %v2351
  %v2353 = vshrl.u32 683565275, %v2352
  %v2354 = vshll.u32 683565275, %v2351
  %v2355 = vshrl.u32 2475754826, %v2352
  %v2356 = vor.u32 %v2354, %v2355
  %v2357 = vshll.u32 2475754826, %v2351
  %v2358 = vshrl.u32 2131351028, %v2352
  %v2359 = vor.u32 %v2357, %v2358
  %v2360 = vshll.u32 2131351028, %v2351
  %v2361 = vshrl.u32 2102212464, %v2352
  %v2362 = vor.u32 %v2360, %v2361
  %v2363 = vshll.u32 2102212464, %v2351
  %v2364 = vshrl.u32 920167782, %v2352
  %v2365 = vor.u32 %v2363, %v2364
  %v2366 = vshll.u32 920167782, %v2351
  %v2367 = vshrl.u32 1326507024, %v2352
  %v2368 = vor.u32 %v2366, %v2367
  %vm2369 = vcmp.lt.s32.totalorder %v2350, 1
  %vm2370 = vcmp.lt.s32.totalorder %v2350, 2
  %vm2371 = vcmp.lt.s32.totalorder %v2350, 3
  %vm2372 = vcmp.lt.s32.totalorder %v2350, 4
  %v2373 = vsel %vm2369, %v2353, %v2356
  %v2374 = vsel %vm2372, %v2362, 2102212464
  %v2375 = vsel %vm2371, %v2359, %v2374
  %v2376 = vsel %vm2370, %v2373, %v2375
  %v2377 = vsel %vm2369, %v2356, %v2359
  %v2378 = vsel %vm2372, %v2365, 920167782
  %v2379 = vsel %vm2371, %v2362, %v2378
  %v2380 = vsel %vm2370, %v2377, %v2379
  %v2381 = vsel %vm2369, %v2359, %v2362
  %v2382 = vsel %vm2372, %v2368, 1326507024
  %v2383 = vsel %vm2371, %v2365, %v2382
  %v2384 = vsel %vm2370, %v2381, %v2383
  %v2385 = vshll.u32 %v2345, 8
  %v2386 = vmul.u32.u64.compose %v2385, %v2384
  %v2387 = vextract.low.u32 %v2386
  %v2388 = vextract.high.u32 %v2386
  %v2389 = vmul.u32.u64.compose %v2385, %v2380
  %v2390 = vextract.low.u32 %v2389
  %v2391 = vextract.high.u32 %v2389
  %v2392 = vmul.u32 %v2385, %v2376
  %v2393 = vadd.s32 %v2388, %v2390
  %vm2394 = vc.u32 %v2388, %v2390
  %v2395 = vadd.s32 %v2391, 1
  %v2396 = vsel %vm2394, %v2395, %v2391
  %v2397 = vadd.s32 %v2392, %v2396
  %v2398 = vadd.s32 %v2397, 536870912
  %v2399 = vshrl.u32 %v2398, 30
  %v2400 = vshll.u32 %v2399, 30
  %v2401 = vsub.s32 %v2397, %v2400
  %vm2402 = vcmp.lt.s32.totalorder %v2401, 0
  %v2403 = vsub.s32 0, %v2401
  %v2404 = vsel %vm2402, %v2403, %v2401
  %v2405 = vclz %v2404
  %v2406 = vsub.s32 %v2405, 2
  %vm2407 = vcmp.gt.s32.totalorder 0, %v2406
  %v2408 = vsel %vm2407, 0, %v2406
  %v2409 = vsub.s32 32, %v2408
  %v2410 = vshll.u32 %v2401, %v2408
  %v2411 = vshrl.u32 %v2393, %v2409
  %v2412 = vor.u32 %v2410, %v2411
  %v2413 = vsub.s32 4294967266, %v2408
  %v2414 = vadd.s32 %v2413, 127
  %v2415 = vshll.u32 %v2414, 23
  %v2416 = vor.u32 4788187, %v2415
  %v2417 = vand.u32 2147483647, %v2416
  %v2419 = vcvt.s32.f32 %v2412
  %v2420 = vmul.f32 %v2419, %v2417
  %v2421 = vxor.u32 %v2420, 2147483648
  %v2422 = vsel %vm2339, %v2421, %v2420
  %v2423 = vsub.s32 4, %v2399
  %v2424 = vsel %vm2339, %v2423, %v2399
  %v2425 = vsel %vm2338, %v1162, %v2422
  %v2426 = vsel %vm2338, 0, %v2424
  %v2427 = vcosq.f32.pop %v2425
  %v2428 = vsinq.f32.pop %v2425
  %vm2429 = vweird.f32 %v1162
  %v2430 = vand.u32 %v2426, 3
  %vm2431 = vcmp.lt.s32.totalorder %v2430, 2
  %vm2432 = vcmp.eq.s32.totalorder %v2430, 0
  %v2433 = vxor.u32 %v2428, 2147483648
  %v2434 = vsel %vm2432, %v2427, %v2433
  %vm2435 = vcmp.eq.s32.totalorder %v2430, 2
  %v2436 = vxor.u32 %v2427, 2147483648
  %v2437 = vsel %vm2435, %v2436, %v2428
  %v2438 = vsel %vm2431, %v2434, %v2437
  %v2439 = vsel %vm2429, nan, %v2438
  %v2440 = vand.u32 2147483647, %v1168
  %vm2441 = vcmp.le.f32.partialorder %v2440, 0.7853982
  %vm2442 = vcmp.lt.s32.totalorder %v1168, 0
  %v2443 = vand.u32 %v1168, 2139095040
  %v2444 = vshrl.u32 %v2443, 23
  %v2445 = vsub.s32 %v2444, 127
  %v2446 = vand.u32 2147483647, %v1168
  %v2447 = vand.u32 %v2446, 8388607
  %v2448 = vor.u32 %v2447, 8388608
  %v2449 = vsub.s32 0, %v2448
  %v2450 = vadd.s32 %v2445, 1
  %vm2451 = vcmp.gt.s32.totalorder %v2450, 0
  %v2452 = vsel %vm2451, %v2450, 0
  %v2453 = vshrl.u32 %v2452, 5
  %v2454 = vand.u32 %v2452, 31
  %v2455 = vsub.s32 32, %v2454
  %v2456 = vshrl.u32 683565275, %v2455
  %v2457 = vshll.u32 683565275, %v2454
  %v2458 = vshrl.u32 2475754826, %v2455
  %v2459 = vor.u32 %v2457, %v2458
  %v2460 = vshll.u32 2475754826, %v2454
  %v2461 = vshrl.u32 2131351028, %v2455
  %v2462 = vor.u32 %v2460, %v2461
  %v2463 = vshll.u32 2131351028, %v2454
  %v2464 = vshrl.u32 2102212464, %v2455
  %v2465 = vor.u32 %v2463, %v2464
  %v2466 = vshll.u32 2102212464, %v2454
  %v2467 = vshrl.u32 920167782, %v2455
  %v2468 = vor.u32 %v2466, %v2467
  %v2469 = vshll.u32 920167782, %v2454
  %v2470 = vshrl.u32 1326507024, %v2455
  %v2471 = vor.u32 %v2469, %v2470
  %vm2472 = vcmp.lt.s32.totalorder %v2453, 1
  %vm2473 = vcmp.lt.s32.totalorder %v2453, 2
  %vm2474 = vcmp.lt.s32.totalorder %v2453, 3
  %vm2475 = vcmp.lt.s32.totalorder %v2453, 4
  %v2476 = vsel %vm2472, %v2456, %v2459
  %v2477 = vsel %vm2475, %v2465, 2102212464
  %v2478 = vsel %vm2474, %v2462, %v2477
  %v2479 = vsel %vm2473, %v2476, %v2478
  %v2480 = vsel %vm2472, %v2459, %v2462
  %v2481 = vsel %vm2475, %v2468, 920167782
  %v2482 = vsel %vm2474, %v2465, %v2481
  %v2483 = vsel %vm2473, %v2480, %v2482
  %v2484 = vsel %vm2472, %v2462, %v2465
  %v2485 = vsel %vm2475, %v2471, 1326507024
  %v2486 = vsel %vm2474, %v2468, %v2485
  %v2487 = vsel %vm2473, %v2484, %v2486
  %v2488 = vshll.u32 %v2448, 8
  %v2489 = vmul.u32.u64.compose %v2488, %v2487
  %v2490 = vextract.low.u32 %v2489
  %v2491 = vextract.high.u32 %v2489
  %v2492 = vmul.u32.u64.compose %v2488, %v2483
  %v2493 = vextract.low.u32 %v2492
  %v2494 = vextract.high.u32 %v2492
  %v2495 = vmul.u32 %v2488, %v2479
  %v2496 = vadd.s32 %v2491, %v2493
  %vm2497 = vc.u32 %v2491, %v2493
  %v2498 = vadd.s32 %v2494, 1
  %v2499 = vsel %vm2497, %v2498, %v2494
  %v2500 = vadd.s32 %v2495, %v2499
  %v2501 = vadd.s32 %v2500, 536870912
  %v2502 = vshrl.u32 %v2501, 30
  %v2503 = vshll.u32 %v2502, 30
  %v2504 = vsub.s32 %v2500, %v2503
  %vm2505 = vcmp.lt.s32.totalorder %v2504, 0
  %v2506 = vsub.s32 0, %v2504
  %v2507 = vsel %vm2505, %v2506, %v2504
  %v2508 = vclz %v2507
  %v2509 = vsub.s32 %v2508, 2
  %vm2510 = vcmp.gt.s32.totalorder 0, %v2509
  %v2511 = vsel %vm2510, 0, %v2509
  %v2512 = vsub.s32 32, %v2511
  %v2513 = vshll.u32 %v2504, %v2511
  %v2514 = vshrl.u32 %v2496, %v2512
  %v2515 = vor.u32 %v2513, %v2514
  %v2516 = vsub.s32 4294967266, %v2511
  %v2517 = vadd.s32 %v2516, 127
  %v2518 = vshll.u32 %v2517, 23
  %v2519 = vor.u32 4788187, %v2518
  %v2520 = vand.u32 2147483647, %v2519
  %v2522 = vcvt.s32.f32 %v2515
  %v2523 = vmul.f32 %v2522, %v2520
  %v2524 = vxor.u32 %v2523, 2147483648
  %v2525 = vsel %vm2442, %v2524, %v2523
  %v2526 = vsub.s32 4, %v2502
  %v2527 = vsel %vm2442, %v2526, %v2502
  %v2528 = vsel %vm2441, %v1168, %v2525
  %v2529 = vsel %vm2441, 0, %v2527
  %v2530 = vcosq.f32.pop %v2528
  %v2531 = vsinq.f32.pop %v2528
  %vm2532 = vweird.f32 %v1168
  %v2533 = vand.u32 %v2529, 3
  %vm2534 = vcmp.lt.s32.totalorder %v2533, 2
  %vm2535 = vcmp.eq.s32.totalorder %v2533, 0
  %v2536 = vxor.u32 %v2531, 2147483648
  %v2537 = vsel %vm2535, %v2530, %v2536
  %vm2538 = vcmp.eq.s32.totalorder %v2533, 2
  %v2539 = vxor.u32 %v2530, 2147483648
  %v2540 = vsel %vm2538, %v2539, %v2531
  %v2541 = vsel %vm2534, %v2537, %v2540
  %v2542 = vsel %vm2532, nan, %v2541
  %v2543 = vand.u32 2147483647, %v1174
  %vm2544 = vcmp.le.f32.partialorder %v2543, 0.7853982
  %vm2545 = vcmp.lt.s32.totalorder %v1174, 0
  %v2546 = vand.u32 %v1174, 2139095040
  %v2547 = vshrl.u32 %v2546, 23
  %v2548 = vsub.s32 %v2547, 127
  %v2549 = vand.u32 2147483647, %v1174
  %v2550 = vand.u32 %v2549, 8388607
  %v2551 = vor.u32 %v2550, 8388608
  %v2552 = vsub.s32 0, %v2551
  %v2553 = vadd.s32 %v2548, 1
  %vm2554 = vcmp.gt.s32.totalorder %v2553, 0
  %v2555 = vsel %vm2554, %v2553, 0
  %v2556 = vshrl.u32 %v2555, 5
  %v2557 = vand.u32 %v2555, 31
  %v2558 = vsub.s32 32, %v2557
  %v2559 = vshrl.u32 683565275, %v2558
  %v2560 = vshll.u32 683565275, %v2557
  %v2561 = vshrl.u32 2475754826, %v2558
  %v2562 = vor.u32 %v2560, %v2561
  %v2563 = vshll.u32 2475754826, %v2557
  %v2564 = vshrl.u32 2131351028, %v2558
  %v2565 = vor.u32 %v2563, %v2564
  %v2566 = vshll.u32 2131351028, %v2557
  %v2567 = vshrl.u32 2102212464, %v2558
  %v2568 = vor.u32 %v2566, %v2567
  %v2569 = vshll.u32 2102212464, %v2557
  %v2570 = vshrl.u32 920167782, %v2558
  %v2571 = vor.u32 %v2569, %v2570
  %v2572 = vshll.u32 920167782, %v2557
  %v2573 = vshrl.u32 1326507024, %v2558
  %v2574 = vor.u32 %v2572, %v2573
  %vm2575 = vcmp.lt.s32.totalorder %v2556, 1
  %vm2576 = vcmp.lt.s32.totalorder %v2556, 2
  %vm2577 = vcmp.lt.s32.totalorder %v2556, 3
  %vm2578 = vcmp.lt.s32.totalorder %v2556, 4
  %v2579 = vsel %vm2575, %v2559, %v2562
  %v2580 = vsel %vm2578, %v2568, 2102212464
  %v2581 = vsel %vm2577, %v2565, %v2580
  %v2582 = vsel %vm2576, %v2579, %v2581
  %v2583 = vsel %vm2575, %v2562, %v2565
  %v2584 = vsel %vm2578, %v2571, 920167782
  %v2585 = vsel %vm2577, %v2568, %v2584
  %v2586 = vsel %vm2576, %v2583, %v2585
  %v2587 = vsel %vm2575, %v2565, %v2568
  %v2588 = vsel %vm2578, %v2574, 1326507024
  %v2589 = vsel %vm2577, %v2571, %v2588
  %v2590 = vsel %vm2576, %v2587, %v2589
  %v2591 = vshll.u32 %v2551, 8
  %v2592 = vmul.u32.u64.compose %v2591, %v2590
  %v2593 = vextract.low.u32 %v2592
  %v2594 = vextract.high.u32 %v2592
  %v2595 = vmul.u32.u64.compose %v2591, %v2586
  %v2596 = vextract.low.u32 %v2595
  %v2597 = vextract.high.u32 %v2595
  %v2598 = vmul.u32 %v2591, %v2582
  %v2599 = vadd.s32 %v2594, %v2596
  %vm2600 = vc.u32 %v2594, %v2596
  %v2601 = vadd.s32 %v2597, 1
  %v2602 = vsel %vm2600, %v2601, %v2597
  %v2603 = vadd.s32 %v2598, %v2602
  %v2604 = vadd.s32 %v2603, 536870912
  %v2605 = vshrl.u32 %v2604, 30
  %v2606 = vshll.u32 %v2605, 30
  %v2607 = vsub.s32 %v2603, %v2606
  %vm2608 = vcmp.lt.s32.totalorder %v2607, 0
  %v2609 = vsub.s32 0, %v2607
  %v2610 = vsel %vm2608, %v2609, %v2607
  %v2611 = vclz %v2610
  %v2612 = vsub.s32 %v2611, 2
  %vm2613 = vcmp.gt.s32.totalorder 0, %v2612
  %v2614 = vsel %vm2613, 0, %v2612
  %v2615 = vsub.s32 32, %v2614
  %v2616 = vshll.u32 %v2607, %v2614
  %v2617 = vshrl.u32 %v2599, %v2615
  %v2618 = vor.u32 %v2616, %v2617
  %v2619 = vsub.s32 4294967266, %v2614
  %v2620 = vadd.s32 %v2619, 127
  %v2621 = vshll.u32 %v2620, 23
  %v2622 = vor.u32 4788187, %v2621
  %v2623 = vand.u32 2147483647, %v2622
  %v2625 = vcvt.s32.f32 %v2618
  %v2626 = vmul.f32 %v2625, %v2623
  %v2627 = vxor.u32 %v2626, 2147483648
  %v2628 = vsel %vm2545, %v2627, %v2626
  %v2629 = vsub.s32 4, %v2605
  %v2630 = vsel %vm2545, %v2629, %v2605
  %v2631 = vsel %vm2544, %v1174, %v2628
  %v2632 = vsel %vm2544, 0, %v2630
  %v2633 = vcosq.f32.pop %v2631
  %v2634 = vsinq.f32.pop %v2631
  %vm2635 = vweird.f32 %v1174
  %v2636 = vand.u32 %v2632, 3
  %vm2637 = vcmp.lt.s32.totalorder %v2636, 2
  %vm2638 = vcmp.eq.s32.totalorder %v2636, 0
  %v2639 = vxor.u32 %v2634, 2147483648
  %v2640 = vsel %vm2638, %v2633, %v2639
  %vm2641 = vcmp.eq.s32.totalorder %v2636, 2
  %v2642 = vxor.u32 %v2633, 2147483648
  %v2643 = vsel %vm2641, %v2642, %v2634
  %v2644 = vsel %vm2637, %v2640, %v2643
  %v2645 = vsel %vm2635, nan, %v2644
  %v2646 = vand.u32 2147483647, %v1180
  %vm2647 = vcmp.le.f32.partialorder %v2646, 0.7853982
  %vm2648 = vcmp.lt.s32.totalorder %v1180, 0
  %v2649 = vand.u32 %v1180, 2139095040
  %v2650 = vshrl.u32 %v2649, 23
  %v2651 = vsub.s32 %v2650, 127
  %v2652 = vand.u32 2147483647, %v1180
  %v2653 = vand.u32 %v2652, 8388607
  %v2654 = vor.u32 %v2653, 8388608
  %v2655 = vsub.s32 0, %v2654
  %v2656 = vadd.s32 %v2651, 1
  %vm2657 = vcmp.gt.s32.totalorder %v2656, 0
  %v2658 = vsel %vm2657, %v2656, 0
  %v2659 = vshrl.u32 %v2658, 5
  %v2660 = vand.u32 %v2658, 31
  %v2661 = vsub.s32 32, %v2660
  %v2662 = vshrl.u32 683565275, %v2661
  %v2663 = vshll.u32 683565275, %v2660
  %v2664 = vshrl.u32 2475754826, %v2661
  %v2665 = vor.u32 %v2663, %v2664
  %v2666 = vshll.u32 2475754826, %v2660
  %v2667 = vshrl.u32 2131351028, %v2661
  %v2668 = vor.u32 %v2666, %v2667
  %v2669 = vshll.u32 2131351028, %v2660
  %v2670 = vshrl.u32 2102212464, %v2661
  %v2671 = vor.u32 %v2669, %v2670
  %v2672 = vshll.u32 2102212464, %v2660
  %v2673 = vshrl.u32 920167782, %v2661
  %v2674 = vor.u32 %v2672, %v2673
  %v2675 = vshll.u32 920167782, %v2660
  %v2676 = vshrl.u32 1326507024, %v2661
  %v2677 = vor.u32 %v2675, %v2676
  %vm2678 = vcmp.lt.s32.totalorder %v2659, 1
  %vm2679 = vcmp.lt.s32.totalorder %v2659, 2
  %vm2680 = vcmp.lt.s32.totalorder %v2659, 3
  %vm2681 = vcmp.lt.s32.totalorder %v2659, 4
  %v2682 = vsel %vm2678, %v2662, %v2665
  %v2683 = vsel %vm2681, %v2671, 2102212464
  %v2684 = vsel %vm2680, %v2668, %v2683
  %v2685 = vsel %vm2679, %v2682, %v2684
  %v2686 = vsel %vm2678, %v2665, %v2668
  %v2687 = vsel %vm2681, %v2674, 920167782
  %v2688 = vsel %vm2680, %v2671, %v2687
  %v2689 = vsel %vm2679, %v2686, %v2688
  %v2690 = vsel %vm2678, %v2668, %v2671
  %v2691 = vsel %vm2681, %v2677, 1326507024
  %v2692 = vsel %vm2680, %v2674, %v2691
  %v2693 = vsel %vm2679, %v2690, %v2692
  %v2694 = vshll.u32 %v2654, 8
  %v2695 = vmul.u32.u64.compose %v2694, %v2693
  %v2696 = vextract.low.u32 %v2695
  %v2697 = vextract.high.u32 %v2695
  %v2698 = vmul.u32.u64.compose %v2694, %v2689
  %v2699 = vextract.low.u32 %v2698
  %v2700 = vextract.high.u32 %v2698
  %v2701 = vmul.u32 %v2694, %v2685
  %v2702 = vadd.s32 %v2697, %v2699
  %vm2703 = vc.u32 %v2697, %v2699
  %v2704 = vadd.s32 %v2700, 1
  %v2705 = vsel %vm2703, %v2704, %v2700
  %v2706 = vadd.s32 %v2701, %v2705
  %v2707 = vadd.s32 %v2706, 536870912
  %v2708 = vshrl.u32 %v2707, 30
  %v2709 = vshll.u32 %v2708, 30
  %v2710 = vsub.s32 %v2706, %v2709
  %vm2711 = vcmp.lt.s32.totalorder %v2710, 0
  %v2712 = vsub.s32 0, %v2710
  %v2713 = vsel %vm2711, %v2712, %v2710
  %v2714 = vclz %v2713
  %v2715 = vsub.s32 %v2714, 2
  %vm2716 = vcmp.gt.s32.totalorder 0, %v2715
  %v2717 = vsel %vm2716, 0, %v2715
  %v2718 = vsub.s32 32, %v2717
  %v2719 = vshll.u32 %v2710, %v2717
  %v2720 = vshrl.u32 %v2702, %v2718
  %v2721 = vor.u32 %v2719, %v2720
  %v2722 = vsub.s32 4294967266, %v2717
  %v2723 = vadd.s32 %v2722, 127
  %v2724 = vshll.u32 %v2723, 23
  %v2725 = vor.u32 4788187, %v2724
  %v2726 = vand.u32 2147483647, %v2725
  %v2728 = vcvt.s32.f32 %v2721
  %v2729 = vmul.f32 %v2728, %v2726
  %v2730 = vxor.u32 %v2729, 2147483648
  %v2731 = vsel %vm2648, %v2730, %v2729
  %v2732 = vsub.s32 4, %v2708
  %v2733 = vsel %vm2648, %v2732, %v2708
  %v2734 = vsel %vm2647, %v1180, %v2731
  %v2735 = vsel %vm2647, 0, %v2733
  %v2736 = vcosq.f32.pop %v2734
  %v2737 = vsinq.f32.pop %v2734
  %vm2738 = vweird.f32 %v1180
  %v2739 = vand.u32 %v2735, 3
  %vm2740 = vcmp.lt.s32.totalorder %v2739, 2
  %vm2741 = vcmp.eq.s32.totalorder %v2739, 0
  %v2742 = vxor.u32 %v2737, 2147483648
  %v2743 = vsel %vm2741, %v2736, %v2742
  %vm2744 = vcmp.eq.s32.totalorder %v2739, 2
  %v2745 = vxor.u32 %v2736, 2147483648
  %v2746 = vsel %vm2744, %v2745, %v2737
  %v2747 = vsel %vm2740, %v2743, %v2746
  %v2748 = vsel %vm2738, nan, %v2747
  %v2749 = vand.u32 2147483647, %v1186
  %vm2750 = vcmp.le.f32.partialorder %v2749, 0.7853982
  %vm2751 = vcmp.lt.s32.totalorder %v1186, 0
  %v2752 = vand.u32 %v1186, 2139095040
  %v2753 = vshrl.u32 %v2752, 23
  %v2754 = vsub.s32 %v2753, 127
  %v2755 = vand.u32 2147483647, %v1186
  %v2756 = vand.u32 %v2755, 8388607
  %v2757 = vor.u32 %v2756, 8388608
  %v2758 = vsub.s32 0, %v2757
  %v2759 = vadd.s32 %v2754, 1
  %vm2760 = vcmp.gt.s32.totalorder %v2759, 0
  %v2761 = vsel %vm2760, %v2759, 0
  %v2762 = vshrl.u32 %v2761, 5
  %v2763 = vand.u32 %v2761, 31
  %v2764 = vsub.s32 32, %v2763
  %v2765 = vshrl.u32 683565275, %v2764
  %v2766 = vshll.u32 683565275, %v2763
  %v2767 = vshrl.u32 2475754826, %v2764
  %v2768 = vor.u32 %v2766, %v2767
  %v2769 = vshll.u32 2475754826, %v2763
  %v2770 = vshrl.u32 2131351028, %v2764
  %v2771 = vor.u32 %v2769, %v2770
  %v2772 = vshll.u32 2131351028, %v2763
  %v2773 = vshrl.u32 2102212464, %v2764
  %v2774 = vor.u32 %v2772, %v2773
  %v2775 = vshll.u32 2102212464, %v2763
  %v2776 = vshrl.u32 920167782, %v2764
  %v2777 = vor.u32 %v2775, %v2776
  %v2778 = vshll.u32 920167782, %v2763
  %v2779 = vshrl.u32 1326507024, %v2764
  %v2780 = vor.u32 %v2778, %v2779
  %vm2781 = vcmp.lt.s32.totalorder %v2762, 1
  %vm2782 = vcmp.lt.s32.totalorder %v2762, 2
  %vm2783 = vcmp.lt.s32.totalorder %v2762, 3
  %vm2784 = vcmp.lt.s32.totalorder %v2762, 4
  %v2785 = vsel %vm2781, %v2765, %v2768
  %v2786 = vsel %vm2784, %v2774, 2102212464
  %v2787 = vsel %vm2783, %v2771, %v2786
  %v2788 = vsel %vm2782, %v2785, %v2787
  %v2789 = vsel %vm2781, %v2768, %v2771
  %v2790 = vsel %vm2784, %v2777, 920167782
  %v2791 = vsel %vm2783, %v2774, %v2790
  %v2792 = vsel %vm2782, %v2789, %v2791
  %v2793 = vsel %vm2781, %v2771, %v2774
  %v2794 = vsel %vm2784, %v2780, 1326507024
  %v2795 = vsel %vm2783, %v2777, %v2794
  %v2796 = vsel %vm2782, %v2793, %v2795
  %v2797 = vshll.u32 %v2757, 8
  %v2798 = vmul.u32.u64.compose %v2797, %v2796
  %v2799 = vextract.low.u32 %v2798
  %v2800 = vextract.high.u32 %v2798
  %v2801 = vmul.u32.u64.compose %v2797, %v2792
  %v2802 = vextract.low.u32 %v2801
  %v2803 = vextract.high.u32 %v2801
  %v2804 = vmul.u32 %v2797, %v2788
  %v2805 = vadd.s32 %v2800, %v2802
  %vm2806 = vc.u32 %v2800, %v2802
  %v2807 = vadd.s32 %v2803, 1
  %v2808 = vsel %vm2806, %v2807, %v2803
  %v2809 = vadd.s32 %v2804, %v2808
  %v2810 = vadd.s32 %v2809, 536870912
  %v2811 = vshrl.u32 %v2810, 30
  %v2812 = vshll.u32 %v2811, 30
  %v2813 = vsub.s32 %v2809, %v2812
  %vm2814 = vcmp.lt.s32.totalorder %v2813, 0
  %v2815 = vsub.s32 0, %v2813
  %v2816 = vsel %vm2814, %v2815, %v2813
  %v2817 = vclz %v2816
  %v2818 = vsub.s32 %v2817, 2
  %vm2819 = vcmp.gt.s32.totalorder 0, %v2818
  %v2820 = vsel %vm2819, 0, %v2818
  %v2821 = vsub.s32 32, %v2820
  %v2822 = vshll.u32 %v2813, %v2820
  %v2823 = vshrl.u32 %v2805, %v2821
  %v2824 = vor.u32 %v2822, %v2823
  %v2825 = vsub.s32 4294967266, %v2820
  %v2826 = vadd.s32 %v2825, 127
  %v2827 = vshll.u32 %v2826, 23
  %v2828 = vor.u32 4788187, %v2827
  %v2829 = vand.u32 2147483647, %v2828
  %v2831 = vcvt.s32.f32 %v2824
  %v2832 = vmul.f32 %v2831, %v2829
  %v2833 = vxor.u32 %v2832, 2147483648
  %v2834 = vsel %vm2751, %v2833, %v2832
  %v2835 = vsub.s32 4, %v2811
  %v2836 = vsel %vm2751, %v2835, %v2811
  %v2837 = vsel %vm2750, %v1186, %v2834
  %v2838 = vsel %vm2750, 0, %v2836
  %v2839 = vcosq.f32.pop %v2837
  %v2840 = vsinq.f32.pop %v2837
  %vm2841 = vweird.f32 %v1186
  %v2842 = vand.u32 %v2838, 3
  %vm2843 = vcmp.lt.s32.totalorder %v2842, 2
  %vm2844 = vcmp.eq.s32.totalorder %v2842, 0
  %v2845 = vxor.u32 %v2840, 2147483648
  %v2846 = vsel %vm2844, %v2839, %v2845
  %vm2847 = vcmp.eq.s32.totalorder %v2842, 2
  %v2848 = vxor.u32 %v2839, 2147483648
  %v2849 = vsel %vm2847, %v2848, %v2840
  %v2850 = vsel %vm2843, %v2846, %v2849
  %v2851 = vsel %vm2841, nan, %v2850
  %v2852 = vand.u32 2147483647, %v1096
  %vm2853 = vcmp.le.f32.partialorder %v2852, 0.7853982
  %vm2854 = vcmp.lt.s32.totalorder %v1096, 0
  %v2855 = vand.u32 %v1096, 2139095040
  %v2856 = vshrl.u32 %v2855, 23
  %v2857 = vsub.s32 %v2856, 127
  %v2858 = vand.u32 2147483647, %v1096
  %v2859 = vand.u32 %v2858, 8388607
  %v2860 = vor.u32 %v2859, 8388608
  %v2861 = vsub.s32 0, %v2860
  %v2862 = vadd.s32 %v2857, 1
  %vm2863 = vcmp.gt.s32.totalorder %v2862, 0
  %v2864 = vsel %vm2863, %v2862, 0
  %v2865 = vshrl.u32 %v2864, 5
  %v2866 = vand.u32 %v2864, 31
  %v2867 = vsub.s32 32, %v2866
  %v2868 = vshrl.u32 683565275, %v2867
  %v2869 = vshll.u32 683565275, %v2866
  %v2870 = vshrl.u32 2475754826, %v2867
  %v2871 = vor.u32 %v2869, %v2870
  %v2872 = vshll.u32 2475754826, %v2866
  %v2873 = vshrl.u32 2131351028, %v2867
  %v2874 = vor.u32 %v2872, %v2873
  %v2875 = vshll.u32 2131351028, %v2866
  %v2876 = vshrl.u32 2102212464, %v2867
  %v2877 = vor.u32 %v2875, %v2876
  %v2878 = vshll.u32 2102212464, %v2866
  %v2879 = vshrl.u32 920167782, %v2867
  %v2880 = vor.u32 %v2878, %v2879
  %v2881 = vshll.u32 920167782, %v2866
  %v2882 = vshrl.u32 1326507024, %v2867
  %v2883 = vor.u32 %v2881, %v2882
  %vm2884 = vcmp.lt.s32.totalorder %v2865, 1
  %vm2885 = vcmp.lt.s32.totalorder %v2865, 2
  %vm2886 = vcmp.lt.s32.totalorder %v2865, 3
  %vm2887 = vcmp.lt.s32.totalorder %v2865, 4
  %v2888 = vsel %vm2884, %v2868, %v2871
  %v2889 = vsel %vm2887, %v2877, 2102212464
  %v2890 = vsel %vm2886, %v2874, %v2889
  %v2891 = vsel %vm2885, %v2888, %v2890
  %v2892 = vsel %vm2884, %v2871, %v2874
  %v2893 = vsel %vm2887, %v2880, 920167782
  %v2894 = vsel %vm2886, %v2877, %v2893
  %v2895 = vsel %vm2885, %v2892, %v2894
  %v2896 = vsel %vm2884, %v2874, %v2877
  %v2897 = vsel %vm2887, %v2883, 1326507024
  %v2898 = vsel %vm2886, %v2880, %v2897
  %v2899 = vsel %vm2885, %v2896, %v2898
  %v2900 = vshll.u32 %v2860, 8
  %v2901 = vmul.u32.u64.compose %v2900, %v2899
  %v2902 = vextract.low.u32 %v2901
  %v2903 = vextract.high.u32 %v2901
  %v2904 = vmul.u32.u64.compose %v2900, %v2895
  %v2905 = vextract.low.u32 %v2904
  %v2906 = vextract.high.u32 %v2904
  %v2907 = vmul.u32 %v2900, %v2891
  %v2908 = vadd.s32 %v2903, %v2905
  %vm2909 = vc.u32 %v2903, %v2905
  %v2910 = vadd.s32 %v2906, 1
  %v2911 = vsel %vm2909, %v2910, %v2906
  %v2912 = vadd.s32 %v2907, %v2911
  %v2913 = vadd.s32 %v2912, 536870912
  %v2914 = vshrl.u32 %v2913, 30
  %v2915 = vshll.u32 %v2914, 30
  %v2916 = vsub.s32 %v2912, %v2915
  %vm2917 = vcmp.lt.s32.totalorder %v2916, 0
  %v2918 = vsub.s32 0, %v2916
  %v2919 = vsel %vm2917, %v2918, %v2916
  %v2920 = vclz %v2919
  %v2921 = vsub.s32 %v2920, 2
  %vm2922 = vcmp.gt.s32.totalorder 0, %v2921
  %v2923 = vsel %vm2922, 0, %v2921
  %v2924 = vsub.s32 32, %v2923
  %v2925 = vshll.u32 %v2916, %v2923
  %v2926 = vshrl.u32 %v2908, %v2924
  %v2927 = vor.u32 %v2925, %v2926
  %v2928 = vsub.s32 4294967266, %v2923
  %v2929 = vadd.s32 %v2928, 127
  %v2930 = vshll.u32 %v2929, 23
  %v2931 = vor.u32 4788187, %v2930
  %v2932 = vand.u32 2147483647, %v2931
  %v2934 = vcvt.s32.f32 %v2927
  %v2935 = vmul.f32 %v2934, %v2932
  %v2936 = vxor.u32 %v2935, 2147483648
  %v2937 = vsel %vm2854, %v2936, %v2935
  %v2938 = vsub.s32 4, %v2914
  %v2939 = vsel %vm2854, %v2938, %v2914
  %v2940 = vsel %vm2853, %v1096, %v2937
  %v2941 = vsel %vm2853, 0, %v2939
  %v2942 = vcosq.f32.pop %v2940
  %v2943 = vsinq.f32.pop %v2940
  %vm2944 = vweird.f32 %v1096
  %v2945 = vadd.s32 %v2941, 3
  %v2946 = vand.u32 %v2945, 3
  %vm2947 = vcmp.lt.s32.totalorder %v2946, 2
  %vm2948 = vcmp.eq.s32.totalorder %v2946, 0
  %v2949 = vxor.u32 %v2943, 2147483648
  %v2950 = vsel %vm2948, %v2942, %v2949
  %vm2951 = vcmp.eq.s32.totalorder %v2946, 2
  %v2952 = vxor.u32 %v2942, 2147483648
  %v2953 = vsel %vm2951, %v2952, %v2943
  %v2954 = vsel %vm2947, %v2950, %v2953
  %v2955 = vsel %vm2944, nan, %v2954
  %v2956 = vand.u32 2147483647, %v1102
  %vm2957 = vcmp.le.f32.partialorder %v2956, 0.7853982
  %vm2958 = vcmp.lt.s32.totalorder %v1102, 0
  %v2959 = vand.u32 %v1102, 2139095040
  %v2960 = vshrl.u32 %v2959, 23
  %v2961 = vsub.s32 %v2960, 127
  %v2962 = vand.u32 2147483647, %v1102
  %v2963 = vand.u32 %v2962, 8388607
  %v2964 = vor.u32 %v2963, 8388608
  %v2965 = vsub.s32 0, %v2964
  %v2966 = vadd.s32 %v2961, 1
  %vm2967 = vcmp.gt.s32.totalorder %v2966, 0
  %v2968 = vsel %vm2967, %v2966, 0
  %v2969 = vshrl.u32 %v2968, 5
  %v2970 = vand.u32 %v2968, 31
  %v2971 = vsub.s32 32, %v2970
  %v2972 = vshrl.u32 683565275, %v2971
  %v2973 = vshll.u32 683565275, %v2970
  %v2974 = vshrl.u32 2475754826, %v2971
  %v2975 = vor.u32 %v2973, %v2974
  %v2976 = vshll.u32 2475754826, %v2970
  %v2977 = vshrl.u32 2131351028, %v2971
  %v2978 = vor.u32 %v2976, %v2977
  %v2979 = vshll.u32 2131351028, %v2970
  %v2980 = vshrl.u32 2102212464, %v2971
  %v2981 = vor.u32 %v2979, %v2980
  %v2982 = vshll.u32 2102212464, %v2970
  %v2983 = vshrl.u32 920167782, %v2971
  %v2984 = vor.u32 %v2982, %v2983
  %v2985 = vshll.u32 920167782, %v2970
  %v2986 = vshrl.u32 1326507024, %v2971
  %v2987 = vor.u32 %v2985, %v2986
  %vm2988 = vcmp.lt.s32.totalorder %v2969, 1
  %vm2989 = vcmp.lt.s32.totalorder %v2969, 2
  %vm2990 = vcmp.lt.s32.totalorder %v2969, 3
  %vm2991 = vcmp.lt.s32.totalorder %v2969, 4
  %v2992 = vsel %vm2988, %v2972, %v2975
  %v2993 = vsel %vm2991, %v2981, 2102212464
  %v2994 = vsel %vm2990, %v2978, %v2993
  %v2995 = vsel %vm2989, %v2992, %v2994
  %v2996 = vsel %vm2988, %v2975, %v2978
  %v2997 = vsel %vm2991, %v2984, 920167782
  %v2998 = vsel %vm2990, %v2981, %v2997
  %v2999 = vsel %vm2989, %v2996, %v2998
  %v3000 = vsel %vm2988, %v2978, %v2981
  %v3001 = vsel %vm2991, %v2987, 1326507024
  %v3002 = vsel %vm2990, %v2984, %v3001
  %v3003 = vsel %vm2989, %v3000, %v3002
  %v3004 = vshll.u32 %v2964, 8
  %v3005 = vmul.u32.u64.compose %v3004, %v3003
  %v3006 = vextract.low.u32 %v3005
  %v3007 = vextract.high.u32 %v3005
  %v3008 = vmul.u32.u64.compose %v3004, %v2999
  %v3009 = vextract.low.u32 %v3008
  %v3010 = vextract.high.u32 %v3008
  %v3011 = vmul.u32 %v3004, %v2995
  %v3012 = vadd.s32 %v3007, %v3009
  %vm3013 = vc.u32 %v3007, %v3009
  %v3014 = vadd.s32 %v3010, 1
  %v3015 = vsel %vm3013, %v3014, %v3010
  %v3016 = vadd.s32 %v3011, %v3015
  %v3017 = vadd.s32 %v3016, 536870912
  %v3018 = vshrl.u32 %v3017, 30
  %v3019 = vshll.u32 %v3018, 30
  %v3020 = vsub.s32 %v3016, %v3019
  %vm3021 = vcmp.lt.s32.totalorder %v3020, 0
  %v3022 = vsub.s32 0, %v3020
  %v3023 = vsel %vm3021, %v3022, %v3020
  %v3024 = vclz %v3023
  %v3025 = vsub.s32 %v3024, 2
  %vm3026 = vcmp.gt.s32.totalorder 0, %v3025
  %v3027 = vsel %vm3026, 0, %v3025
  %v3028 = vsub.s32 32, %v3027
  %v3029 = vshll.u32 %v3020, %v3027
  %v3030 = vshrl.u32 %v3012, %v3028
  %v3031 = vor.u32 %v3029, %v3030
  %v3032 = vsub.s32 4294967266, %v3027
  %v3033 = vadd.s32 %v3032, 127
  %v3034 = vshll.u32 %v3033, 23
  %v3035 = vor.u32 4788187, %v3034
  %v3036 = vand.u32 2147483647, %v3035
  %v3038 = vcvt.s32.f32 %v3031
  %v3039 = vmul.f32 %v3038, %v3036
  %v3040 = vxor.u32 %v3039, 2147483648
  %v3041 = vsel %vm2958, %v3040, %v3039
  %v3042 = vsub.s32 4, %v3018
  %v3043 = vsel %vm2958, %v3042, %v3018
  %v3044 = vsel %vm2957, %v1102, %v3041
  %v3045 = vsel %vm2957, 0, %v3043
  %v3046 = vcosq.f32.pop %v3044
  %v3047 = vsinq.f32.pop %v3044
  %vm3048 = vweird.f32 %v1102
  %v3049 = vadd.s32 %v3045, 3
  %v3050 = vand.u32 %v3049, 3
  %vm3051 = vcmp.lt.s32.totalorder %v3050, 2
  %vm3052 = vcmp.eq.s32.totalorder %v3050, 0
  %v3053 = vxor.u32 %v3047, 2147483648
  %v3054 = vsel %vm3052, %v3046, %v3053
  %vm3055 = vcmp.eq.s32.totalorder %v3050, 2
  %v3056 = vxor.u32 %v3046, 2147483648
  %v3057 = vsel %vm3055, %v3056, %v3047
  %v3058 = vsel %vm3051, %v3054, %v3057
  %v3059 = vsel %vm3048, nan, %v3058
  %v3060 = vand.u32 2147483647, %v1108
  %vm3061 = vcmp.le.f32.partialorder %v3060, 0.7853982
  %vm3062 = vcmp.lt.s32.totalorder %v1108, 0
  %v3063 = vand.u32 %v1108, 2139095040
  %v3064 = vshrl.u32 %v3063, 23
  %v3065 = vsub.s32 %v3064, 127
  %v3066 = vand.u32 2147483647, %v1108
  %v3067 = vand.u32 %v3066, 8388607
  %v3068 = vor.u32 %v3067, 8388608
  %v3069 = vsub.s32 0, %v3068
  %v3070 = vadd.s32 %v3065, 1
  %vm3071 = vcmp.gt.s32.totalorder %v3070, 0
  %v3072 = vsel %vm3071, %v3070, 0
  %v3073 = vshrl.u32 %v3072, 5
  %v3074 = vand.u32 %v3072, 31
  %v3075 = vsub.s32 32, %v3074
  %v3076 = vshrl.u32 683565275, %v3075
  %v3077 = vshll.u32 683565275, %v3074
  %v3078 = vshrl.u32 2475754826, %v3075
  %v3079 = vor.u32 %v3077, %v3078
  %v3080 = vshll.u32 2475754826, %v3074
  %v3081 = vshrl.u32 2131351028, %v3075
  %v3082 = vor.u32 %v3080, %v3081
  %v3083 = vshll.u32 2131351028, %v3074
  %v3084 = vshrl.u32 2102212464, %v3075
  %v3085 = vor.u32 %v3083, %v3084
  %v3086 = vshll.u32 2102212464, %v3074
  %v3087 = vshrl.u32 920167782, %v3075
  %v3088 = vor.u32 %v3086, %v3087
  %v3089 = vshll.u32 920167782, %v3074
  %v3090 = vshrl.u32 1326507024, %v3075
  %v3091 = vor.u32 %v3089, %v3090
  %vm3092 = vcmp.lt.s32.totalorder %v3073, 1
  %vm3093 = vcmp.lt.s32.totalorder %v3073, 2
  %vm3094 = vcmp.lt.s32.totalorder %v3073, 3
  %vm3095 = vcmp.lt.s32.totalorder %v3073, 4
  %v3096 = vsel %vm3092, %v3076, %v3079
  %v3097 = vsel %vm3095, %v3085, 2102212464
  %v3098 = vsel %vm3094, %v3082, %v3097
  %v3099 = vsel %vm3093, %v3096, %v3098
  %v3100 = vsel %vm3092, %v3079, %v3082
  %v3101 = vsel %vm3095, %v3088, 920167782
  %v3102 = vsel %vm3094, %v3085, %v3101
  %v3103 = vsel %vm3093, %v3100, %v3102
  %v3104 = vsel %vm3092, %v3082, %v3085
  %v3105 = vsel %vm3095, %v3091, 1326507024
  %v3106 = vsel %vm3094, %v3088, %v3105
  %v3107 = vsel %vm3093, %v3104, %v3106
  %v3108 = vshll.u32 %v3068, 8
  %v3109 = vmul.u32.u64.compose %v3108, %v3107
  %v3110 = vextract.low.u32 %v3109
  %v3111 = vextract.high.u32 %v3109
  %v3112 = vmul.u32.u64.compose %v3108, %v3103
  %v3113 = vextract.low.u32 %v3112
  %v3114 = vextract.high.u32 %v3112
  %v3115 = vmul.u32 %v3108, %v3099
  %v3116 = vadd.s32 %v3111, %v3113
  %vm3117 = vc.u32 %v3111, %v3113
  %v3118 = vadd.s32 %v3114, 1
  %v3119 = vsel %vm3117, %v3118, %v3114
  %v3120 = vadd.s32 %v3115, %v3119
  %v3121 = vadd.s32 %v3120, 536870912
  %v3122 = vshrl.u32 %v3121, 30
  %v3123 = vshll.u32 %v3122, 30
  %v3124 = vsub.s32 %v3120, %v3123
  %vm3125 = vcmp.lt.s32.totalorder %v3124, 0
  %v3126 = vsub.s32 0, %v3124
  %v3127 = vsel %vm3125, %v3126, %v3124
  %v3128 = vclz %v3127
  %v3129 = vsub.s32 %v3128, 2
  %vm3130 = vcmp.gt.s32.totalorder 0, %v3129
  %v3131 = vsel %vm3130, 0, %v3129
  %v3132 = vsub.s32 32, %v3131
  %v3133 = vshll.u32 %v3124, %v3131
  %v3134 = vshrl.u32 %v3116, %v3132
  %v3135 = vor.u32 %v3133, %v3134
  %v3136 = vsub.s32 4294967266, %v3131
  %v3137 = vadd.s32 %v3136, 127
  %v3138 = vshll.u32 %v3137, 23
  %v3139 = vor.u32 4788187, %v3138
  %v3140 = vand.u32 2147483647, %v3139
  %v3142 = vcvt.s32.f32 %v3135
  %v3143 = vmul.f32 %v3142, %v3140
  %v3144 = vxor.u32 %v3143, 2147483648
  %v3145 = vsel %vm3062, %v3144, %v3143
  %v3146 = vsub.s32 4, %v3122
  %v3147 = vsel %vm3062, %v3146, %v3122
  %v3148 = vsel %vm3061, %v1108, %v3145
  %v3149 = vsel %vm3061, 0, %v3147
  %v3150 = vcosq.f32.pop %v3148
  %v3151 = vsinq.f32.pop %v3148
  %vm3152 = vweird.f32 %v1108
  %v3153 = vadd.s32 %v3149, 3
  %v3154 = vand.u32 %v3153, 3
  %vm3155 = vcmp.lt.s32.totalorder %v3154, 2
  %vm3156 = vcmp.eq.s32.totalorder %v3154, 0
  %v3157 = vxor.u32 %v3151, 2147483648
  %v3158 = vsel %vm3156, %v3150, %v3157
  %vm3159 = vcmp.eq.s32.totalorder %v3154, 2
  %v3160 = vxor.u32 %v3150, 2147483648
  %v3161 = vsel %vm3159, %v3160, %v3151
  %v3162 = vsel %vm3155, %v3158, %v3161
  %v3163 = vsel %vm3152, nan, %v3162
  %v3164 = vand.u32 2147483647, %v1114
  %vm3165 = vcmp.le.f32.partialorder %v3164, 0.7853982
  %vm3166 = vcmp.lt.s32.totalorder %v1114, 0
  %v3167 = vand.u32 %v1114, 2139095040
  %v3168 = vshrl.u32 %v3167, 23
  %v3169 = vsub.s32 %v3168, 127
  %v3170 = vand.u32 2147483647, %v1114
  %v3171 = vand.u32 %v3170, 8388607
  %v3172 = vor.u32 %v3171, 8388608
  %v3173 = vsub.s32 0, %v3172
  %v3174 = vadd.s32 %v3169, 1
  %vm3175 = vcmp.gt.s32.totalorder %v3174, 0
  %v3176 = vsel %vm3175, %v3174, 0
  %v3177 = vshrl.u32 %v3176, 5
  %v3178 = vand.u32 %v3176, 31
  %v3179 = vsub.s32 32, %v3178
  %v3180 = vshrl.u32 683565275, %v3179
  %v3181 = vshll.u32 683565275, %v3178
  %v3182 = vshrl.u32 2475754826, %v3179
  %v3183 = vor.u32 %v3181, %v3182
  %v3184 = vshll.u32 2475754826, %v3178
  %v3185 = vshrl.u32 2131351028, %v3179
  %v3186 = vor.u32 %v3184, %v3185
  %v3187 = vshll.u32 2131351028, %v3178
  %v3188 = vshrl.u32 2102212464, %v3179
  %v3189 = vor.u32 %v3187, %v3188
  %v3190 = vshll.u32 2102212464, %v3178
  %v3191 = vshrl.u32 920167782, %v3179
  %v3192 = vor.u32 %v3190, %v3191
  %v3193 = vshll.u32 920167782, %v3178
  %v3194 = vshrl.u32 1326507024, %v3179
  %v3195 = vor.u32 %v3193, %v3194
  %vm3196 = vcmp.lt.s32.totalorder %v3177, 1
  %vm3197 = vcmp.lt.s32.totalorder %v3177, 2
  %vm3198 = vcmp.lt.s32.totalorder %v3177, 3
  %vm3199 = vcmp.lt.s32.totalorder %v3177, 4
  %v3200 = vsel %vm3196, %v3180, %v3183
  %v3201 = vsel %vm3199, %v3189, 2102212464
  %v3202 = vsel %vm3198, %v3186, %v3201
  %v3203 = vsel %vm3197, %v3200, %v3202
  %v3204 = vsel %vm3196, %v3183, %v3186
  %v3205 = vsel %vm3199, %v3192, 920167782
  %v3206 = vsel %vm3198, %v3189, %v3205
  %v3207 = vsel %vm3197, %v3204, %v3206
  %v3208 = vsel %vm3196, %v3186, %v3189
  %v3209 = vsel %vm3199, %v3195, 1326507024
  %v3210 = vsel %vm3198, %v3192, %v3209
  %v3211 = vsel %vm3197, %v3208, %v3210
  %v3212 = vshll.u32 %v3172, 8
  %v3213 = vmul.u32.u64.compose %v3212, %v3211
  %v3214 = vextract.low.u32 %v3213
  %v3215 = vextract.high.u32 %v3213
  %v3216 = vmul.u32.u64.compose %v3212, %v3207
  %v3217 = vextract.low.u32 %v3216
  %v3218 = vextract.high.u32 %v3216
  %v3219 = vmul.u32 %v3212, %v3203
  %v3220 = vadd.s32 %v3215, %v3217
  %vm3221 = vc.u32 %v3215, %v3217
  %v3222 = vadd.s32 %v3218, 1
  %v3223 = vsel %vm3221, %v3222, %v3218
  %v3224 = vadd.s32 %v3219, %v3223
  %v3225 = vadd.s32 %v3224, 536870912
  %v3226 = vshrl.u32 %v3225, 30
  %v3227 = vshll.u32 %v3226, 30
  %v3228 = vsub.s32 %v3224, %v3227
  %vm3229 = vcmp.lt.s32.totalorder %v3228, 0
  %v3230 = vsub.s32 0, %v3228
  %v3231 = vsel %vm3229, %v3230, %v3228
  %v3232 = vclz %v3231
  %v3233 = vsub.s32 %v3232, 2
  %vm3234 = vcmp.gt.s32.totalorder 0, %v3233
  %v3235 = vsel %vm3234, 0, %v3233
  %v3236 = vsub.s32 32, %v3235
  %v3237 = vshll.u32 %v3228, %v3235
  %v3238 = vshrl.u32 %v3220, %v3236
  %v3239 = vor.u32 %v3237, %v3238
  %v3240 = vsub.s32 4294967266, %v3235
  %v3241 = vadd.s32 %v3240, 127
  %v3242 = vshll.u32 %v3241, 23
  %v3243 = vor.u32 4788187, %v3242
  %v3244 = vand.u32 2147483647, %v3243
  %v3246 = vcvt.s32.f32 %v3239
  %v3247 = vmul.f32 %v3246, %v3244
  %v3248 = vxor.u32 %v3247, 2147483648
  %v3249 = vsel %vm3166, %v3248, %v3247
  %v3250 = vsub.s32 4, %v3226
  %v3251 = vsel %vm3166, %v3250, %v3226
  %v3252 = vsel %vm3165, %v1114, %v3249
  %v3253 = vsel %vm3165, 0, %v3251
  %v3254 = vcosq.f32.pop %v3252
  %v3255 = vsinq.f32.pop %v3252
  %vm3256 = vweird.f32 %v1114
  %v3257 = vadd.s32 %v3253, 3
  %v3258 = vand.u32 %v3257, 3
  %vm3259 = vcmp.lt.s32.totalorder %v3258, 2
  %vm3260 = vcmp.eq.s32.totalorder %v3258, 0
  %v3261 = vxor.u32 %v3255, 2147483648
  %v3262 = vsel %vm3260, %v3254, %v3261
  %vm3263 = vcmp.eq.s32.totalorder %v3258, 2
  %v3264 = vxor.u32 %v3254, 2147483648
  %v3265 = vsel %vm3263, %v3264, %v3255
  %v3266 = vsel %vm3259, %v3262, %v3265
  %v3267 = vsel %vm3256, nan, %v3266
  %v3268 = vand.u32 2147483647, %v1120
  %vm3269 = vcmp.le.f32.partialorder %v3268, 0.7853982
  %vm3270 = vcmp.lt.s32.totalorder %v1120, 0
  %v3271 = vand.u32 %v1120, 2139095040
  %v3272 = vshrl.u32 %v3271, 23
  %v3273 = vsub.s32 %v3272, 127
  %v3274 = vand.u32 2147483647, %v1120
  %v3275 = vand.u32 %v3274, 8388607
  %v3276 = vor.u32 %v3275, 8388608
  %v3277 = vsub.s32 0, %v3276
  %v3278 = vadd.s32 %v3273, 1
  %vm3279 = vcmp.gt.s32.totalorder %v3278, 0
  %v3280 = vsel %vm3279, %v3278, 0
  %v3281 = vshrl.u32 %v3280, 5
  %v3282 = vand.u32 %v3280, 31
  %v3283 = vsub.s32 32, %v3282
  %v3284 = vshrl.u32 683565275, %v3283
  %v3285 = vshll.u32 683565275, %v3282
  %v3286 = vshrl.u32 2475754826, %v3283
  %v3287 = vor.u32 %v3285, %v3286
  %v3288 = vshll.u32 2475754826, %v3282
  %v3289 = vshrl.u32 2131351028, %v3283
  %v3290 = vor.u32 %v3288, %v3289
  %v3291 = vshll.u32 2131351028, %v3282
  %v3292 = vshrl.u32 2102212464, %v3283
  %v3293 = vor.u32 %v3291, %v3292
  %v3294 = vshll.u32 2102212464, %v3282
  %v3295 = vshrl.u32 920167782, %v3283
  %v3296 = vor.u32 %v3294, %v3295
  %v3297 = vshll.u32 920167782, %v3282
  %v3298 = vshrl.u32 1326507024, %v3283
  %v3299 = vor.u32 %v3297, %v3298
  %vm3300 = vcmp.lt.s32.totalorder %v3281, 1
  %vm3301 = vcmp.lt.s32.totalorder %v3281, 2
  %vm3302 = vcmp.lt.s32.totalorder %v3281, 3
  %vm3303 = vcmp.lt.s32.totalorder %v3281, 4
  %v3304 = vsel %vm3300, %v3284, %v3287
  %v3305 = vsel %vm3303, %v3293, 2102212464
  %v3306 = vsel %vm3302, %v3290, %v3305
  %v3307 = vsel %vm3301, %v3304, %v3306
  %v3308 = vsel %vm3300, %v3287, %v3290
  %v3309 = vsel %vm3303, %v3296, 920167782
  %v3310 = vsel %vm3302, %v3293, %v3309
  %v3311 = vsel %vm3301, %v3308, %v3310
  %v3312 = vsel %vm3300, %v3290, %v3293
  %v3313 = vsel %vm3303, %v3299, 1326507024
  %v3314 = vsel %vm3302, %v3296, %v3313
  %v3315 = vsel %vm3301, %v3312, %v3314
  %v3316 = vshll.u32 %v3276, 8
  %v3317 = vmul.u32.u64.compose %v3316, %v3315
  %v3318 = vextract.low.u32 %v3317
  %v3319 = vextract.high.u32 %v3317
  %v3320 = vmul.u32.u64.compose %v3316, %v3311
  %v3321 = vextract.low.u32 %v3320
  %v3322 = vextract.high.u32 %v3320
  %v3323 = vmul.u32 %v3316, %v3307
  %v3324 = vadd.s32 %v3319, %v3321
  %vm3325 = vc.u32 %v3319, %v3321
  %v3326 = vadd.s32 %v3322, 1
  %v3327 = vsel %vm3325, %v3326, %v3322
  %v3328 = vadd.s32 %v3323, %v3327
  %v3329 = vadd.s32 %v3328, 536870912
  %v3330 = vshrl.u32 %v3329, 30
  %v3331 = vshll.u32 %v3330, 30
  %v3332 = vsub.s32 %v3328, %v3331
  %vm3333 = vcmp.lt.s32.totalorder %v3332, 0
  %v3334 = vsub.s32 0, %v3332
  %v3335 = vsel %vm3333, %v3334, %v3332
  %v3336 = vclz %v3335
  %v3337 = vsub.s32 %v3336, 2
  %vm3338 = vcmp.gt.s32.totalorder 0, %v3337
  %v3339 = vsel %vm3338, 0, %v3337
  %v3340 = vsub.s32 32, %v3339
  %v3341 = vshll.u32 %v3332, %v3339
  %v3342 = vshrl.u32 %v3324, %v3340
  %v3343 = vor.u32 %v3341, %v3342
  %v3344 = vsub.s32 4294967266, %v3339
  %v3345 = vadd.s32 %v3344, 127
  %v3346 = vshll.u32 %v3345, 23
  %v3347 = vor.u32 4788187, %v3346
  %v3348 = vand.u32 2147483647, %v3347
  %v3350 = vcvt.s32.f32 %v3343
  %v3351 = vmul.f32 %v3350, %v3348
  %v3352 = vxor.u32 %v3351, 2147483648
  %v3353 = vsel %vm3270, %v3352, %v3351
  %v3354 = vsub.s32 4, %v3330
  %v3355 = vsel %vm3270, %v3354, %v3330
  %v3356 = vsel %vm3269, %v1120, %v3353
  %v3357 = vsel %vm3269, 0, %v3355
  %v3358 = vcosq.f32.pop %v3356
  %v3359 = vsinq.f32.pop %v3356
  %vm3360 = vweird.f32 %v1120
  %v3361 = vadd.s32 %v3357, 3
  %v3362 = vand.u32 %v3361, 3
  %vm3363 = vcmp.lt.s32.totalorder %v3362, 2
  %vm3364 = vcmp.eq.s32.totalorder %v3362, 0
  %v3365 = vxor.u32 %v3359, 2147483648
  %v3366 = vsel %vm3364, %v3358, %v3365
  %vm3367 = vcmp.eq.s32.totalorder %v3362, 2
  %v3368 = vxor.u32 %v3358, 2147483648
  %v3369 = vsel %vm3367, %v3368, %v3359
  %v3370 = vsel %vm3363, %v3366, %v3369
  %v3371 = vsel %vm3360, nan, %v3370
  %v3372 = vand.u32 2147483647, %v1126
  %vm3373 = vcmp.le.f32.partialorder %v3372, 0.7853982
  %vm3374 = vcmp.lt.s32.totalorder %v1126, 0
  %v3375 = vand.u32 %v1126, 2139095040
  %v3376 = vshrl.u32 %v3375, 23
  %v3377 = vsub.s32 %v3376, 127
  %v3378 = vand.u32 2147483647, %v1126
  %v3379 = vand.u32 %v3378, 8388607
  %v3380 = vor.u32 %v3379, 8388608
  %v3381 = vsub.s32 0, %v3380
  %v3382 = vadd.s32 %v3377, 1
  %vm3383 = vcmp.gt.s32.totalorder %v3382, 0
  %v3384 = vsel %vm3383, %v3382, 0
  %v3385 = vshrl.u32 %v3384, 5
  %v3386 = vand.u32 %v3384, 31
  %v3387 = vsub.s32 32, %v3386
  %v3388 = vshrl.u32 683565275, %v3387
  %v3389 = vshll.u32 683565275, %v3386
  %v3390 = vshrl.u32 2475754826, %v3387
  %v3391 = vor.u32 %v3389, %v3390
  %v3392 = vshll.u32 2475754826, %v3386
  %v3393 = vshrl.u32 2131351028, %v3387
  %v3394 = vor.u32 %v3392, %v3393
  %v3395 = vshll.u32 2131351028, %v3386
  %v3396 = vshrl.u32 2102212464, %v3387
  %v3397 = vor.u32 %v3395, %v3396
  %v3398 = vshll.u32 2102212464, %v3386
  %v3399 = vshrl.u32 920167782, %v3387
  %v3400 = vor.u32 %v3398, %v3399
  %v3401 = vshll.u32 920167782, %v3386
  %v3402 = vshrl.u32 1326507024, %v3387
  %v3403 = vor.u32 %v3401, %v3402
  %vm3404 = vcmp.lt.s32.totalorder %v3385, 1
  %vm3405 = vcmp.lt.s32.totalorder %v3385, 2
  %vm3406 = vcmp.lt.s32.totalorder %v3385, 3
  %vm3407 = vcmp.lt.s32.totalorder %v3385, 4
  %v3408 = vsel %vm3404, %v3388, %v3391
  %v3409 = vsel %vm3407, %v3397, 2102212464
  %v3410 = vsel %vm3406, %v3394, %v3409
  %v3411 = vsel %vm3405, %v3408, %v3410
  %v3412 = vsel %vm3404, %v3391, %v3394
  %v3413 = vsel %vm3407, %v3400, 920167782
  %v3414 = vsel %vm3406, %v3397, %v3413
  %v3415 = vsel %vm3405, %v3412, %v3414
  %v3416 = vsel %vm3404, %v3394, %v3397
  %v3417 = vsel %vm3407, %v3403, 1326507024
  %v3418 = vsel %vm3406, %v3400, %v3417
  %v3419 = vsel %vm3405, %v3416, %v3418
  %v3420 = vshll.u32 %v3380, 8
  %v3421 = vmul.u32.u64.compose %v3420, %v3419
  %v3422 = vextract.low.u32 %v3421
  %v3423 = vextract.high.u32 %v3421
  %v3424 = vmul.u32.u64.compose %v3420, %v3415
  %v3425 = vextract.low.u32 %v3424
  %v3426 = vextract.high.u32 %v3424
  %v3427 = vmul.u32 %v3420, %v3411
  %v3428 = vadd.s32 %v3423, %v3425
  %vm3429 = vc.u32 %v3423, %v3425
  %v3430 = vadd.s32 %v3426, 1
  %v3431 = vsel %vm3429, %v3430, %v3426
  %v3432 = vadd.s32 %v3427, %v3431
  %v3433 = vadd.s32 %v3432, 536870912
  %v3434 = vshrl.u32 %v3433, 30
  %v3435 = vshll.u32 %v3434, 30
  %v3436 = vsub.s32 %v3432, %v3435
  %vm3437 = vcmp.lt.s32.totalorder %v3436, 0
  %v3438 = vsub.s32 0, %v3436
  %v3439 = vsel %vm3437, %v3438, %v3436
  %v3440 = vclz %v3439
  %v3441 = vsub.s32 %v3440, 2
  %vm3442 = vcmp.gt.s32.totalorder 0, %v3441
  %v3443 = vsel %vm3442, 0, %v3441
  %v3444 = vsub.s32 32, %v3443
  %v3445 = vshll.u32 %v3436, %v3443
  %v3446 = vshrl.u32 %v3428, %v3444
  %v3447 = vor.u32 %v3445, %v3446
  %v3448 = vsub.s32 4294967266, %v3443
  %v3449 = vadd.s32 %v3448, 127
  %v3450 = vshll.u32 %v3449, 23
  %v3451 = vor.u32 4788187, %v3450
  %v3452 = vand.u32 2147483647, %v3451
  %v3454 = vcvt.s32.f32 %v3447
  %v3455 = vmul.f32 %v3454, %v3452
  %v3456 = vxor.u32 %v3455, 2147483648
  %v3457 = vsel %vm3374, %v3456, %v3455
  %v3458 = vsub.s32 4, %v3434
  %v3459 = vsel %vm3374, %v3458, %v3434
  %v3460 = vsel %vm3373, %v1126, %v3457
  %v3461 = vsel %vm3373, 0, %v3459
  %v3462 = vcosq.f32.pop %v3460
  %v3463 = vsinq.f32.pop %v3460
  %vm3464 = vweird.f32 %v1126
  %v3465 = vadd.s32 %v3461, 3
  %v3466 = vand.u32 %v3465, 3
  %vm3467 = vcmp.lt.s32.totalorder %v3466, 2
  %vm3468 = vcmp.eq.s32.totalorder %v3466, 0
  %v3469 = vxor.u32 %v3463, 2147483648
  %v3470 = vsel %vm3468, %v3462, %v3469
  %vm3471 = vcmp.eq.s32.totalorder %v3466, 2
  %v3472 = vxor.u32 %v3462, 2147483648
  %v3473 = vsel %vm3471, %v3472, %v3463
  %v3474 = vsel %vm3467, %v3470, %v3473
  %v3475 = vsel %vm3464, nan, %v3474
  %v3476 = vand.u32 2147483647, %v1132
  %vm3477 = vcmp.le.f32.partialorder %v3476, 0.7853982
  %vm3478 = vcmp.lt.s32.totalorder %v1132, 0
  %v3479 = vand.u32 %v1132, 2139095040
  %v3480 = vshrl.u32 %v3479, 23
  %v3481 = vsub.s32 %v3480, 127
  %v3482 = vand.u32 2147483647, %v1132
  %v3483 = vand.u32 %v3482, 8388607
  %v3484 = vor.u32 %v3483, 8388608
  %v3485 = vsub.s32 0, %v3484
  %v3486 = vadd.s32 %v3481, 1
  %vm3487 = vcmp.gt.s32.totalorder %v3486, 0
  %v3488 = vsel %vm3487, %v3486, 0
  %v3489 = vshrl.u32 %v3488, 5
  %v3490 = vand.u32 %v3488, 31
  %v3491 = vsub.s32 32, %v3490
  %v3492 = vshrl.u32 683565275, %v3491
  %v3493 = vshll.u32 683565275, %v3490
  %v3494 = vshrl.u32 2475754826, %v3491
  %v3495 = vor.u32 %v3493, %v3494
  %v3496 = vshll.u32 2475754826, %v3490
  %v3497 = vshrl.u32 2131351028, %v3491
  %v3498 = vor.u32 %v3496, %v3497
  %v3499 = vshll.u32 2131351028, %v3490
  %v3500 = vshrl.u32 2102212464, %v3491
  %v3501 = vor.u32 %v3499, %v3500
  %v3502 = vshll.u32 2102212464, %v3490
  %v3503 = vshrl.u32 920167782, %v3491
  %v3504 = vor.u32 %v3502, %v3503
  %v3505 = vshll.u32 920167782, %v3490
  %v3506 = vshrl.u32 1326507024, %v3491
  %v3507 = vor.u32 %v3505, %v3506
  %vm3508 = vcmp.lt.s32.totalorder %v3489, 1
  %vm3509 = vcmp.lt.s32.totalorder %v3489, 2
  %vm3510 = vcmp.lt.s32.totalorder %v3489, 3
  %vm3511 = vcmp.lt.s32.totalorder %v3489, 4
  %v3512 = vsel %vm3508, %v3492, %v3495
  %v3513 = vsel %vm3511, %v3501, 2102212464
  %v3514 = vsel %vm3510, %v3498, %v3513
  %v3515 = vsel %vm3509, %v3512, %v3514
  %v3516 = vsel %vm3508, %v3495, %v3498
  %v3517 = vsel %vm3511, %v3504, 920167782
  %v3518 = vsel %vm3510, %v3501, %v3517
  %v3519 = vsel %vm3509, %v3516, %v3518
  %v3520 = vsel %vm3508, %v3498, %v3501
  %v3521 = vsel %vm3511, %v3507, 1326507024
  %v3522 = vsel %vm3510, %v3504, %v3521
  %v3523 = vsel %vm3509, %v3520, %v3522
  %v3524 = vshll.u32 %v3484, 8
  %v3525 = vmul.u32.u64.compose %v3524, %v3523
  %v3526 = vextract.low.u32 %v3525
  %v3527 = vextract.high.u32 %v3525
  %v3528 = vmul.u32.u64.compose %v3524, %v3519
  %v3529 = vextract.low.u32 %v3528
  %v3530 = vextract.high.u32 %v3528
  %v3531 = vmul.u32 %v3524, %v3515
  %v3532 = vadd.s32 %v3527, %v3529
  %vm3533 = vc.u32 %v3527, %v3529
  %v3534 = vadd.s32 %v3530, 1
  %v3535 = vsel %vm3533, %v3534, %v3530
  %v3536 = vadd.s32 %v3531, %v3535
  %v3537 = vadd.s32 %v3536, 536870912
  %v3538 = vshrl.u32 %v3537, 30
  %v3539 = vshll.u32 %v3538, 30
  %v3540 = vsub.s32 %v3536, %v3539
  %vm3541 = vcmp.lt.s32.totalorder %v3540, 0
  %v3542 = vsub.s32 0, %v3540
  %v3543 = vsel %vm3541, %v3542, %v3540
  %v3544 = vclz %v3543
  %v3545 = vsub.s32 %v3544, 2
  %vm3546 = vcmp.gt.s32.totalorder 0, %v3545
  %v3547 = vsel %vm3546, 0, %v3545
  %v3548 = vsub.s32 32, %v3547
  %v3549 = vshll.u32 %v3540, %v3547
  %v3550 = vshrl.u32 %v3532, %v3548
  %v3551 = vor.u32 %v3549, %v3550
  %v3552 = vsub.s32 4294967266, %v3547
  %v3553 = vadd.s32 %v3552, 127
  %v3554 = vshll.u32 %v3553, 23
  %v3555 = vor.u32 4788187, %v3554
  %v3556 = vand.u32 2147483647, %v3555
  %v3558 = vcvt.s32.f32 %v3551
  %v3559 = vmul.f32 %v3558, %v3556
  %v3560 = vxor.u32 %v3559, 2147483648
  %v3561 = vsel %vm3478, %v3560, %v3559
  %v3562 = vsub.s32 4, %v3538
  %v3563 = vsel %vm3478, %v3562, %v3538
  %v3564 = vsel %vm3477, %v1132, %v3561
  %v3565 = vsel %vm3477, 0, %v3563
  %v3566 = vcosq.f32.pop %v3564
  %v3567 = vsinq.f32.pop %v3564
  %vm3568 = vweird.f32 %v1132
  %v3569 = vadd.s32 %v3565, 3
  %v3570 = vand.u32 %v3569, 3
  %vm3571 = vcmp.lt.s32.totalorder %v3570, 2
  %vm3572 = vcmp.eq.s32.totalorder %v3570, 0
  %v3573 = vxor.u32 %v3567, 2147483648
  %v3574 = vsel %vm3572, %v3566, %v3573
  %vm3575 = vcmp.eq.s32.totalorder %v3570, 2
  %v3576 = vxor.u32 %v3566, 2147483648
  %v3577 = vsel %vm3575, %v3576, %v3567
  %v3578 = vsel %vm3571, %v3574, %v3577
  %v3579 = vsel %vm3568, nan, %v3578
  %v3580 = vand.u32 2147483647, %v1138
  %vm3581 = vcmp.le.f32.partialorder %v3580, 0.7853982
  %vm3582 = vcmp.lt.s32.totalorder %v1138, 0
  %v3583 = vand.u32 %v1138, 2139095040
  %v3584 = vshrl.u32 %v3583, 23
  %v3585 = vsub.s32 %v3584, 127
  %v3586 = vand.u32 2147483647, %v1138
  %v3587 = vand.u32 %v3586, 8388607
  %v3588 = vor.u32 %v3587, 8388608
  %v3589 = vsub.s32 0, %v3588
  %v3590 = vadd.s32 %v3585, 1
  %vm3591 = vcmp.gt.s32.totalorder %v3590, 0
  %v3592 = vsel %vm3591, %v3590, 0
  %v3593 = vshrl.u32 %v3592, 5
  %v3594 = vand.u32 %v3592, 31
  %v3595 = vsub.s32 32, %v3594
  %v3596 = vshrl.u32 683565275, %v3595
  %v3597 = vshll.u32 683565275, %v3594
  %v3598 = vshrl.u32 2475754826, %v3595
  %v3599 = vor.u32 %v3597, %v3598
  %v3600 = vshll.u32 2475754826, %v3594
  %v3601 = vshrl.u32 2131351028, %v3595
  %v3602 = vor.u32 %v3600, %v3601
  %v3603 = vshll.u32 2131351028, %v3594
  %v3604 = vshrl.u32 2102212464, %v3595
  %v3605 = vor.u32 %v3603, %v3604
  %v3606 = vshll.u32 2102212464, %v3594
  %v3607 = vshrl.u32 920167782, %v3595
  %v3608 = vor.u32 %v3606, %v3607
  %v3609 = vshll.u32 920167782, %v3594
  %v3610 = vshrl.u32 1326507024, %v3595
  %v3611 = vor.u32 %v3609, %v3610
  %vm3612 = vcmp.lt.s32.totalorder %v3593, 1
  %vm3613 = vcmp.lt.s32.totalorder %v3593, 2
  %vm3614 = vcmp.lt.s32.totalorder %v3593, 3
  %vm3615 = vcmp.lt.s32.totalorder %v3593, 4
  %v3616 = vsel %vm3612, %v3596, %v3599
  %v3617 = vsel %vm3615, %v3605, 2102212464
  %v3618 = vsel %vm3614, %v3602, %v3617
  %v3619 = vsel %vm3613, %v3616, %v3618
  %v3620 = vsel %vm3612, %v3599, %v3602
  %v3621 = vsel %vm3615, %v3608, 920167782
  %v3622 = vsel %vm3614, %v3605, %v3621
  %v3623 = vsel %vm3613, %v3620, %v3622
  %v3624 = vsel %vm3612, %v3602, %v3605
  %v3625 = vsel %vm3615, %v3611, 1326507024
  %v3626 = vsel %vm3614, %v3608, %v3625
  %v3627 = vsel %vm3613, %v3624, %v3626
  %v3628 = vshll.u32 %v3588, 8
  %v3629 = vmul.u32.u64.compose %v3628, %v3627
  %v3630 = vextract.low.u32 %v3629
  %v3631 = vextract.high.u32 %v3629
  %v3632 = vmul.u32.u64.compose %v3628, %v3623
  %v3633 = vextract.low.u32 %v3632
  %v3634 = vextract.high.u32 %v3632
  %v3635 = vmul.u32 %v3628, %v3619
  %v3636 = vadd.s32 %v3631, %v3633
  %vm3637 = vc.u32 %v3631, %v3633
  %v3638 = vadd.s32 %v3634, 1
  %v3639 = vsel %vm3637, %v3638, %v3634
  %v3640 = vadd.s32 %v3635, %v3639
  %v3641 = vadd.s32 %v3640, 536870912
  %v3642 = vshrl.u32 %v3641, 30
  %v3643 = vshll.u32 %v3642, 30
  %v3644 = vsub.s32 %v3640, %v3643
  %vm3645 = vcmp.lt.s32.totalorder %v3644, 0
  %v3646 = vsub.s32 0, %v3644
  %v3647 = vsel %vm3645, %v3646, %v3644
  %v3648 = vclz %v3647
  %v3649 = vsub.s32 %v3648, 2
  %vm3650 = vcmp.gt.s32.totalorder 0, %v3649
  %v3651 = vsel %vm3650, 0, %v3649
  %v3652 = vsub.s32 32, %v3651
  %v3653 = vshll.u32 %v3644, %v3651
  %v3654 = vshrl.u32 %v3636, %v3652
  %v3655 = vor.u32 %v3653, %v3654
  %v3656 = vsub.s32 4294967266, %v3651
  %v3657 = vadd.s32 %v3656, 127
  %v3658 = vshll.u32 %v3657, 23
  %v3659 = vor.u32 4788187, %v3658
  %v3660 = vand.u32 2147483647, %v3659
  %v3662 = vcvt.s32.f32 %v3655
  %v3663 = vmul.f32 %v3662, %v3660
  %v3664 = vxor.u32 %v3663, 2147483648
  %v3665 = vsel %vm3582, %v3664, %v3663
  %v3666 = vsub.s32 4, %v3642
  %v3667 = vsel %vm3582, %v3666, %v3642
  %v3668 = vsel %vm3581, %v1138, %v3665
  %v3669 = vsel %vm3581, 0, %v3667
  %v3670 = vcosq.f32.pop %v3668
  %v3671 = vsinq.f32.pop %v3668
  %vm3672 = vweird.f32 %v1138
  %v3673 = vadd.s32 %v3669, 3
  %v3674 = vand.u32 %v3673, 3
  %vm3675 = vcmp.lt.s32.totalorder %v3674, 2
  %vm3676 = vcmp.eq.s32.totalorder %v3674, 0
  %v3677 = vxor.u32 %v3671, 2147483648
  %v3678 = vsel %vm3676, %v3670, %v3677
  %vm3679 = vcmp.eq.s32.totalorder %v3674, 2
  %v3680 = vxor.u32 %v3670, 2147483648
  %v3681 = vsel %vm3679, %v3680, %v3671
  %v3682 = vsel %vm3675, %v3678, %v3681
  %v3683 = vsel %vm3672, nan, %v3682
  %v3684 = vand.u32 2147483647, %v1144
  %vm3685 = vcmp.le.f32.partialorder %v3684, 0.7853982
  %vm3686 = vcmp.lt.s32.totalorder %v1144, 0
  %v3687 = vand.u32 %v1144, 2139095040
  %v3688 = vshrl.u32 %v3687, 23
  %v3689 = vsub.s32 %v3688, 127
  %v3690 = vand.u32 2147483647, %v1144
  %v3691 = vand.u32 %v3690, 8388607
  %v3692 = vor.u32 %v3691, 8388608
  %v3693 = vsub.s32 0, %v3692
  %v3694 = vadd.s32 %v3689, 1
  %vm3695 = vcmp.gt.s32.totalorder %v3694, 0
  %v3696 = vsel %vm3695, %v3694, 0
  %v3697 = vshrl.u32 %v3696, 5
  %v3698 = vand.u32 %v3696, 31
  %v3699 = vsub.s32 32, %v3698
  %v3700 = vshrl.u32 683565275, %v3699
  %v3701 = vshll.u32 683565275, %v3698
  %v3702 = vshrl.u32 2475754826, %v3699
  %v3703 = vor.u32 %v3701, %v3702
  %v3704 = vshll.u32 2475754826, %v3698
  %v3705 = vshrl.u32 2131351028, %v3699
  %v3706 = vor.u32 %v3704, %v3705
  %v3707 = vshll.u32 2131351028, %v3698
  %v3708 = vshrl.u32 2102212464, %v3699
  %v3709 = vor.u32 %v3707, %v3708
  %v3710 = vshll.u32 2102212464, %v3698
  %v3711 = vshrl.u32 920167782, %v3699
  %v3712 = vor.u32 %v3710, %v3711
  %v3713 = vshll.u32 920167782, %v3698
  %v3714 = vshrl.u32 1326507024, %v3699
  %v3715 = vor.u32 %v3713, %v3714
  %vm3716 = vcmp.lt.s32.totalorder %v3697, 1
  %vm3717 = vcmp.lt.s32.totalorder %v3697, 2
  %vm3718 = vcmp.lt.s32.totalorder %v3697, 3
  %vm3719 = vcmp.lt.s32.totalorder %v3697, 4
  %v3720 = vsel %vm3716, %v3700, %v3703
  %v3721 = vsel %vm3719, %v3709, 2102212464
  %v3722 = vsel %vm3718, %v3706, %v3721
  %v3723 = vsel %vm3717, %v3720, %v3722
  %v3724 = vsel %vm3716, %v3703, %v3706
  %v3725 = vsel %vm3719, %v3712, 920167782
  %v3726 = vsel %vm3718, %v3709, %v3725
  %v3727 = vsel %vm3717, %v3724, %v3726
  %v3728 = vsel %vm3716, %v3706, %v3709
  %v3729 = vsel %vm3719, %v3715, 1326507024
  %v3730 = vsel %vm3718, %v3712, %v3729
  %v3731 = vsel %vm3717, %v3728, %v3730
  %v3732 = vshll.u32 %v3692, 8
  %v3733 = vmul.u32.u64.compose %v3732, %v3731
  %v3734 = vextract.low.u32 %v3733
  %v3735 = vextract.high.u32 %v3733
  %v3736 = vmul.u32.u64.compose %v3732, %v3727
  %v3737 = vextract.low.u32 %v3736
  %v3738 = vextract.high.u32 %v3736
  %v3739 = vmul.u32 %v3732, %v3723
  %v3740 = vadd.s32 %v3735, %v3737
  %vm3741 = vc.u32 %v3735, %v3737
  %v3742 = vadd.s32 %v3738, 1
  %v3743 = vsel %vm3741, %v3742, %v3738
  %v3744 = vadd.s32 %v3739, %v3743
  %v3745 = vadd.s32 %v3744, 536870912
  %v3746 = vshrl.u32 %v3745, 30
  %v3747 = vshll.u32 %v3746, 30
  %v3748 = vsub.s32 %v3744, %v3747
  %vm3749 = vcmp.lt.s32.totalorder %v3748, 0
  %v3750 = vsub.s32 0, %v3748
  %v3751 = vsel %vm3749, %v3750, %v3748
  %v3752 = vclz %v3751
  %v3753 = vsub.s32 %v3752, 2
  %vm3754 = vcmp.gt.s32.totalorder 0, %v3753
  %v3755 = vsel %vm3754, 0, %v3753
  %v3756 = vsub.s32 32, %v3755
  %v3757 = vshll.u32 %v3748, %v3755
  %v3758 = vshrl.u32 %v3740, %v3756
  %v3759 = vor.u32 %v3757, %v3758
  %v3760 = vsub.s32 4294967266, %v3755
  %v3761 = vadd.s32 %v3760, 127
  %v3762 = vshll.u32 %v3761, 23
  %v3763 = vor.u32 4788187, %v3762
  %v3764 = vand.u32 2147483647, %v3763
  %v3766 = vcvt.s32.f32 %v3759
  %v3767 = vmul.f32 %v3766, %v3764
  %v3768 = vxor.u32 %v3767, 2147483648
  %v3769 = vsel %vm3686, %v3768, %v3767
  %v3770 = vsub.s32 4, %v3746
  %v3771 = vsel %vm3686, %v3770, %v3746
  %v3772 = vsel %vm3685, %v1144, %v3769
  %v3773 = vsel %vm3685, 0, %v3771
  %v3774 = vcosq.f32.pop %v3772
  %v3775 = vsinq.f32.pop %v3772
  %vm3776 = vweird.f32 %v1144
  %v3777 = vadd.s32 %v3773, 3
  %v3778 = vand.u32 %v3777, 3
  %vm3779 = vcmp.lt.s32.totalorder %v3778, 2
  %vm3780 = vcmp.eq.s32.totalorder %v3778, 0
  %v3781 = vxor.u32 %v3775, 2147483648
  %v3782 = vsel %vm3780, %v3774, %v3781
  %vm3783 = vcmp.eq.s32.totalorder %v3778, 2
  %v3784 = vxor.u32 %v3774, 2147483648
  %v3785 = vsel %vm3783, %v3784, %v3775
  %v3786 = vsel %vm3779, %v3782, %v3785
  %v3787 = vsel %vm3776, nan, %v3786
  %v3788 = vand.u32 2147483647, %v1150
  %vm3789 = vcmp.le.f32.partialorder %v3788, 0.7853982
  %vm3790 = vcmp.lt.s32.totalorder %v1150, 0
  %v3791 = vand.u32 %v1150, 2139095040
  %v3792 = vshrl.u32 %v3791, 23
  %v3793 = vsub.s32 %v3792, 127
  %v3794 = vand.u32 2147483647, %v1150
  %v3795 = vand.u32 %v3794, 8388607
  %v3796 = vor.u32 %v3795, 8388608
  %v3797 = vsub.s32 0, %v3796
  %v3798 = vadd.s32 %v3793, 1
  %vm3799 = vcmp.gt.s32.totalorder %v3798, 0
  %v3800 = vsel %vm3799, %v3798, 0
  %v3801 = vshrl.u32 %v3800, 5
  %v3802 = vand.u32 %v3800, 31
  %v3803 = vsub.s32 32, %v3802
  %v3804 = vshrl.u32 683565275, %v3803
  %v3805 = vshll.u32 683565275, %v3802
  %v3806 = vshrl.u32 2475754826, %v3803
  %v3807 = vor.u32 %v3805, %v3806
  %v3808 = vshll.u32 2475754826, %v3802
  %v3809 = vshrl.u32 2131351028, %v3803
  %v3810 = vor.u32 %v3808, %v3809
  %v3811 = vshll.u32 2131351028, %v3802
  %v3812 = vshrl.u32 2102212464, %v3803
  %v3813 = vor.u32 %v3811, %v3812
  %v3814 = vshll.u32 2102212464, %v3802
  %v3815 = vshrl.u32 920167782, %v3803
  %v3816 = vor.u32 %v3814, %v3815
  %v3817 = vshll.u32 920167782, %v3802
  %v3818 = vshrl.u32 1326507024, %v3803
  %v3819 = vor.u32 %v3817, %v3818
  %vm3820 = vcmp.lt.s32.totalorder %v3801, 1
  %vm3821 = vcmp.lt.s32.totalorder %v3801, 2
  %vm3822 = vcmp.lt.s32.totalorder %v3801, 3
  %vm3823 = vcmp.lt.s32.totalorder %v3801, 4
  %v3824 = vsel %vm3820, %v3804, %v3807
  %v3825 = vsel %vm3823, %v3813, 2102212464
  %v3826 = vsel %vm3822, %v3810, %v3825
  %v3827 = vsel %vm3821, %v3824, %v3826
  %v3828 = vsel %vm3820, %v3807, %v3810
  %v3829 = vsel %vm3823, %v3816, 920167782
  %v3830 = vsel %vm3822, %v3813, %v3829
  %v3831 = vsel %vm3821, %v3828, %v3830
  %v3832 = vsel %vm3820, %v3810, %v3813
  %v3833 = vsel %vm3823, %v3819, 1326507024
  %v3834 = vsel %vm3822, %v3816, %v3833
  %v3835 = vsel %vm3821, %v3832, %v3834
  %v3836 = vshll.u32 %v3796, 8
  %v3837 = vmul.u32.u64.compose %v3836, %v3835
  %v3838 = vextract.low.u32 %v3837
  %v3839 = vextract.high.u32 %v3837
  %v3840 = vmul.u32.u64.compose %v3836, %v3831
  %v3841 = vextract.low.u32 %v3840
  %v3842 = vextract.high.u32 %v3840
  %v3843 = vmul.u32 %v3836, %v3827
  %v3844 = vadd.s32 %v3839, %v3841
  %vm3845 = vc.u32 %v3839, %v3841
  %v3846 = vadd.s32 %v3842, 1
  %v3847 = vsel %vm3845, %v3846, %v3842
  %v3848 = vadd.s32 %v3843, %v3847
  %v3849 = vadd.s32 %v3848, 536870912
  %v3850 = vshrl.u32 %v3849, 30
  %v3851 = vshll.u32 %v3850, 30
  %v3852 = vsub.s32 %v3848, %v3851
  %vm3853 = vcmp.lt.s32.totalorder %v3852, 0
  %v3854 = vsub.s32 0, %v3852
  %v3855 = vsel %vm3853, %v3854, %v3852
  %v3856 = vclz %v3855
  %v3857 = vsub.s32 %v3856, 2
  %vm3858 = vcmp.gt.s32.totalorder 0, %v3857
  %v3859 = vsel %vm3858, 0, %v3857
  %v3860 = vsub.s32 32, %v3859
  %v3861 = vshll.u32 %v3852, %v3859
  %v3862 = vshrl.u32 %v3844, %v3860
  %v3863 = vor.u32 %v3861, %v3862
  %v3864 = vsub.s32 4294967266, %v3859
  %v3865 = vadd.s32 %v3864, 127
  %v3866 = vshll.u32 %v3865, 23
  %v3867 = vor.u32 4788187, %v3866
  %v3868 = vand.u32 2147483647, %v3867
  %v3870 = vcvt.s32.f32 %v3863
  %v3871 = vmul.f32 %v3870, %v3868
  %v3872 = vxor.u32 %v3871, 2147483648
  %v3873 = vsel %vm3790, %v3872, %v3871
  %v3874 = vsub.s32 4, %v3850
  %v3875 = vsel %vm3790, %v3874, %v3850
  %v3876 = vsel %vm3789, %v1150, %v3873
  %v3877 = vsel %vm3789, 0, %v3875
  %v3878 = vcosq.f32.pop %v3876
  %v3879 = vsinq.f32.pop %v3876
  %vm3880 = vweird.f32 %v1150
  %v3881 = vadd.s32 %v3877, 3
  %v3882 = vand.u32 %v3881, 3
  %vm3883 = vcmp.lt.s32.totalorder %v3882, 2
  %vm3884 = vcmp.eq.s32.totalorder %v3882, 0
  %v3885 = vxor.u32 %v3879, 2147483648
  %v3886 = vsel %vm3884, %v3878, %v3885
  %vm3887 = vcmp.eq.s32.totalorder %v3882, 2
  %v3888 = vxor.u32 %v3878, 2147483648
  %v3889 = vsel %vm3887, %v3888, %v3879
  %v3890 = vsel %vm3883, %v3886, %v3889
  %v3891 = vsel %vm3880, nan, %v3890
  %v3892 = vand.u32 2147483647, %v1156
  %vm3893 = vcmp.le.f32.partialorder %v3892, 0.7853982
  %vm3894 = vcmp.lt.s32.totalorder %v1156, 0
  %v3895 = vand.u32 %v1156, 2139095040
  %v3896 = vshrl.u32 %v3895, 23
  %v3897 = vsub.s32 %v3896, 127
  %v3898 = vand.u32 2147483647, %v1156
  %v3899 = vand.u32 %v3898, 8388607
  %v3900 = vor.u32 %v3899, 8388608
  %v3901 = vsub.s32 0, %v3900
  %v3902 = vadd.s32 %v3897, 1
  %vm3903 = vcmp.gt.s32.totalorder %v3902, 0
  %v3904 = vsel %vm3903, %v3902, 0
  %v3905 = vshrl.u32 %v3904, 5
  %v3906 = vand.u32 %v3904, 31
  %v3907 = vsub.s32 32, %v3906
  %v3908 = vshrl.u32 683565275, %v3907
  %v3909 = vshll.u32 683565275, %v3906
  %v3910 = vshrl.u32 2475754826, %v3907
  %v3911 = vor.u32 %v3909, %v3910
  %v3912 = vshll.u32 2475754826, %v3906
  %v3913 = vshrl.u32 2131351028, %v3907
  %v3914 = vor.u32 %v3912, %v3913
  %v3915 = vshll.u32 2131351028, %v3906
  %v3916 = vshrl.u32 2102212464, %v3907
  %v3917 = vor.u32 %v3915, %v3916
  %v3918 = vshll.u32 2102212464, %v3906
  %v3919 = vshrl.u32 920167782, %v3907
  %v3920 = vor.u32 %v3918, %v3919
  %v3921 = vshll.u32 920167782, %v3906
  %v3922 = vshrl.u32 1326507024, %v3907
  %v3923 = vor.u32 %v3921, %v3922
  %vm3924 = vcmp.lt.s32.totalorder %v3905, 1
  %vm3925 = vcmp.lt.s32.totalorder %v3905, 2
  %vm3926 = vcmp.lt.s32.totalorder %v3905, 3
  %vm3927 = vcmp.lt.s32.totalorder %v3905, 4
  %v3928 = vsel %vm3924, %v3908, %v3911
  %v3929 = vsel %vm3927, %v3917, 2102212464
  %v3930 = vsel %vm3926, %v3914, %v3929
  %v3931 = vsel %vm3925, %v3928, %v3930
  %v3932 = vsel %vm3924, %v3911, %v3914
  %v3933 = vsel %vm3927, %v3920, 920167782
  %v3934 = vsel %vm3926, %v3917, %v3933
  %v3935 = vsel %vm3925, %v3932, %v3934
  %v3936 = vsel %vm3924, %v3914, %v3917
  %v3937 = vsel %vm3927, %v3923, 1326507024
  %v3938 = vsel %vm3926, %v3920, %v3937
  %v3939 = vsel %vm3925, %v3936, %v3938
  %v3940 = vshll.u32 %v3900, 8
  %v3941 = vmul.u32.u64.compose %v3940, %v3939
  %v3942 = vextract.low.u32 %v3941
  %v3943 = vextract.high.u32 %v3941
  %v3944 = vmul.u32.u64.compose %v3940, %v3935
  %v3945 = vextract.low.u32 %v3944
  %v3946 = vextract.high.u32 %v3944
  %v3947 = vmul.u32 %v3940, %v3931
  %v3948 = vadd.s32 %v3943, %v3945
  %vm3949 = vc.u32 %v3943, %v3945
  %v3950 = vadd.s32 %v3946, 1
  %v3951 = vsel %vm3949, %v3950, %v3946
  %v3952 = vadd.s32 %v3947, %v3951
  %v3953 = vadd.s32 %v3952, 536870912
  %v3954 = vshrl.u32 %v3953, 30
  %v3955 = vshll.u32 %v3954, 30
  %v3956 = vsub.s32 %v3952, %v3955
  %vm3957 = vcmp.lt.s32.totalorder %v3956, 0
  %v3958 = vsub.s32 0, %v3956
  %v3959 = vsel %vm3957, %v3958, %v3956
  %v3960 = vclz %v3959
  %v3961 = vsub.s32 %v3960, 2
  %vm3962 = vcmp.gt.s32.totalorder 0, %v3961
  %v3963 = vsel %vm3962, 0, %v3961
  %v3964 = vsub.s32 32, %v3963
  %v3965 = vshll.u32 %v3956, %v3963
  %v3966 = vshrl.u32 %v3948, %v3964
  %v3967 = vor.u32 %v3965, %v3966
  %v3968 = vsub.s32 4294967266, %v3963
  %v3969 = vadd.s32 %v3968, 127
  %v3970 = vshll.u32 %v3969, 23
  %v3971 = vor.u32 4788187, %v3970
  %v3972 = vand.u32 2147483647, %v3971
  %v3974 = vcvt.s32.f32 %v3967
  %v3975 = vmul.f32 %v3974, %v3972
  %v3976 = vxor.u32 %v3975, 2147483648
  %v3977 = vsel %vm3894, %v3976, %v3975
  %v3978 = vsub.s32 4, %v3954
  %v3979 = vsel %vm3894, %v3978, %v3954
  %v3980 = vsel %vm3893, %v1156, %v3977
  %v3981 = vsel %vm3893, 0, %v3979
  %v3982 = vcosq.f32.pop %v3980
  %v3983 = vsinq.f32.pop %v3980
  %vm3984 = vweird.f32 %v1156
  %v3985 = vadd.s32 %v3981, 3
  %v3986 = vand.u32 %v3985, 3
  %vm3987 = vcmp.lt.s32.totalorder %v3986, 2
  %vm3988 = vcmp.eq.s32.totalorder %v3986, 0
  %v3989 = vxor.u32 %v3983, 2147483648
  %v3990 = vsel %vm3988, %v3982, %v3989
  %vm3991 = vcmp.eq.s32.totalorder %v3986, 2
  %v3992 = vxor.u32 %v3982, 2147483648
  %v3993 = vsel %vm3991, %v3992, %v3983
  %v3994 = vsel %vm3987, %v3990, %v3993
  %v3995 = vsel %vm3984, nan, %v3994
  %v3996 = vand.u32 2147483647, %v1162
  %vm3997 = vcmp.le.f32.partialorder %v3996, 0.7853982
  %vm3998 = vcmp.lt.s32.totalorder %v1162, 0
  %v3999 = vand.u32 %v1162, 2139095040
  %v4000 = vshrl.u32 %v3999, 23
  %v4001 = vsub.s32 %v4000, 127
  %v4002 = vand.u32 2147483647, %v1162
  %v4003 = vand.u32 %v4002, 8388607
  %v4004 = vor.u32 %v4003, 8388608
  %v4005 = vsub.s32 0, %v4004
  %v4006 = vadd.s32 %v4001, 1
  %vm4007 = vcmp.gt.s32.totalorder %v4006, 0
  %v4008 = vsel %vm4007, %v4006, 0
  %v4009 = vshrl.u32 %v4008, 5
  %v4010 = vand.u32 %v4008, 31
  %v4011 = vsub.s32 32, %v4010
  %v4012 = vshrl.u32 683565275, %v4011
  %v4013 = vshll.u32 683565275, %v4010
  %v4014 = vshrl.u32 2475754826, %v4011
  %v4015 = vor.u32 %v4013, %v4014
  %v4016 = vshll.u32 2475754826, %v4010
  %v4017 = vshrl.u32 2131351028, %v4011
  %v4018 = vor.u32 %v4016, %v4017
  %v4019 = vshll.u32 2131351028, %v4010
  %v4020 = vshrl.u32 2102212464, %v4011
  %v4021 = vor.u32 %v4019, %v4020
  %v4022 = vshll.u32 2102212464, %v4010
  %v4023 = vshrl.u32 920167782, %v4011
  %v4024 = vor.u32 %v4022, %v4023
  %v4025 = vshll.u32 920167782, %v4010
  %v4026 = vshrl.u32 1326507024, %v4011
  %v4027 = vor.u32 %v4025, %v4026
  %vm4028 = vcmp.lt.s32.totalorder %v4009, 1
  %vm4029 = vcmp.lt.s32.totalorder %v4009, 2
  %vm4030 = vcmp.lt.s32.totalorder %v4009, 3
  %vm4031 = vcmp.lt.s32.totalorder %v4009, 4
  %v4032 = vsel %vm4028, %v4012, %v4015
  %v4033 = vsel %vm4031, %v4021, 2102212464
  %v4034 = vsel %vm4030, %v4018, %v4033
  %v4035 = vsel %vm4029, %v4032, %v4034
  %v4036 = vsel %vm4028, %v4015, %v4018
  %v4037 = vsel %vm4031, %v4024, 920167782
  %v4038 = vsel %vm4030, %v4021, %v4037
  %v4039 = vsel %vm4029, %v4036, %v4038
  %v4040 = vsel %vm4028, %v4018, %v4021
  %v4041 = vsel %vm4031, %v4027, 1326507024
  %v4042 = vsel %vm4030, %v4024, %v4041
  %v4043 = vsel %vm4029, %v4040, %v4042
  %v4044 = vshll.u32 %v4004, 8
  %v4045 = vmul.u32.u64.compose %v4044, %v4043
  %v4046 = vextract.low.u32 %v4045
  %v4047 = vextract.high.u32 %v4045
  %v4048 = vmul.u32.u64.compose %v4044, %v4039
  %v4049 = vextract.low.u32 %v4048
  %v4050 = vextract.high.u32 %v4048
  %v4051 = vmul.u32 %v4044, %v4035
  %v4052 = vadd.s32 %v4047, %v4049
  %vm4053 = vc.u32 %v4047, %v4049
  %v4054 = vadd.s32 %v4050, 1
  %v4055 = vsel %vm4053, %v4054, %v4050
  %v4056 = vadd.s32 %v4051, %v4055
  %v4057 = vadd.s32 %v4056, 536870912
  %v4058 = vshrl.u32 %v4057, 30
  %v4059 = vshll.u32 %v4058, 30
  %v4060 = vsub.s32 %v4056, %v4059
  %vm4061 = vcmp.lt.s32.totalorder %v4060, 0
  %v4062 = vsub.s32 0, %v4060
  %v4063 = vsel %vm4061, %v4062, %v4060
  %v4064 = vclz %v4063
  %v4065 = vsub.s32 %v4064, 2
  %vm4066 = vcmp.gt.s32.totalorder 0, %v4065
  %v4067 = vsel %vm4066, 0, %v4065
  %v4068 = vsub.s32 32, %v4067
  %v4069 = vshll.u32 %v4060, %v4067
  %v4070 = vshrl.u32 %v4052, %v4068
  %v4071 = vor.u32 %v4069, %v4070
  %v4072 = vsub.s32 4294967266, %v4067
  %v4073 = vadd.s32 %v4072, 127
  %v4074 = vshll.u32 %v4073, 23
  %v4075 = vor.u32 4788187, %v4074
  %v4076 = vand.u32 2147483647, %v4075
  %v4078 = vcvt.s32.f32 %v4071
  %v4079 = vmul.f32 %v4078, %v4076
  %v4080 = vxor.u32 %v4079, 2147483648
  %v4081 = vsel %vm3998, %v4080, %v4079
  %v4082 = vsub.s32 4, %v4058
  %v4083 = vsel %vm3998, %v4082, %v4058
  %v4084 = vsel %vm3997, %v1162, %v4081
  %v4085 = vsel %vm3997, 0, %v4083
  %v4086 = vcosq.f32.pop %v4084
  %v4087 = vsinq.f32.pop %v4084
  %vm4088 = vweird.f32 %v1162
  %v4089 = vadd.s32 %v4085, 3
  %v4090 = vand.u32 %v4089, 3
  %vm4091 = vcmp.lt.s32.totalorder %v4090, 2
  %vm4092 = vcmp.eq.s32.totalorder %v4090, 0
  %v4093 = vxor.u32 %v4087, 2147483648
  %v4094 = vsel %vm4092, %v4086, %v4093
  %vm4095 = vcmp.eq.s32.totalorder %v4090, 2
  %v4096 = vxor.u32 %v4086, 2147483648
  %v4097 = vsel %vm4095, %v4096, %v4087
  %v4098 = vsel %vm4091, %v4094, %v4097
  %v4099 = vsel %vm4088, nan, %v4098
  %v4100 = vand.u32 2147483647, %v1168
  %vm4101 = vcmp.le.f32.partialorder %v4100, 0.7853982
  %vm4102 = vcmp.lt.s32.totalorder %v1168, 0
  %v4103 = vand.u32 %v1168, 2139095040
  %v4104 = vshrl.u32 %v4103, 23
  %v4105 = vsub.s32 %v4104, 127
  %v4106 = vand.u32 2147483647, %v1168
  %v4107 = vand.u32 %v4106, 8388607
  %v4108 = vor.u32 %v4107, 8388608
  %v4109 = vsub.s32 0, %v4108
  %v4110 = vadd.s32 %v4105, 1
  %vm4111 = vcmp.gt.s32.totalorder %v4110, 0
  %v4112 = vsel %vm4111, %v4110, 0
  %v4113 = vshrl.u32 %v4112, 5
  %v4114 = vand.u32 %v4112, 31
  %v4115 = vsub.s32 32, %v4114
  %v4116 = vshrl.u32 683565275, %v4115
  %v4117 = vshll.u32 683565275, %v4114
  %v4118 = vshrl.u32 2475754826, %v4115
  %v4119 = vor.u32 %v4117, %v4118
  %v4120 = vshll.u32 2475754826, %v4114
  %v4121 = vshrl.u32 2131351028, %v4115
  %v4122 = vor.u32 %v4120, %v4121
  %v4123 = vshll.u32 2131351028, %v4114
  %v4124 = vshrl.u32 2102212464, %v4115
  %v4125 = vor.u32 %v4123, %v4124
  %v4126 = vshll.u32 2102212464, %v4114
  %v4127 = vshrl.u32 920167782, %v4115
  %v4128 = vor.u32 %v4126, %v4127
  %v4129 = vshll.u32 920167782, %v4114
  %v4130 = vshrl.u32 1326507024, %v4115
  %v4131 = vor.u32 %v4129, %v4130
  %vm4132 = vcmp.lt.s32.totalorder %v4113, 1
  %vm4133 = vcmp.lt.s32.totalorder %v4113, 2
  %vm4134 = vcmp.lt.s32.totalorder %v4113, 3
  %vm4135 = vcmp.lt.s32.totalorder %v4113, 4
  %v4136 = vsel %vm4132, %v4116, %v4119
  %v4137 = vsel %vm4135, %v4125, 2102212464
  %v4138 = vsel %vm4134, %v4122, %v4137
  %v4139 = vsel %vm4133, %v4136, %v4138
  %v4140 = vsel %vm4132, %v4119, %v4122
  %v4141 = vsel %vm4135, %v4128, 920167782
  %v4142 = vsel %vm4134, %v4125, %v4141
  %v4143 = vsel %vm4133, %v4140, %v4142
  %v4144 = vsel %vm4132, %v4122, %v4125
  %v4145 = vsel %vm4135, %v4131, 1326507024
  %v4146 = vsel %vm4134, %v4128, %v4145
  %v4147 = vsel %vm4133, %v4144, %v4146
  %v4148 = vshll.u32 %v4108, 8
  %v4149 = vmul.u32.u64.compose %v4148, %v4147
  %v4150 = vextract.low.u32 %v4149
  %v4151 = vextract.high.u32 %v4149
  %v4152 = vmul.u32.u64.compose %v4148, %v4143
  %v4153 = vextract.low.u32 %v4152
  %v4154 = vextract.high.u32 %v4152
  %v4155 = vmul.u32 %v4148, %v4139
  %v4156 = vadd.s32 %v4151, %v4153
  %vm4157 = vc.u32 %v4151, %v4153
  %v4158 = vadd.s32 %v4154, 1
  %v4159 = vsel %vm4157, %v4158, %v4154
  %v4160 = vadd.s32 %v4155, %v4159
  %v4161 = vadd.s32 %v4160, 536870912
  %v4162 = vshrl.u32 %v4161, 30
  %v4163 = vshll.u32 %v4162, 30
  %v4164 = vsub.s32 %v4160, %v4163
  %vm4165 = vcmp.lt.s32.totalorder %v4164, 0
  %v4166 = vsub.s32 0, %v4164
  %v4167 = vsel %vm4165, %v4166, %v4164
  %v4168 = vclz %v4167
  %v4169 = vsub.s32 %v4168, 2
  %vm4170 = vcmp.gt.s32.totalorder 0, %v4169
  %v4171 = vsel %vm4170, 0, %v4169
  %v4172 = vsub.s32 32, %v4171
  %v4173 = vshll.u32 %v4164, %v4171
  %v4174 = vshrl.u32 %v4156, %v4172
  %v4175 = vor.u32 %v4173, %v4174
  %v4176 = vsub.s32 4294967266, %v4171
  %v4177 = vadd.s32 %v4176, 127
  %v4178 = vshll.u32 %v4177, 23
  %v4179 = vor.u32 4788187, %v4178
  %v4180 = vand.u32 2147483647, %v4179
  %v4182 = vcvt.s32.f32 %v4175
  %v4183 = vmul.f32 %v4182, %v4180
  %v4184 = vxor.u32 %v4183, 2147483648
  %v4185 = vsel %vm4102, %v4184, %v4183
  %v4186 = vsub.s32 4, %v4162
  %v4187 = vsel %vm4102, %v4186, %v4162
  %v4188 = vsel %vm4101, %v1168, %v4185
  %v4189 = vsel %vm4101, 0, %v4187
  %v4190 = vcosq.f32.pop %v4188
  %v4191 = vsinq.f32.pop %v4188
  %vm4192 = vweird.f32 %v1168
  %v4193 = vadd.s32 %v4189, 3
  %v4194 = vand.u32 %v4193, 3
  %vm4195 = vcmp.lt.s32.totalorder %v4194, 2
  %vm4196 = vcmp.eq.s32.totalorder %v4194, 0
  %v4197 = vxor.u32 %v4191, 2147483648
  %v4198 = vsel %vm4196, %v4190, %v4197
  %vm4199 = vcmp.eq.s32.totalorder %v4194, 2
  %v4200 = vxor.u32 %v4190, 2147483648
  %v4201 = vsel %vm4199, %v4200, %v4191
  %v4202 = vsel %vm4195, %v4198, %v4201
  %v4203 = vsel %vm4192, nan, %v4202
  %v4204 = vand.u32 2147483647, %v1174
  %vm4205 = vcmp.le.f32.partialorder %v4204, 0.7853982
  %vm4206 = vcmp.lt.s32.totalorder %v1174, 0
  %v4207 = vand.u32 %v1174, 2139095040
  %v4208 = vshrl.u32 %v4207, 23
  %v4209 = vsub.s32 %v4208, 127
  %v4210 = vand.u32 2147483647, %v1174
  %v4211 = vand.u32 %v4210, 8388607
  %v4212 = vor.u32 %v4211, 8388608
  %v4213 = vsub.s32 0, %v4212
  %v4214 = vadd.s32 %v4209, 1
  %vm4215 = vcmp.gt.s32.totalorder %v4214, 0
  %v4216 = vsel %vm4215, %v4214, 0
  %v4217 = vshrl.u32 %v4216, 5
  %v4218 = vand.u32 %v4216, 31
  %v4219 = vsub.s32 32, %v4218
  %v4220 = vshrl.u32 683565275, %v4219
  %v4221 = vshll.u32 683565275, %v4218
  %v4222 = vshrl.u32 2475754826, %v4219
  %v4223 = vor.u32 %v4221, %v4222
  %v4224 = vshll.u32 2475754826, %v4218
  %v4225 = vshrl.u32 2131351028, %v4219
  %v4226 = vor.u32 %v4224, %v4225
  %v4227 = vshll.u32 2131351028, %v4218
  %v4228 = vshrl.u32 2102212464, %v4219
  %v4229 = vor.u32 %v4227, %v4228
  %v4230 = vshll.u32 2102212464, %v4218
  %v4231 = vshrl.u32 920167782, %v4219
  %v4232 = vor.u32 %v4230, %v4231
  %v4233 = vshll.u32 920167782, %v4218
  %v4234 = vshrl.u32 1326507024, %v4219
  %v4235 = vor.u32 %v4233, %v4234
  %vm4236 = vcmp.lt.s32.totalorder %v4217, 1
  %vm4237 = vcmp.lt.s32.totalorder %v4217, 2
  %vm4238 = vcmp.lt.s32.totalorder %v4217, 3
  %vm4239 = vcmp.lt.s32.totalorder %v4217, 4
  %v4240 = vsel %vm4236, %v4220, %v4223
  %v4241 = vsel %vm4239, %v4229, 2102212464
  %v4242 = vsel %vm4238, %v4226, %v4241
  %v4243 = vsel %vm4237, %v4240, %v4242
  %v4244 = vsel %vm4236, %v4223, %v4226
  %v4245 = vsel %vm4239, %v4232, 920167782
  %v4246 = vsel %vm4238, %v4229, %v4245
  %v4247 = vsel %vm4237, %v4244, %v4246
  %v4248 = vsel %vm4236, %v4226, %v4229
  %v4249 = vsel %vm4239, %v4235, 1326507024
  %v4250 = vsel %vm4238, %v4232, %v4249
  %v4251 = vsel %vm4237, %v4248, %v4250
  %v4252 = vshll.u32 %v4212, 8
  %v4253 = vmul.u32.u64.compose %v4252, %v4251
  %v4254 = vextract.low.u32 %v4253
  %v4255 = vextract.high.u32 %v4253
  %v4256 = vmul.u32.u64.compose %v4252, %v4247
  %v4257 = vextract.low.u32 %v4256
  %v4258 = vextract.high.u32 %v4256
  %v4259 = vmul.u32 %v4252, %v4243
  %v4260 = vadd.s32 %v4255, %v4257
  %vm4261 = vc.u32 %v4255, %v4257
  %v4262 = vadd.s32 %v4258, 1
  %v4263 = vsel %vm4261, %v4262, %v4258
  %v4264 = vadd.s32 %v4259, %v4263
  %v4265 = vadd.s32 %v4264, 536870912
  %v4266 = vshrl.u32 %v4265, 30
  %v4267 = vshll.u32 %v4266, 30
  %v4268 = vsub.s32 %v4264, %v4267
  %vm4269 = vcmp.lt.s32.totalorder %v4268, 0
  %v4270 = vsub.s32 0, %v4268
  %v4271 = vsel %vm4269, %v4270, %v4268
  %v4272 = vclz %v4271
  %v4273 = vsub.s32 %v4272, 2
  %vm4274 = vcmp.gt.s32.totalorder 0, %v4273
  %v4275 = vsel %vm4274, 0, %v4273
  %v4276 = vsub.s32 32, %v4275
  %v4277 = vshll.u32 %v4268, %v4275
  %v4278 = vshrl.u32 %v4260, %v4276
  %v4279 = vor.u32 %v4277, %v4278
  %v4280 = vsub.s32 4294967266, %v4275
  %v4281 = vadd.s32 %v4280, 127
  %v4282 = vshll.u32 %v4281, 23
  %v4283 = vor.u32 4788187, %v4282
  %v4284 = vand.u32 2147483647, %v4283
  %v4286 = vcvt.s32.f32 %v4279
  %v4287 = vmul.f32 %v4286, %v4284
  %v4288 = vxor.u32 %v4287, 2147483648
  %v4289 = vsel %vm4206, %v4288, %v4287
  %v4290 = vsub.s32 4, %v4266
  %v4291 = vsel %vm4206, %v4290, %v4266
  %v4292 = vsel %vm4205, %v1174, %v4289
  %v4293 = vsel %vm4205, 0, %v4291
  %v4294 = vcosq.f32.pop %v4292
  %v4295 = vsinq.f32.pop %v4292
  %vm4296 = vweird.f32 %v1174
  %v4297 = vadd.s32 %v4293, 3
  %v4298 = vand.u32 %v4297, 3
  %vm4299 = vcmp.lt.s32.totalorder %v4298, 2
  %vm4300 = vcmp.eq.s32.totalorder %v4298, 0
  %v4301 = vxor.u32 %v4295, 2147483648
  %v4302 = vsel %vm4300, %v4294, %v4301
  %vm4303 = vcmp.eq.s32.totalorder %v4298, 2
  %v4304 = vxor.u32 %v4294, 2147483648
  %v4305 = vsel %vm4303, %v4304, %v4295
  %v4306 = vsel %vm4299, %v4302, %v4305
  %v4307 = vsel %vm4296, nan, %v4306
  %v4308 = vand.u32 2147483647, %v1180
  %vm4309 = vcmp.le.f32.partialorder %v4308, 0.7853982
  %vm4310 = vcmp.lt.s32.totalorder %v1180, 0
  %v4311 = vand.u32 %v1180, 2139095040
  %v4312 = vshrl.u32 %v4311, 23
  %v4313 = vsub.s32 %v4312, 127
  %v4314 = vand.u32 2147483647, %v1180
  %v4315 = vand.u32 %v4314, 8388607
  %v4316 = vor.u32 %v4315, 8388608
  %v4317 = vsub.s32 0, %v4316
  %v4318 = vadd.s32 %v4313, 1
  %vm4319 = vcmp.gt.s32.totalorder %v4318, 0
  %v4320 = vsel %vm4319, %v4318, 0
  %v4321 = vshrl.u32 %v4320, 5
  %v4322 = vand.u32 %v4320, 31
  %v4323 = vsub.s32 32, %v4322
  %v4324 = vshrl.u32 683565275, %v4323
  %v4325 = vshll.u32 683565275, %v4322
  %v4326 = vshrl.u32 2475754826, %v4323
  %v4327 = vor.u32 %v4325, %v4326
  %v4328 = vshll.u32 2475754826, %v4322
  %v4329 = vshrl.u32 2131351028, %v4323
  %v4330 = vor.u32 %v4328, %v4329
  %v4331 = vshll.u32 2131351028, %v4322
  %v4332 = vshrl.u32 2102212464, %v4323
  %v4333 = vor.u32 %v4331, %v4332
  %v4334 = vshll.u32 2102212464, %v4322
  %v4335 = vshrl.u32 920167782, %v4323
  %v4336 = vor.u32 %v4334, %v4335
  %v4337 = vshll.u32 920167782, %v4322
  %v4338 = vshrl.u32 1326507024, %v4323
  %v4339 = vor.u32 %v4337, %v4338
  %vm4340 = vcmp.lt.s32.totalorder %v4321, 1
  %vm4341 = vcmp.lt.s32.totalorder %v4321, 2
  %vm4342 = vcmp.lt.s32.totalorder %v4321, 3
  %vm4343 = vcmp.lt.s32.totalorder %v4321, 4
  %v4344 = vsel %vm4340, %v4324, %v4327
  %v4345 = vsel %vm4343, %v4333, 2102212464
  %v4346 = vsel %vm4342, %v4330, %v4345
  %v4347 = vsel %vm4341, %v4344, %v4346
  %v4348 = vsel %vm4340, %v4327, %v4330
  %v4349 = vsel %vm4343, %v4336, 920167782
  %v4350 = vsel %vm4342, %v4333, %v4349
  %v4351 = vsel %vm4341, %v4348, %v4350
  %v4352 = vsel %vm4340, %v4330, %v4333
  %v4353 = vsel %vm4343, %v4339, 1326507024
  %v4354 = vsel %vm4342, %v4336, %v4353
  %v4355 = vsel %vm4341, %v4352, %v4354
  %v4356 = vshll.u32 %v4316, 8
  %v4357 = vmul.u32.u64.compose %v4356, %v4355
  %v4358 = vextract.low.u32 %v4357
  %v4359 = vextract.high.u32 %v4357
  %v4360 = vmul.u32.u64.compose %v4356, %v4351
  %v4361 = vextract.low.u32 %v4360
  %v4362 = vextract.high.u32 %v4360
  %v4363 = vmul.u32 %v4356, %v4347
  %v4364 = vadd.s32 %v4359, %v4361
  %vm4365 = vc.u32 %v4359, %v4361
  %v4366 = vadd.s32 %v4362, 1
  %v4367 = vsel %vm4365, %v4366, %v4362
  %v4368 = vadd.s32 %v4363, %v4367
  %v4369 = vadd.s32 %v4368, 536870912
  %v4370 = vshrl.u32 %v4369, 30
  %v4371 = vshll.u32 %v4370, 30
  %v4372 = vsub.s32 %v4368, %v4371
  %vm4373 = vcmp.lt.s32.totalorder %v4372, 0
  %v4374 = vsub.s32 0, %v4372
  %v4375 = vsel %vm4373, %v4374, %v4372
  %v4376 = vclz %v4375
  %v4377 = vsub.s32 %v4376, 2
  %vm4378 = vcmp.gt.s32.totalorder 0, %v4377
  %v4379 = vsel %vm4378, 0, %v4377
  %v4380 = vsub.s32 32, %v4379
  %v4381 = vshll.u32 %v4372, %v4379
  %v4382 = vshrl.u32 %v4364, %v4380
  %v4383 = vor.u32 %v4381, %v4382
  %v4384 = vsub.s32 4294967266, %v4379
  %v4385 = vadd.s32 %v4384, 127
  %v4386 = vshll.u32 %v4385, 23
  %v4387 = vor.u32 4788187, %v4386
  %v4388 = vand.u32 2147483647, %v4387
  %v4390 = vcvt.s32.f32 %v4383
  %v4391 = vmul.f32 %v4390, %v4388
  %v4392 = vxor.u32 %v4391, 2147483648
  %v4393 = vsel %vm4310, %v4392, %v4391
  %v4394 = vsub.s32 4, %v4370
  %v4395 = vsel %vm4310, %v4394, %v4370
  %v4396 = vsel %vm4309, %v1180, %v4393
  %v4397 = vsel %vm4309, 0, %v4395
  %v4398 = vcosq.f32.pop %v4396
  %v4399 = vsinq.f32.pop %v4396
  %vm4400 = vweird.f32 %v1180
  %v4401 = vadd.s32 %v4397, 3
  %v4402 = vand.u32 %v4401, 3
  %vm4403 = vcmp.lt.s32.totalorder %v4402, 2
  %vm4404 = vcmp.eq.s32.totalorder %v4402, 0
  %v4405 = vxor.u32 %v4399, 2147483648
  %v4406 = vsel %vm4404, %v4398, %v4405
  %vm4407 = vcmp.eq.s32.totalorder %v4402, 2
  %v4408 = vxor.u32 %v4398, 2147483648
  %v4409 = vsel %vm4407, %v4408, %v4399
  %v4410 = vsel %vm4403, %v4406, %v4409
  %v4411 = vsel %vm4400, nan, %v4410
  %v4412 = vand.u32 2147483647, %v1186
  %vm4413 = vcmp.le.f32.partialorder %v4412, 0.7853982
  %vm4414 = vcmp.lt.s32.totalorder %v1186, 0
  %v4415 = vand.u32 %v1186, 2139095040
  %v4416 = vshrl.u32 %v4415, 23
  %v4417 = vsub.s32 %v4416, 127
  %v4418 = vand.u32 2147483647, %v1186
  %v4419 = vand.u32 %v4418, 8388607
  %v4420 = vor.u32 %v4419, 8388608
  %v4421 = vsub.s32 0, %v4420
  %v4422 = vadd.s32 %v4417, 1
  %vm4423 = vcmp.gt.s32.totalorder %v4422, 0
  %v4424 = vsel %vm4423, %v4422, 0
  %v4425 = vshrl.u32 %v4424, 5
  %v4426 = vand.u32 %v4424, 31
  %v4427 = vsub.s32 32, %v4426
  %v4428 = vshrl.u32 683565275, %v4427
  %v4429 = vshll.u32 683565275, %v4426
  %v4430 = vshrl.u32 2475754826, %v4427
  %v4431 = vor.u32 %v4429, %v4430
  %v4432 = vshll.u32 2475754826, %v4426
  %v4433 = vshrl.u32 2131351028, %v4427
  %v4434 = vor.u32 %v4432, %v4433
  %v4435 = vshll.u32 2131351028, %v4426
  %v4436 = vshrl.u32 2102212464, %v4427
  %v4437 = vor.u32 %v4435, %v4436
  %v4438 = vshll.u32 2102212464, %v4426
  %v4439 = vshrl.u32 920167782, %v4427
  %v4440 = vor.u32 %v4438, %v4439
  %v4441 = vshll.u32 920167782, %v4426
  %v4442 = vshrl.u32 1326507024, %v4427
  %v4443 = vor.u32 %v4441, %v4442
  %vm4444 = vcmp.lt.s32.totalorder %v4425, 1
  %vm4445 = vcmp.lt.s32.totalorder %v4425, 2
  %vm4446 = vcmp.lt.s32.totalorder %v4425, 3
  %vm4447 = vcmp.lt.s32.totalorder %v4425, 4
  %v4448 = vsel %vm4444, %v4428, %v4431
  %v4449 = vsel %vm4447, %v4437, 2102212464
  %v4450 = vsel %vm4446, %v4434, %v4449
  %v4451 = vsel %vm4445, %v4448, %v4450
  %v4452 = vsel %vm4444, %v4431, %v4434
  %v4453 = vsel %vm4447, %v4440, 920167782
  %v4454 = vsel %vm4446, %v4437, %v4453
  %v4455 = vsel %vm4445, %v4452, %v4454
  %v4456 = vsel %vm4444, %v4434, %v4437
  %v4457 = vsel %vm4447, %v4443, 1326507024
  %v4458 = vsel %vm4446, %v4440, %v4457
  %v4459 = vsel %vm4445, %v4456, %v4458
  %v4460 = vshll.u32 %v4420, 8
  %v4461 = vmul.u32.u64.compose %v4460, %v4459
  %v4462 = vextract.low.u32 %v4461
  %v4463 = vextract.high.u32 %v4461
  %v4464 = vmul.u32.u64.compose %v4460, %v4455
  %v4465 = vextract.low.u32 %v4464
  %v4466 = vextract.high.u32 %v4464
  %v4467 = vmul.u32 %v4460, %v4451
  %v4468 = vadd.s32 %v4463, %v4465
  %vm4469 = vc.u32 %v4463, %v4465
  %v4470 = vadd.s32 %v4466, 1
  %v4471 = vsel %vm4469, %v4470, %v4466
  %v4472 = vadd.s32 %v4467, %v4471
  %v4473 = vadd.s32 %v4472, 536870912
  %v4474 = vshrl.u32 %v4473, 30
  %v4475 = vshll.u32 %v4474, 30
  %v4476 = vsub.s32 %v4472, %v4475
  %vm4477 = vcmp.lt.s32.totalorder %v4476, 0
  %v4478 = vsub.s32 0, %v4476
  %v4479 = vsel %vm4477, %v4478, %v4476
  %v4480 = vclz %v4479
  %v4481 = vsub.s32 %v4480, 2
  %vm4482 = vcmp.gt.s32.totalorder 0, %v4481
  %v4483 = vsel %vm4482, 0, %v4481
  %v4484 = vsub.s32 32, %v4483
  %v4485 = vshll.u32 %v4476, %v4483
  %v4486 = vshrl.u32 %v4468, %v4484
  %v4487 = vor.u32 %v4485, %v4486
  %v4488 = vsub.s32 4294967266, %v4483
  %v4489 = vadd.s32 %v4488, 127
  %v4490 = vshll.u32 %v4489, 23
  %v4491 = vor.u32 4788187, %v4490
  %v4492 = vand.u32 2147483647, %v4491
  %v4494 = vcvt.s32.f32 %v4487
  %v4495 = vmul.f32 %v4494, %v4492
  %v4496 = vxor.u32 %v4495, 2147483648
  %v4497 = vsel %vm4414, %v4496, %v4495
  %v4498 = vsub.s32 4, %v4474
  %v4499 = vsel %vm4414, %v4498, %v4474
  %v4500 = vsel %vm4413, %v1186, %v4497
  %v4501 = vsel %vm4413, 0, %v4499
  %v4502 = vcosq.f32.pop %v4500
  %v4503 = vsinq.f32.pop %v4500
  %vm4504 = vweird.f32 %v1186
  %v4505 = vadd.s32 %v4501, 3
  %v4506 = vand.u32 %v4505, 3
  %vm4507 = vcmp.lt.s32.totalorder %v4506, 2
  %vm4508 = vcmp.eq.s32.totalorder %v4506, 0
  %v4509 = vxor.u32 %v4503, 2147483648
  %v4510 = vsel %vm4508, %v4502, %v4509
  %vm4511 = vcmp.eq.s32.totalorder %v4506, 2
  %v4512 = vxor.u32 %v4502, 2147483648
  %v4513 = vsel %vm4511, %v4512, %v4503
  %v4514 = vsel %vm4507, %v4510, %v4513
  %v4515 = vsel %vm4504, nan, %v4514
  %v4516 = vsel %vm1203, %v1306, %v2955
  %v4517 = vsel %vm1203, %v1409, %v3059
  %v4518 = vsel %vm1203, %v1512, %v3163
  %v4519 = vsel %vm1203, %v1615, %v3267
  %v4520 = vsel %vm1203, %v1718, %v3371
  %v4521 = vsel %vm1203, %v1821, %v3475
  %v4522 = vsel %vm1203, %v1924, %v3579
  %v4523 = vsel %vm1203, %v2027, %v3683
  %v4524 = vsel %vm1203, %v2130, %v3787
  %v4525 = vsel %vm1203, %v2233, %v3891
  %v4526 = vsel %vm1203, %v2336, %v3995
  %v4527 = vsel %vm1203, %v2439, %v4099
  %v4528 = vsel %vm1203, %v2542, %v4203
  %v4529 = vsel %vm1203, %v2645, %v4307
  %v4530 = vsel %vm1203, %v2748, %v4411
  %v4531 = vsel %vm1203, %v2851, %v4515
  %4532 = vst [vmem:[%s2] sm:$0xff] %v4516
  %4533 = vst [vmem:[%s2 + $0x8] sm:$0xff] %v4517
  %4534 = vst [vmem:[%s2 + $0x10] sm:$0xff] %v4518
  %4535 = vst [vmem:[%s2 + $0x18] sm:$0xff] %v4519
  %4536 = vst [vmem:[%s2 + $0x20] sm:$0xff] %v4520
  %4537 = vst [vmem:[%s2 + $0x28] sm:$0xff] %v4521
  %4538 = vst [vmem:[%s2 + $0x30] sm:$0xff] %v4522
  %4539 = vst [vmem:[%s2 + $0x38] sm:$0xff] %v4523
  %4540 = vst [vmem:[%s2 + $0x40] sm:$0xff] %v4524
  %4541 = vst [vmem:[%s2 + $0x48] sm:$0xff] %v4525
  %4542 = vst [vmem:[%s2 + $0x50] sm:$0xff] %v4526
  %4543 = vst [vmem:[%s2 + $0x58] sm:$0xff] %v4527
  %4544 = vst [vmem:[%s2 + $0x60] sm:$0xff] %v4528
  %4545 = vst [vmem:[%s2 + $0x68] sm:$0xff] %v4529
  %4546 = vst [vmem:[%s2 + $0x70] sm:$0xff] %v4530
  %4547 = vst [vmem:[%s2 + $0x78] sm:$0xff] %v4531
  // Predicated region
  $region10: #{rotary_position_encoding_4d.1} parent=0 // pred_check
    _
  $region11: #{rotary_position_encoding_4d.1} parent=0 // pred_check_branch
    %4549 = sbr.rel (0) target = $region13
  $region12: #{rotary_position_encoding_4d.1} parent=0 // pred_region
    _
  $region13: #{rotary_position_encoding_4d.1} parent=0 // pred_fallthru
    _
  // Predicated region
  $region14: #{rotary_position_encoding_4d.1} parent=0 // pred_check
    _
  $region15: #{rotary_position_encoding_4d.1} parent=0 // pred_check_branch
    %4551 = sbr.rel (0) target = $region17
  $region16: #{rotary_position_encoding_4d.1} parent=0 // pred_region
    _
  $region17: #{rotary_position_encoding_4d.1} parent=0 // pred_fallthru
    _

</llo_original>
